<compile_context>
chip_gen: v7x
topology: tpu7x:2x2x1
jax: 0.10.0
libtpu: 0.0.40
codegen_flags: <defaults>
</compile_context>

<pallas_src>
import functools

import jax
import jax.numpy as jnp
from jax.experimental import pallas as pl
from jax.experimental.pallas import tpu as pltpu

IN_DIM = 49      # PyTorch module default input features
HID = 512
OUT_DIM = 4
OUT_PAD = 128    # final layer padded to a full lane group for dense stores

MAX_TILE = 1024  # review: sweep 512/1024; 1024 -> ~2 us MXU work/step on v6e


def _round_up(n, m):
    return ((n + m - 1) // m) * m


def _choose_batch_tile(B):
    """Batch-tile selection.

    - tiny batches (<= 256): one full-batch block (grid=(1,)); these are
      weight-DMA / latency bound, splitting only adds step overhead.
    - otherwise: fewest steps with tile <= MAX_TILE, rounded up to an even
      step count (v7x shards the 'parallel' axis over 2 TensorCores), and the
      tile sized to that step count so batch-padding waste is < 8 rows/step.
    """
    if B <= 256:
        return B
    n_steps = pl.cdiv(B, MAX_TILE)
    n_steps = max(2, n_steps + (n_steps % 2))
    return _round_up(pl.cdiv(B, n_steps), 8)


def _mlp_kernel(x_ref, w0, b0, w1, b1, w2, b2, w3, b3, w4, b4, o_ref):
    # One batch tile resident in VMEM: 5 bf16 matmuls on the MXU with f32
    # accumulation; bias-add and ReLU on the VPU in f32 (v5e-safe).
    def layer(h_bf16, w, b):
        return jnp.dot(h_bf16, w[...], preferred_element_type=jnp.float32) + b[...]

    # x arrives as raw f32 (tile, 49); cast to bf16 in-kernel (hidden under MXU).
    h = layer(x_ref[...].astype(jnp.bfloat16), w0, b0)
    h = jnp.maximum(h, 0.0)
    h = layer(h.astype(jnp.bfloat16), w1, b1)
    h = jnp.maximum(h, 0.0)
    h = layer(h.astype(jnp.bfloat16), w2, b2)
    h = jnp.maximum(h, 0.0)
    h = layer(h.astype(jnp.bfloat16), w3, b3)
    h = jnp.maximum(h, 0.0)
    h = layer(h.astype(jnp.bfloat16), w4, b4)          # (tile, 128) f32
    o_ref[...] = h                                     # lane-dense store


@functools.partial(jax.jit, static_argnames=("batch_tile",))
def mlp_forward(x, params, batch_tile=None):
    """x: (B, IN_DIM) float32. params: bf16 (in, out) weights + f32 (1, out) biases
    (final layer zero-padded to 128 output columns)."""
    B, F = x.shape
    assert F == IN_DIM
    if batch_tile is None:
        batch_tile = _choose_batch_tile(B)
    grid = (pl.cdiv(B, batch_tile),)

    w0, b0 = params["w0"], params["b0"]
    w1, b1 = params["w1"], params["b1"]
    w2, b2 = params["w2"], params["b2"]
    w3, b3 = params["w3"], params["b3"]
    w4, b4 = params["w4"], params["b4"]

    def full(a):
        # Whole weight / bias with a constant block index -> fetched once and
        # kept resident in VMEM across all grid steps.
        return pl.BlockSpec(a.shape, lambda i: (0, 0))

    weight_bytes = sum(int(params[f"w{l}"].size) * 2 for l in range(5))
    bias_bytes = sum(int(params[f"b{l}"].size) * 4 for l in range(5))
    flops = 2 * B * (IN_DIM * HID + 3 * HID * HID + HID * OUT_PAD)
    bytes_accessed = weight_bytes + bias_bytes + B * (IN_DIM * 4 + OUT_PAD * 4)

    out = pl.pallas_call(
        _mlp_kernel,
        out_shape=jax.ShapeDtypeStruct((B, OUT_PAD), jnp.float32),
        grid_spec=pltpu.PrefetchScalarGridSpec(
            num_scalar_prefetch=0,
            grid=grid,
            in_specs=[
                pl.BlockSpec((batch_tile, IN_DIM), lambda i: (i, 0)),  # raw f32 x tile
                full(w0), full(b0),
                full(w1), full(b1),
                full(w2), full(b2),
                full(w3), full(b3),
                full(w4), full(b4),
            ],
            out_specs=pl.BlockSpec((batch_tile, OUT_PAD), lambda i: (i, 0)),
        ),
        compiler_params=pltpu.CompilerParams(
            dimension_semantics=("parallel",),
            vmem_limit_bytes=32 * 1024 * 1024,
        ),
        cost_estimate=pl.CostEstimate(
            flops=flops, transcendentals=0, bytes_accessed=bytes_accessed
        ),
    )(x, w0, b0, w1, b1, w2, b2, w3, b3, w4, b4)

    return out[:, :OUT_DIM]


def init_params(key):
    """PyTorch nn.Linear default init U(-1/sqrt(fan_in), 1/sqrt(fan_in)).
    Weights stored transposed (in, out) in bf16; biases f32 as (1, out).
    Final layer zero-padded to 128 output columns (zero cols: no-op math)."""
    dims = [(IN_DIM, HID), (HID, HID), (HID, HID), (HID, HID), (HID, OUT_DIM)]
    params = {}
    keys = jax.random.split(key, 2 * len(dims))
    for layer, (fan_in, fan_out) in enumerate(dims):
        bound = 1.0 / float(fan_in) ** 0.5
        wk, bk = keys[2 * layer], keys[2 * layer + 1]
        w = jax.random.uniform(wk, (fan_in, fan_out), jnp.float32,
                               minval=-bound, maxval=bound)
        b = jax.random.uniform(bk, (1, fan_out), jnp.float32,
                               minval=-bound, maxval=bound)
        if layer == len(dims) - 1:
            w = jnp.pad(w, ((0, 0), (0, OUT_PAD - OUT_DIM)))
            b = jnp.pad(b, ((0, 0), (0, OUT_PAD - OUT_DIM)))
        params[f"w{layer}"] = w.astype(jnp.bfloat16)
        params[f"b{layer}"] = b
    return params


def mlp_reference_exact(x, params):
    """Mirrors the kernel arithmetic (bf16 operands, f32 accumulation)."""
    h = x.astype(jnp.bfloat16)
    for layer in range(4):
        a = jnp.dot(h.astype(jnp.float32), params[f"w{layer}"].astype(jnp.float32))
        a = jnp.maximum(a + params[f"b{layer}"], 0.0)
        h = a.astype(jnp.bfloat16)
    out = jnp.dot(h.astype(jnp.float32), params["w4"].astype(jnp.float32)) + params["b4"]
    return out[:, :OUT_DIM]


def mlp_reference_f32(x, params):
    """Plain f32 reference (PyTorch semantics) with the bf16-rounded weights."""
    h = x
    for layer in range(4):
        h = jnp.maximum(h @ params[f"w{layer}"].astype(jnp.float32)
                        + params[f"b{layer}"], 0.0)
    out = h @ params["w4"].astype(jnp.float32) + params["b4"]
    return out[:, :OUT_DIM]


if __name__ == "__main__":
    key = jax.random.PRNGKey(0)
    pkey, xkey, xkey2 = jax.random.split(key, 3)
    params = init_params(pkey)

    # Small, non-multiple batch: single full-batch block path.
    batch = 19
    x = jax.random.normal(xkey, (batch, IN_DIM), jnp.float32)
    out = jax.block_until_ready(mlp_forward(x, params))
    assert out.shape == (batch, OUT_DIM)

    ref_exact = mlp_reference_exact(x, params)
    ref_f32 = mlp_reference_f32(x, params)
    err_exact = jnp.max(jnp.abs(out - ref_exact))
    err_f32 = jnp.max(jnp.abs(out - ref_f32))
    assert jnp.allclose(out, ref_exact, atol=2e-3, rtol=2e-3), f"exact-path err {err_exact}"
    assert jnp.allclose(out, ref_f32, atol=5e-2, rtol=5e-2), f"f32-semantics err {err_f32}"

    # Larger ragged batch: exercises the multi-step grid + partial-block path.
    batch2 = 520
    x2 = jax.random.normal(xkey2, (batch2, IN_DIM), jnp.float32)
    out2 = jax.block_until_ready(mlp_forward(x2, params))
    assert out2.shape == (batch2, OUT_DIM)
    ref2 = mlp_reference_exact(x2, params)
    err2 = jnp.max(jnp.abs(out2 - ref2))
    assert jnp.allclose(out2, ref2, atol=2e-3, rtol=2e-3), f"exact-path err (B=520) {err2}"

    print("KERNEL_OK")
</pallas_src>

<mosaic_0001>
module attributes {stable_mosaic.version = 11 : i64} {
  func.func @_mlp_kernel(%arg0: i32, %arg1: memref<19x49xf32, #tpu.memory_space<vmem>>, %arg2: memref<49x512xbf16, #tpu.memory_space<vmem>>, %arg3: memref<1x512xf32, #tpu.memory_space<vmem>>, %arg4: memref<512x512xbf16, #tpu.memory_space<vmem>>, %arg5: memref<1x512xf32, #tpu.memory_space<vmem>>, %arg6: memref<512x512xbf16, #tpu.memory_space<vmem>>, %arg7: memref<1x512xf32, #tpu.memory_space<vmem>>, %arg8: memref<512x512xbf16, #tpu.memory_space<vmem>>, %arg9: memref<1x512xf32, #tpu.memory_space<vmem>>, %arg10: memref<512x128xbf16, #tpu.memory_space<vmem>>, %arg11: memref<1x128xf32, #tpu.memory_space<vmem>>, %arg12: memref<19x128xf32, #tpu.memory_space<vmem>>) attributes {dimension_semantics = [#tpu.dimension_semantics<parallel>], iteration_bounds = array<i64: 1>, scalar_prefetch = 0 : i64, scratch_operands = 0 : i64, tpu.core_type = #tpu.core_type<tc>, window_params = [{transform_indices = @transform_0, window_bounds = array<i64: 19, 49>}, {pipeline_mode = #tpu.pipeline_mode<synchronous>, transform_indices = @transform_1, window_bounds = array<i64: 49, 512>}, {pipeline_mode = #tpu.pipeline_mode<synchronous>, transform_indices = @transform_2, window_bounds = array<i64: 1, 512>}, {pipeline_mode = #tpu.pipeline_mode<synchronous>, transform_indices = @transform_3, window_bounds = array<i64: 512, 512>}, {pipeline_mode = #tpu.pipeline_mode<synchronous>, transform_indices = @transform_4, window_bounds = array<i64: 1, 512>}, {pipeline_mode = #tpu.pipeline_mode<synchronous>, transform_indices = @transform_5, window_bounds = array<i64: 512, 512>}, {pipeline_mode = #tpu.pipeline_mode<synchronous>, transform_indices = @transform_6, window_bounds = array<i64: 1, 512>}, {pipeline_mode = #tpu.pipeline_mode<synchronous>, transform_indices = @transform_7, window_bounds = array<i64: 512, 512>}, {pipeline_mode = #tpu.pipeline_mode<synchronous>, transform_indices = @transform_8, window_bounds = array<i64: 1, 512>}, {pipeline_mode = #tpu.pipeline_mode<synchronous>, transform_indices = @transform_9, window_bounds = array<i64: 512, 128>}, {pipeline_mode = #tpu.pipeline_mode<synchronous>, transform_indices = @transform_10, window_bounds = array<i64: 1, 128>}, {transform_indices = @transform_11, window_bounds = array<i64: 19, 128>}]} {
    %c0 = arith.constant 0 : index
    %c0_0 = arith.constant 0 : index
    %0 = vector.load %arg1[%c0, %c0_0] : memref<19x49xf32, #tpu.memory_space<vmem>>, vector<19x49xf32>
    %1 = arith.truncf %0 : vector<19x49xf32> to vector<19x49xbf16>
    %c0_1 = arith.constant 0 : index
    %c0_2 = arith.constant 0 : index
    %2 = vector.load %arg2[%c0_1, %c0_2] : memref<49x512xbf16, #tpu.memory_space<vmem>>, vector<49x512xbf16>
    %cst = arith.constant dense<0.000000e+00> : vector<19x512xf32>
    %3 = tpu.matmul %1, %2, %cst {dimension_numbers = #tpu.dot_dimension_numbers<[1], [0], [0], [1], [0, 0, 1, 1], [], []>} : vector<19x49xbf16>, vector<49x512xbf16>, vector<19x512xf32> -> vector<19x512xf32>
    %c0_3 = arith.constant 0 : index
    %c0_4 = arith.constant 0 : index
    %4 = vector.load %arg3[%c0_3, %c0_4] : memref<1x512xf32, #tpu.memory_space<vmem>>, vector<1x512xf32>
    %5 = vector.broadcast %4 : vector<1x512xf32> to vector<19x512xf32>
    %6 = arith.addf %3, %5 : vector<19x512xf32>
    %cst_5 = arith.constant 0.000000e+00 : f32
    %7 = vector.broadcast %cst_5 : f32 to vector<19x512xf32>
    %8 = arith.maximumf %6, %7 : vector<19x512xf32>
    %9 = arith.truncf %8 : vector<19x512xf32> to vector<19x512xbf16>
    %c0_6 = arith.constant 0 : index
    %c0_7 = arith.constant 0 : index
    %10 = vector.load %arg4[%c0_6, %c0_7] : memref<512x512xbf16, #tpu.memory_space<vmem>>, vector<512x512xbf16>
    %cst_8 = arith.constant dense<0.000000e+00> : vector<19x512xf32>
    %11 = tpu.matmul %9, %10, %cst_8 {dimension_numbers = #tpu.dot_dimension_numbers<[1], [0], [0], [1], [0, 0, 1, 1], [], []>} : vector<19x512xbf16>, vector<512x512xbf16>, vector<19x512xf32> -> vector<19x512xf32>
    %c0_9 = arith.constant 0 : index
    %c0_10 = arith.constant 0 : index
    %12 = vector.load %arg5[%c0_9, %c0_10] : memref<1x512xf32, #tpu.memory_space<vmem>>, vector<1x512xf32>
    %13 = vector.broadcast %12 : vector<1x512xf32> to vector<19x512xf32>
    %14 = arith.addf %11, %13 : vector<19x512xf32>
    %cst_11 = arith.constant 0.000000e+00 : f32
    %15 = vector.broadcast %cst_11 : f32 to vector<19x512xf32>
    %16 = arith.maximumf %14, %15 : vector<19x512xf32>
    %17 = arith.truncf %16 : vector<19x512xf32> to vector<19x512xbf16>
    %c0_12 = arith.constant 0 : index
    %c0_13 = arith.constant 0 : index
    %18 = vector.load %arg6[%c0_12, %c0_13] : memref<512x512xbf16, #tpu.memory_space<vmem>>, vector<512x512xbf16>
    %cst_14 = arith.constant dense<0.000000e+00> : vector<19x512xf32>
    %19 = tpu.matmul %17, %18, %cst_14 {dimension_numbers = #tpu.dot_dimension_numbers<[1], [0], [0], [1], [0, 0, 1, 1], [], []>} : vector<19x512xbf16>, vector<512x512xbf16>, vector<19x512xf32> -> vector<19x512xf32>
    %c0_15 = arith.constant 0 : index
    %c0_16 = arith.constant 0 : index
    %20 = vector.load %arg7[%c0_15, %c0_16] : memref<1x512xf32, #tpu.memory_space<vmem>>, vector<1x512xf32>
    %21 = vector.broadcast %20 : vector<1x512xf32> to vector<19x512xf32>
    %22 = arith.addf %19, %21 : vector<19x512xf32>
    %cst_17 = arith.constant 0.000000e+00 : f32
    %23 = vector.broadcast %cst_17 : f32 to vector<19x512xf32>
    %24 = arith.maximumf %22, %23 : vector<19x512xf32>
    %25 = arith.truncf %24 : vector<19x512xf32> to vector<19x512xbf16>
    %c0_18 = arith.constant 0 : index
    %c0_19 = arith.constant 0 : index
    %26 = vector.load %arg8[%c0_18, %c0_19] : memref<512x512xbf16, #tpu.memory_space<vmem>>, vector<512x512xbf16>
    %cst_20 = arith.constant dense<0.000000e+00> : vector<19x512xf32>
    %27 = tpu.matmul %25, %26, %cst_20 {dimension_numbers = #tpu.dot_dimension_numbers<[1], [0], [0], [1], [0, 0, 1, 1], [], []>} : vector<19x512xbf16>, vector<512x512xbf16>, vector<19x512xf32> -> vector<19x512xf32>
    %c0_21 = arith.constant 0 : index
    %c0_22 = arith.constant 0 : index
    %28 = vector.load %arg9[%c0_21, %c0_22] : memref<1x512xf32, #tpu.memory_space<vmem>>, vector<1x512xf32>
    %29 = vector.broadcast %28 : vector<1x512xf32> to vector<19x512xf32>
    %30 = arith.addf %27, %29 : vector<19x512xf32>
    %cst_23 = arith.constant 0.000000e+00 : f32
    %31 = vector.broadcast %cst_23 : f32 to vector<19x512xf32>
    %32 = arith.maximumf %30, %31 : vector<19x512xf32>
    %33 = arith.truncf %32 : vector<19x512xf32> to vector<19x512xbf16>
    %c0_24 = arith.constant 0 : index
    %c0_25 = arith.constant 0 : index
    %34 = vector.load %arg10[%c0_24, %c0_25] : memref<512x128xbf16, #tpu.memory_space<vmem>>, vector<512x128xbf16>
    %cst_26 = arith.constant dense<0.000000e+00> : vector<19x128xf32>
    %35 = tpu.matmul %33, %34, %cst_26 {dimension_numbers = #tpu.dot_dimension_numbers<[1], [0], [0], [1], [0, 0, 1, 1], [], []>} : vector<19x512xbf16>, vector<512x128xbf16>, vector<19x128xf32> -> vector<19x128xf32>
    %c0_27 = arith.constant 0 : index
    %c0_28 = arith.constant 0 : index
    %36 = vector.load %arg11[%c0_27, %c0_28] : memref<1x128xf32, #tpu.memory_space<vmem>>, vector<1x128xf32>
    %37 = vector.broadcast %36 : vector<1x128xf32> to vector<19x128xf32>
    %38 = arith.addf %35, %37 : vector<19x128xf32>
    %c0_29 = arith.constant 0 : index
    %c0_30 = arith.constant 0 : index
    %39 = vector.load %arg12[%c0_29, %c0_30] : memref<19x128xf32, #tpu.memory_space<vmem>>, vector<19x128xf32>
    tpu.vector_store %arg12[%c0_29, %c0_30], %38 {strides = array<i32>} : memref<19x128xf32, #tpu.memory_space<vmem>>, vector<19x128xf32>,
    return
  }
  func.func @transform_0(%arg0: i32) -> (i32, i32) {
    %c0_i32 = arith.constant 0 : i32
    %c0_i32_0 = arith.constant 0 : i32
    return %arg0, %c0_i32 : i32, i32
  }
  func.func @transform_1(%arg0: i32) -> (i32, i32) {
    %c0_i32 = arith.constant 0 : i32
    %c0_i32_0 = arith.constant 0 : i32
    %c0_i32_1 = arith.constant 0 : i32
    return %c0_i32, %c0_i32_0 : i32, i32
  }
  func.func @transform_2(%arg0: i32) -> (i32, i32) {
    %c0_i32 = arith.constant 0 : i32
    %c0_i32_0 = arith.constant 0 : i32
    %c0_i32_1 = arith.constant 0 : i32
    return %c0_i32, %c0_i32_0 : i32, i32
  }
  func.func @transform_3(%arg0: i32) -> (i32, i32) {
    %c0_i32 = arith.constant 0 : i32
    %c0_i32_0 = arith.constant 0 : i32
    %c0_i32_1 = arith.constant 0 : i32
    return %c0_i32, %c0_i32_0 : i32, i32
  }
  func.func @transform_4(%arg0: i32) -> (i32, i32) {
    %c0_i32 = arith.constant 0 : i32
    %c0_i32_0 = arith.constant 0 : i32
    %c0_i32_1 = arith.constant 0 : i32
    return %c0_i32, %c0_i32_0 : i32, i32
  }
  func.func @transform_5(%arg0: i32) -> (i32, i32) {
    %c0_i32 = arith.constant 0 : i32
    %c0_i32_0 = arith.constant 0 : i32
    %c0_i32_1 = arith.constant 0 : i32
    return %c0_i32, %c0_i32_0 : i32, i32
  }
  func.func @transform_6(%arg0: i32) -> (i32, i32) {
    %c0_i32 = arith.constant 0 : i32
    %c0_i32_0 = arith.constant 0 : i32
    %c0_i32_1 = arith.constant 0 : i32
    return %c0_i32, %c0_i32_0 : i32, i32
  }
  func.func @transform_7(%arg0: i32) -> (i32, i32) {
    %c0_i32 = arith.constant 0 : i32
    %c0_i32_0 = arith.constant 0 : i32
    %c0_i32_1 = arith.constant 0 : i32
    return %c0_i32, %c0_i32_0 : i32, i32
  }
  func.func @transform_8(%arg0: i32) -> (i32, i32) {
    %c0_i32 = arith.constant 0 : i32
    %c0_i32_0 = arith.constant 0 : i32
    %c0_i32_1 = arith.constant 0 : i32
    return %c0_i32, %c0_i32_0 : i32, i32
  }
  func.func @transform_9(%arg0: i32) -> (i32, i32) {
    %c0_i32 = arith.constant 0 : i32
    %c0_i32_0 = arith.constant 0 : i32
    %c0_i32_1 = arith.constant 0 : i32
    return %c0_i32, %c0_i32_0 : i32, i32
  }
  func.func @transform_10(%arg0: i32) -> (i32, i32) {
    %c0_i32 = arith.constant 0 : i32
    %c0_i32_0 = arith.constant 0 : i32
    %c0_i32_1 = arith.constant 0 : i32
    return %c0_i32, %c0_i32_0 : i32, i32
  }
  func.func @transform_11(%arg0: i32) -> (i32, i32) {
    %c0_i32 = arith.constant 0 : i32
    %c0_i32_0 = arith.constant 0 : i32
    return %arg0, %c0_i32 : i32, i32
  }
}

</mosaic_0001>

<llo_original>
// kernel: mlp_forward.1
$region0: #{mlp_forward.1}
  #allocation0 [shape = 'u32[]', space=smem, size = 0x4, offset = 0x4, fixed_abs, tag = 'smem constant byte address 0x4 - core index']
  #allocation1 [shape = 'u32[144,128]{1,0:T(1,128)}', space=vmem, size = 0x12000, scoped, tag = 'internal scratch']
  %s0 = inlined_call_operand.hbm [shape: f32[19,49], index: 0, kind: input, shape index: {}]
  %s1 = inlined_call_operand.hbm [shape: bf16[49,512], index: 1, kind: input, shape index: {}]
  %s2 = inlined_call_operand.hbm [shape: f32[1,512], index: 2, kind: input, shape index: {}]
  %s3 = inlined_call_operand.hbm [shape: bf16[512,512], index: 3, kind: input, shape index: {}]
  %s4 = inlined_call_operand.vmem [shape: f32[1,512], index: 4, kind: input, shape index: {}]
  %s5 = inlined_call_operand.hbm [shape: bf16[512,512], index: 5, kind: input, shape index: {}]
  %s6 = inlined_call_operand.vmem [shape: f32[1,512], index: 6, kind: input, shape index: {}]
  %s7 = inlined_call_operand.hbm [shape: bf16[512,512], index: 7, kind: input, shape index: {}]
  %s8 = inlined_call_operand.vmem [shape: f32[1,512], index: 8, kind: input, shape index: {}]
  %s9 = inlined_call_operand.hbm [shape: bf16[512,128], index: 9, kind: input, shape index: {}]
  %s10 = inlined_call_operand.vmem [shape: f32[1,128], index: 10, kind: input, shape index: {}]
  %s11 = inlined_call_operand.vmem [shape: f32[19,128], index: 11, kind: output, shape index: {}]
  %s12 = sld [smem:[#allocation0]]
  $region82: #{mlp_forward.1} parent=0
    _
  %s14 = ssub.s32 1, %s12
  %s15 = scalar_select 0, %s14, %s12
  $region1: #{mlp_forward.1} parent=0
    #allocation2 [shape = 'u8[12288]{0}', space=vmem, size = 0x3000, scoped, tag = 'input window, operand 0, single buffered']
    #allocation3 [shape = 's32[1]{0}', space=sflag, size = 0x4, scoped, tag = 'scoped memory for mlp_forward.1']
    #allocation4 [shape = 'u8[57344]{0}', space=vmem, size = 0xe000, scoped, tag = 'input window, operand 1, single buffered']
    #allocation5 [shape = 's32[1]{0}', space=sflag, size = 0x4, scoped, tag = 'scoped memory for mlp_forward.1']
    #allocation6 [shape = 'u8[2048]{0}', space=vmem, size = 0x800, scoped, tag = 'input window, operand 2, single buffered']
    #allocation7 [shape = 'u8[524288]{0}', space=vmem, size = 0x80000, scoped, tag = 'input window, operand 3, single buffered']
    #allocation8 [shape = 's32[1]{0}', space=sflag, size = 0x4, scoped, tag = 'scoped memory for mlp_forward.1']
    #allocation9 [shape = 'u8[524288]{0}', space=vmem, size = 0x80000, scoped, tag = 'input window, operand 5, single buffered']
    #allocation10 [shape = 'u8[524288]{0}', space=vmem, size = 0x80000, scoped, tag = 'input window, operand 7, single buffered']
    #allocation11 [shape = 's32[1]{0}', space=sflag, size = 0x4, scoped, tag = 'scoped memory for mlp_forward.1']
    #allocation12 [shape = 'u8[131072]{0}', space=vmem, size = 0x20000, scoped, tag = 'input window, operand 9, single buffered']
    %16 = vsyncpa [#allocation3], 0
    %17 = vsyncpa [#allocation5], 0
    %18 = vsyncpa [#allocation8], 0
    %19 = vsyncpa [#allocation11], 0
    // Predicated region
    $region2: #{mlp_forward.1} parent=1 // pred_check
      _
    $region3: #{mlp_forward.1} parent=1 // pred_check_branch
      %21 = sbr.rel (0) target = $region5
    $region4: #{mlp_forward.1} parent=1 // pred_region
      %s23 = ssub.s32 384, 384
      %24 = vsyncadd [#allocation3], %s23
      %s25 = sshll.u32 [#allocation2], 4
      %s26 = int_to_ptr.vmem [resolvable:$true] %s25
      %31 = dma.hbm_to_vmem [thread:$0]  %s0, 384, %s26, [#allocation3], 128, 128, 8
    $region5: #{mlp_forward.1} parent=1 // pred_fallthru
      _
    // Predicated region
    $region6: #{mlp_forward.1} parent=1 // pred_check
      _
    $region7: #{mlp_forward.1} parent=1 // pred_check_branch
      %33 = sbr.rel (0) target = $region9
    $region8: #{mlp_forward.1} parent=1 // pred_region
      %s35 = ssub.s32 1792, 1792
      %36 = vsyncadd [#allocation5], %s35
      %s37 = sshll.u32 [#allocation4], 4
      %s38 = int_to_ptr.vmem [resolvable:$true] %s37
      %43 = dma.hbm_to_vmem [thread:$0]  %s1, 1792, %s38, [#allocation5], 256, 256, 16
    $region9: #{mlp_forward.1} parent=1 // pred_fallthru
      _
    // Predicated region
    $region10: #{mlp_forward.1} parent=1 // pred_check
      _
    $region11: #{mlp_forward.1} parent=1 // pred_check_branch
      %45 = sbr.rel (0) target = $region13
    $region12: #{mlp_forward.1} parent=1 // pred_region
      %s47 = ssub.s32 64, 64
      %48 = vsyncadd [#allocation5], %s47
      %s50 = sshll.u32 [#allocation6], 4
      %s51 = int_to_ptr.vmem [resolvable:$true] %s50
      %53 = dma.hbm_to_vmem [thread:$0]  %s2, 64, %s51, [#allocation5]
    $region13: #{mlp_forward.1} parent=1 // pred_fallthru
      _
    // Predicated region
    $region14: #{mlp_forward.1} parent=1 // pred_check
      _
    $region15: #{mlp_forward.1} parent=1 // pred_check_branch
      %55 = sbr.rel (0) target = $region17
    $region16: #{mlp_forward.1} parent=1 // pred_region
      %s57 = ssub.s32 16384, 16384
      %58 = vsyncadd [#allocation8], %s57
      %s59 = sshll.u32 [#allocation7], 4
      %s60 = int_to_ptr.vmem [resolvable:$true] %s59
      %65 = dma.hbm_to_vmem [thread:$0]  %s3, 16384, %s60, [#allocation8], 256, 256, 16
    $region17: #{mlp_forward.1} parent=1 // pred_fallthru
      _
    // Predicated region
    $region18: #{mlp_forward.1} parent=1 // pred_check
      _
    $region19: #{mlp_forward.1} parent=1 // pred_check_branch
      %67 = sbr.rel (0) target = $region21
    $region20: #{mlp_forward.1} parent=1 // pred_region
      _
    $region21: #{mlp_forward.1} parent=1 // pred_fallthru
      _
    // Predicated region
    $region22: #{mlp_forward.1} parent=1 // pred_check
      _
    $region23: #{mlp_forward.1} parent=1 // pred_check_branch
      %69 = sbr.rel (0) target = $region25
    $region24: #{mlp_forward.1} parent=1 // pred_region
      %s71 = ssub.s32 16384, 16384
      %72 = vsyncadd [#allocation8], %s71
      %s73 = sshll.u32 [#allocation9], 4
      %s74 = int_to_ptr.vmem [resolvable:$true] %s73
      %79 = dma.hbm_to_vmem [thread:$0]  %s5, 16384, %s74, [#allocation8], 256, 256, 16
    $region25: #{mlp_forward.1} parent=1 // pred_fallthru
      _
    // Predicated region
    $region26: #{mlp_forward.1} parent=1 // pred_check
      _
    $region27: #{mlp_forward.1} parent=1 // pred_check_branch
      %81 = sbr.rel (0) target = $region29
    $region28: #{mlp_forward.1} parent=1 // pred_region
      _
    $region29: #{mlp_forward.1} parent=1 // pred_fallthru
      _
    // Predicated region
    $region30: #{mlp_forward.1} parent=1 // pred_check
      _
    $region31: #{mlp_forward.1} parent=1 // pred_check_branch
      %83 = sbr.rel (0) target = $region33
    $region32: #{mlp_forward.1} parent=1 // pred_region
      %s85 = ssub.s32 16384, 16384
      %86 = vsyncadd [#allocation11], %s85
      %s87 = sshll.u32 [#allocation10], 4
      %s88 = int_to_ptr.vmem [resolvable:$true] %s87
      %93 = dma.hbm_to_vmem [thread:$0]  %s7, 16384, %s88, [#allocation11], 256, 256, 16
    $region33: #{mlp_forward.1} parent=1 // pred_fallthru
      _
    // Predicated region
    $region34: #{mlp_forward.1} parent=1 // pred_check
      _
    $region35: #{mlp_forward.1} parent=1 // pred_check_branch
      %95 = sbr.rel (0) target = $region37
    $region36: #{mlp_forward.1} parent=1 // pred_region
      _
    $region37: #{mlp_forward.1} parent=1 // pred_fallthru
      _
    // Predicated region
    $region38: #{mlp_forward.1} parent=1 // pred_check
      _
    $region39: #{mlp_forward.1} parent=1 // pred_check_branch
      %97 = sbr.rel (0) target = $region41
    $region40: #{mlp_forward.1} parent=1 // pred_region
      %s99 = ssub.s32 4096, 4096
      %100 = vsyncadd [#allocation11], %s99
      %s101 = sshll.u32 [#allocation12], 4
      %s102 = int_to_ptr.vmem [resolvable:$true] %s101
      %107 = dma.hbm_to_vmem [thread:$0]  %s9, 4096, %s102, [#allocation11], 64, 64, 4
    $region41: #{mlp_forward.1} parent=1 // pred_fallthru
      _
    // Predicated region
    $region42: #{mlp_forward.1} parent=1 // pred_check
      _
    $region43: #{mlp_forward.1} parent=1 // pred_check_branch
      %109 = sbr.rel (0) target = $region45
    $region44: #{mlp_forward.1} parent=1 // pred_region
      _
    $region45: #{mlp_forward.1} parent=1 // pred_fallthru
      _
    // Predicated region
    $region46: #{mlp_forward.1} parent=1 // pred_check
      _
    $region47: #{mlp_forward.1} parent=1 // pred_check_branch
      %111 = sbr.rel (0) target = $region49
    $region48: #{mlp_forward.1} parent=1 // pred_region
      %112 = dma.done [#allocation3], 384
    $region49: #{mlp_forward.1} parent=1 // pred_fallthru
      _
    // Predicated region
    $region50: #{mlp_forward.1} parent=1 // pred_check
      _
    $region51: #{mlp_forward.1} parent=1 // pred_check_branch
      %114 = sbr.rel (0) target = $region53
    $region52: #{mlp_forward.1} parent=1 // pred_region
      %115 = dma.done [#allocation5], 1792
    $region53: #{mlp_forward.1} parent=1 // pred_fallthru
      _
    // Predicated region
    $region54: #{mlp_forward.1} parent=1 // pred_check
      _
    $region55: #{mlp_forward.1} parent=1 // pred_check_branch
      %117 = sbr.rel (0) target = $region57
    $region56: #{mlp_forward.1} parent=1 // pred_region
      %118 = dma.done [#allocation5], 64
    $region57: #{mlp_forward.1} parent=1 // pred_fallthru
      _
    // Predicated region
    $region58: #{mlp_forward.1} parent=1 // pred_check
      _
    $region59: #{mlp_forward.1} parent=1 // pred_check_branch
      %120 = sbr.rel (0) target = $region61
    $region60: #{mlp_forward.1} parent=1 // pred_region
      %121 = dma.done [#allocation8], 16384
    $region61: #{mlp_forward.1} parent=1 // pred_fallthru
      _
    // Predicated region
    $region62: #{mlp_forward.1} parent=1 // pred_check
      _
    $region63: #{mlp_forward.1} parent=1 // pred_check_branch
      %123 = sbr.rel (0) target = $region65
    $region64: #{mlp_forward.1} parent=1 // pred_region
      %124 = dma.done [#allocation8], 16384
    $region65: #{mlp_forward.1} parent=1 // pred_fallthru
      _
    // Predicated region
    $region66: #{mlp_forward.1} parent=1 // pred_check
      _
    $region67: #{mlp_forward.1} parent=1 // pred_check_branch
      %126 = sbr.rel (0) target = $region69
    $region68: #{mlp_forward.1} parent=1 // pred_region
      %127 = dma.done [#allocation11], 16384
    $region69: #{mlp_forward.1} parent=1 // pred_fallthru
      _
    // Predicated region
    $region70: #{mlp_forward.1} parent=1 // pred_check
      _
    $region71: #{mlp_forward.1} parent=1 // pred_check_branch
      %129 = sbr.rel (0) target = $region73
    $region72: #{mlp_forward.1} parent=1 // pred_region
      %130 = dma.done [#allocation11], 4096
    $region73: #{mlp_forward.1} parent=1 // pred_fallthru
      _
    %v132 = vld [vmem:[#allocation2] sm:$0xff]
    %v133 = vld [vmem:[#allocation2 + $0x8] sm:$0xff]
    %v134 = vld [vmem:[#allocation2 + $0x10] sm:$0x7]
    %v135 = vpack.c.bf16 %v133, %v132
    %v136 = vpack.c.bf16 %v134, %v134
    %v137 = vld [vmem:[#allocation4] sm:$0xff]
    %v138 = vld [vmem:[#allocation4 + $0x8] sm:$0xff]
    %v139 = vld [vmem:[#allocation4 + $0x10] sm:$0xff]
    %v140 = vld [vmem:[#allocation4 + $0x18] sm:$0xff]
    %v141 = vld [vmem:[#allocation4 + $0x20] sm:$0xff]
    %v142 = vld [vmem:[#allocation4 + $0x28] sm:$0xff]
    %v143 = vld [vmem:[#allocation4 + $0x30] sm:$0xff]
    %v144 = vld [vmem:[#allocation4 + $0x38] sm:$0xff]
    %v145 = vld [vmem:[#allocation4 + $0x40] sm:$0xff]
    %v146 = vld [vmem:[#allocation4 + $0x48] sm:$0xff]
    %v147 = vld [vmem:[#allocation4 + $0x50] sm:$0xff]
    %v148 = vld [vmem:[#allocation4 + $0x58] sm:$0xff]
    %v149 = vld [vmem:[#allocation4 + $0x60] sm:$0x11]
    %v150 = vld [vmem:[#allocation4 + $0x68] sm:$0x11]
    %v151 = vld [vmem:[#allocation6] sm:$0xf]
    %v153 = vlaneseq
    %v154 = vshrl.u32 %v153, 7
    %v155 = vsub.s32 0, %v154
    %v156 = vrot.slane %v151, %v155
    %v157 = vlaneseq
    %v158 = vshrl.u32 %v157, 7
    %v159 = vsub.s32 1, %v158
    %v160 = vrot.slane %v151, %v159
    %v161 = vlaneseq
    %v162 = vshrl.u32 %v161, 7
    %v163 = vsub.s32 2, %v162
    %v164 = vrot.slane %v151, %v163
    %v165 = vlaneseq
    %v166 = vshrl.u32 %v165, 7
    %v167 = vsub.s32 3, %v166
    %v168 = vrot.slane %v151, %v167
    %v187 = vunpack.c.l.b16 %v137
    %v188 = vunpack.c.h.b16 %v137
    %v189 = vunpack.c.l.b16 %v138
    %v190 = vunpack.c.h.b16 %v138
    %v191 = vunpack.c.l.b16 %v139
    %v192 = vunpack.c.h.b16 %v139
    %v193 = vunpack.c.l.b16 %v140
    %v194 = vunpack.c.h.b16 %v140
    %v195 = vunpack.c.l.b16 %v141
    %v196 = vunpack.c.h.b16 %v141
    %v197 = vunpack.c.l.b16 %v142
    %v198 = vunpack.c.h.b16 %v142
    %v199 = vunpack.c.l.b16 %v143
    %v200 = vunpack.c.h.b16 %v143
    %v201 = vunpack.c.l.b16 %v144
    %v202 = vunpack.c.h.b16 %v144
    %v203 = vunpack.c.l.b16 %v145
    %v204 = vunpack.c.h.b16 %v145
    %v205 = vunpack.c.l.b16 %v146
    %v206 = vunpack.c.h.b16 %v146
    %v207 = vunpack.c.l.b16 %v147
    %v208 = vunpack.c.h.b16 %v147
    %v209 = vunpack.c.l.b16 %v148
    %v210 = vunpack.c.h.b16 %v148
    %v211 = vunpack.c.l.b16 %v149
    %v212 = vunpack.c.h.b16 %v149
    %v213 = vunpack.c.l.b16 %v150
    %v214 = vunpack.c.h.b16 %v150
    %v215 = vpack.c.b16 %v191, %v187
    %v216 = vpack.c.b16 %v192, %v188
    %v217 = vpack.c.b16 %v193, %v189
    %v218 = vpack.c.b16 %v194, %v190
    %v219 = vpack.c.b16 %v199, %v195
    %v220 = vpack.c.b16 %v200, %v196
    %v221 = vpack.c.b16 %v201, %v197
    %v222 = vpack.c.b16 %v202, %v198
    %v223 = vpack.c.b16 %v207, %v203
    %v224 = vpack.c.b16 %v208, %v204
    %v225 = vpack.c.b16 %v209, %v205
    %v226 = vpack.c.b16 %v210, %v206
    %v227 = vpack.c.b16 %v211, %v211
    %v228 = vpack.c.b16 %v212, %v212
    %v229 = vpack.c.b16 %v213, %v213
    %v230 = vpack.c.b16 %v214, %v214
    %vm243 = vcmask 400384
    %v245 = vsel %vm243, %v135, 0
    %v248 = vsel %vm243, %v136, 0
    %vm250 = vcmask 1040384
    %v251 = vsel 0, 4294967295, 65535
    %v252 = vsel %vm250, %v251, 0
    %v254 = vand.u32 %v227, %v252
    %v257 = vand.u32 %v228, %v252
    %v260 = vand.u32 %v229, %v252
    %v263 = vand.u32 %v230, %v252
    %265 = vmatprep.subr.bf16.mxu0 %v216
    %266 = vmatpush1.bf16.msra.mxu0 %v215
    %267 = vmatprep.subr.bf16.mxu0 %v220
    %268 = vmatpush1.bf16.msra.mxu0 %v219
    %269 = vmatprep.subr.bf16.mxu0 %v224
    %270 = vmatpush1.bf16.msra.mxu0 %v223
    %271 = vmatprep.subr.bf16.mxu0 %v257
    %272 = vmatpush1.bf16.msra.mxu0 %v254
    %273 = vmatprep.subr.bf16.mxu0 0
    %274 = vmatpush1.bf16.msra.mxu0 0
    %275 = vmatprep.subr.bf16.mxu0 0
    %276 = vmatpush1.bf16.msra.mxu0 0
    %277 = vmatprep.subr.bf16.mxu0 0
    %278 = vmatpush1.bf16.msra.mxu0 0
    %279 = vmatprep.subr.bf16.mxu0 0
    %280 = vmatpush1.bf16.msra.mxu0 0
    %281 = vmatprep.subr.bf16.mxu0 0
    %282 = vmatpush1.bf16.msra.mxu0 0
    %283 = vmatprep.subr.bf16.mxu0 0
    %284 = vmatpush1.bf16.msra.mxu0 0
    %285 = vmatprep.subr.bf16.mxu0 0
    %286 = vmatpush1.bf16.msra.mxu0 0
    %287 = vmatprep.subr.bf16.mxu0 0
    %288 = vmatpush1.bf16.msra.mxu0 0
    %289 = vmatprep.subr.bf16.mxu0 0
    %290 = vmatpush1.bf16.msra.mxu0 0
    %291 = vmatprep.subr.bf16.mxu0 0
    %292 = vmatpush1.bf16.msra.mxu0 0
    %293 = vmatprep.subr.bf16.mxu0 0
    %294 = vmatpush1.bf16.msra.mxu0 0
    %295 = vmatprep.subr.bf16.mxu0 0
    %296 = vmatpush1.bf16.msra.mxu0 0
    %297 = vmatprep.mubr.bf16.mxu0 0
    %298 = vmatmul.mubr.bf16.gmra.mrb[0].mxu0 %v245
    %v299 = vpop.f32.mrb[0].mxu0
    %v300 = vadd.f32 %v156, %v299
    %v301 = vpop.f32.mrb[0].mxu0
    %v302 = vadd.f32 %v160, %v301
    %v303 = vpop.f32.mrb[0].mxu0
    %v304 = vadd.f32 %v156, %v303
    %v305 = vpop.f32.mrb[0].mxu0
    %v306 = vadd.f32 %v160, %v305
    %307 = vmatprep.mubr.bf16.mxu0 0
    %308 = vmatmul.mubr.bf16.gmra.mrb[0].mxu0 %v248
    %v309 = vpop.f32.mrb[0].mxu0
    %v310 = vadd.f32 %v156, %v309
    %v311 = vpop.f32.mrb[0].mxu0
    %v312 = vadd.f32 %v160, %v311
    %v313 = vpop.f32.mrb[0].mxu0
    %v314 = vpop.f32.mrb[0].mxu0
    %315 = vdwg.mxu0
    %316 = vmatprep.subr.bf16.mxu0 %v218
    %317 = vmatpush1.bf16.msra.mxu0 %v217
    %318 = vmatprep.subr.bf16.mxu0 %v222
    %319 = vmatpush1.bf16.msra.mxu0 %v221
    %320 = vmatprep.subr.bf16.mxu0 %v226
    %321 = vmatpush1.bf16.msra.mxu0 %v225
    %322 = vmatprep.subr.bf16.mxu0 %v263
    %323 = vmatpush1.bf16.msra.mxu0 %v260
    %324 = vmatprep.subr.bf16.mxu0 0
    %325 = vmatpush1.bf16.msra.mxu0 0
    %326 = vmatprep.subr.bf16.mxu0 0
    %327 = vmatpush1.bf16.msra.mxu0 0
    %328 = vmatprep.subr.bf16.mxu0 0
    %329 = vmatpush1.bf16.msra.mxu0 0
    %330 = vmatprep.subr.bf16.mxu0 0
    %331 = vmatpush1.bf16.msra.mxu0 0
    %332 = vmatprep.subr.bf16.mxu0 0
    %333 = vmatpush1.bf16.msra.mxu0 0
    %334 = vmatprep.subr.bf16.mxu0 0
    %335 = vmatpush1.bf16.msra.mxu0 0
    %336 = vmatprep.subr.bf16.mxu0 0
    %337 = vmatpush1.bf16.msra.mxu0 0
    %338 = vmatprep.subr.bf16.mxu0 0
    %339 = vmatpush1.bf16.msra.mxu0 0
    %340 = vmatprep.subr.bf16.mxu0 0
    %341 = vmatpush1.bf16.msra.mxu0 0
    %342 = vmatprep.subr.bf16.mxu0 0
    %343 = vmatpush1.bf16.msra.mxu0 0
    %344 = vmatprep.subr.bf16.mxu0 0
    %345 = vmatpush1.bf16.msra.mxu0 0
    %346 = vmatprep.subr.bf16.mxu0 0
    %347 = vmatpush1.bf16.msra.mxu0 0
    %348 = vmatprep.mubr.bf16.mxu0 0
    %349 = vmatmul.mubr.bf16.gmra.mrb[0].mxu0 %v245
    %v350 = vpop.f32.mrb[0].mxu0
    %v351 = vadd.f32 %v164, %v350
    %v352 = vpop.f32.mrb[0].mxu0
    %v353 = vadd.f32 %v168, %v352
    %v354 = vpop.f32.mrb[0].mxu0
    %v355 = vadd.f32 %v164, %v354
    %v356 = vpop.f32.mrb[0].mxu0
    %v357 = vadd.f32 %v168, %v356
    %358 = vmatprep.mubr.bf16.mxu0 0
    %359 = vmatmul.mubr.bf16.gmra.mrb[0].mxu0 %v248
    %v360 = vpop.f32.mrb[0].mxu0
    %v361 = vadd.f32 %v164, %v360
    %v362 = vpop.f32.mrb[0].mxu0
    %v363 = vadd.f32 %v168, %v362
    %v364 = vpop.f32.mrb[0].mxu0
    %v365 = vpop.f32.mrb[0].mxu0
    %366 = vdwg.mxu0
    %v367 = vmax.f32 %v300, 0.0
    %v368 = vmax.f32 %v302, 0.0
    %v369 = vmax.f32 %v351, 0.0
    %v370 = vmax.f32 %v353, 0.0
    %v371 = vmax.f32 %v304, 0.0
    %v372 = vmax.f32 %v306, 0.0
    %v373 = vmax.f32 %v355, 0.0
    %v374 = vmax.f32 %v357, 0.0
    %v375 = vmax.f32 %v310, 0.0
    %v376 = vmax.f32 %v312, 0.0
    %v377 = vmax.f32 %v361, 0.0
    %v378 = vmax.f32 %v363, 0.0
    %v379 = vpack.c.bf16 %v371, %v367
    %v380 = vpack.c.bf16 %v372, %v368
    %v381 = vpack.c.bf16 %v373, %v369
    %v382 = vpack.c.bf16 %v374, %v370
    %v383 = vpack.c.bf16 %v375, %v375
    %v384 = vpack.c.bf16 %v376, %v376
    %v385 = vpack.c.bf16 %v377, %v377
    %v386 = vpack.c.bf16 %v378, %v378
    %v387 = vld [vmem:[#allocation7] sm:$0xff]
    %v388 = vld [vmem:[#allocation7 + $0x8] sm:$0xff]
    %v389 = vld [vmem:[#allocation7 + $0x10] sm:$0xff]
    %v390 = vld [vmem:[#allocation7 + $0x18] sm:$0xff]
    %v391 = vld [vmem:[#allocation7 + $0x20] sm:$0xff]
    %v392 = vld [vmem:[#allocation7 + $0x28] sm:$0xff]
    %v393 = vld [vmem:[#allocation7 + $0x30] sm:$0xff]
    %v394 = vld [vmem:[#allocation7 + $0x38] sm:$0xff]
    %v395 = vld [vmem:[#allocation7 + $0x40] sm:$0xff]
    %v396 = vld [vmem:[#allocation7 + $0x48] sm:$0xff]
    %v397 = vld [vmem:[#allocation7 + $0x50] sm:$0xff]
    %v398 = vld [vmem:[#allocation7 + $0x58] sm:$0xff]
    %v399 = vld [vmem:[#allocation7 + $0x60] sm:$0xff]
    %v400 = vld [vmem:[#allocation7 + $0x68] sm:$0xff]
    %v401 = vld [vmem:[#allocation7 + $0x70] sm:$0xff]
    %v402 = vld [vmem:[#allocation7 + $0x78] sm:$0xff]
    %v403 = vld [vmem:[#allocation7 + $0x80] sm:$0xff]
    %v404 = vld [vmem:[#allocation7 + $0x88] sm:$0xff]
    %v405 = vld [vmem:[#allocation7 + $0x90] sm:$0xff]
    %v406 = vld [vmem:[#allocation7 + $0x98] sm:$0xff]
    %v407 = vld [vmem:[#allocation7 + $0xa0] sm:$0xff]
    %v408 = vld [vmem:[#allocation7 + $0xa8] sm:$0xff]
    %v409 = vld [vmem:[#allocation7 + $0xb0] sm:$0xff]
    %v410 = vld [vmem:[#allocation7 + $0xb8] sm:$0xff]
    %v411 = vld [vmem:[#allocation7 + $0xc0] sm:$0xff]
    %v412 = vld [vmem:[#allocation7 + $0xc8] sm:$0xff]
    %v413 = vld [vmem:[#allocation7 + $0xd0] sm:$0xff]
    %v414 = vld [vmem:[#allocation7 + $0xd8] sm:$0xff]
    %v415 = vld [vmem:[#allocation7 + $0xe0] sm:$0xff]
    %v416 = vld [vmem:[#allocation7 + $0xe8] sm:$0xff]
    %v417 = vld [vmem:[#allocation7 + $0xf0] sm:$0xff]
    %v418 = vld [vmem:[#allocation7 + $0xf8] sm:$0xff]
    %v419 = vld [vmem:[#allocation7 + $0x100] sm:$0xff]
    %v420 = vld [vmem:[#allocation7 + $0x108] sm:$0xff]
    %v421 = vld [vmem:[#allocation7 + $0x110] sm:$0xff]
    %v422 = vld [vmem:[#allocation7 + $0x118] sm:$0xff]
    %v423 = vld [vmem:[#allocation7 + $0x120] sm:$0xff]
    %v424 = vld [vmem:[#allocation7 + $0x128] sm:$0xff]
    %v425 = vld [vmem:[#allocation7 + $0x130] sm:$0xff]
    %v426 = vld [vmem:[#allocation7 + $0x138] sm:$0xff]
    %v427 = vld [vmem:[#allocation7 + $0x140] sm:$0xff]
    %v428 = vld [vmem:[#allocation7 + $0x148] sm:$0xff]
    %v429 = vld [vmem:[#allocation7 + $0x150] sm:$0xff]
    %v430 = vld [vmem:[#allocation7 + $0x158] sm:$0xff]
    %v431 = vld [vmem:[#allocation7 + $0x160] sm:$0xff]
    %v432 = vld [vmem:[#allocation7 + $0x168] sm:$0xff]
    %v433 = vld [vmem:[#allocation7 + $0x170] sm:$0xff]
    %v434 = vld [vmem:[#allocation7 + $0x178] sm:$0xff]
    %v435 = vld [vmem:[#allocation7 + $0x180] sm:$0xff]
    %v436 = vld [vmem:[#allocation7 + $0x188] sm:$0xff]
    %v437 = vld [vmem:[#allocation7 + $0x190] sm:$0xff]
    %v438 = vld [vmem:[#allocation7 + $0x198] sm:$0xff]
    %v439 = vld [vmem:[#allocation7 + $0x1a0] sm:$0xff]
    %v440 = vld [vmem:[#allocation7 + $0x1a8] sm:$0xff]
    %v441 = vld [vmem:[#allocation7 + $0x1b0] sm:$0xff]
    %v442 = vld [vmem:[#allocation7 + $0x1b8] sm:$0xff]
    %v443 = vld [vmem:[#allocation7 + $0x1c0] sm:$0xff]
    %v444 = vld [vmem:[#allocation7 + $0x1c8] sm:$0xff]
    %v445 = vld [vmem:[#allocation7 + $0x1d0] sm:$0xff]
    %v446 = vld [vmem:[#allocation7 + $0x1d8] sm:$0xff]
    %v447 = vld [vmem:[#allocation7 + $0x1e0] sm:$0xff]
    %v448 = vld [vmem:[#allocation7 + $0x1e8] sm:$0xff]
    %v449 = vld [vmem:[#allocation7 + $0x1f0] sm:$0xff]
    %v450 = vld [vmem:[#allocation7 + $0x1f8] sm:$0xff]
    %v451 = vld [vmem:[#allocation7 + $0x200] sm:$0xff]
    %v452 = vld [vmem:[#allocation7 + $0x208] sm:$0xff]
    %v453 = vld [vmem:[#allocation7 + $0x210] sm:$0xff]
    %v454 = vld [vmem:[#allocation7 + $0x218] sm:$0xff]
    %v455 = vld [vmem:[#allocation7 + $0x220] sm:$0xff]
    %v456 = vld [vmem:[#allocation7 + $0x228] sm:$0xff]
    %v457 = vld [vmem:[#allocation7 + $0x230] sm:$0xff]
    %v458 = vld [vmem:[#allocation7 + $0x238] sm:$0xff]
    %v459 = vld [vmem:[#allocation7 + $0x240] sm:$0xff]
    %v460 = vld [vmem:[#allocation7 + $0x248] sm:$0xff]
    %v461 = vld [vmem:[#allocation7 + $0x250] sm:$0xff]
    %v462 = vld [vmem:[#allocation7 + $0x258] sm:$0xff]
    %v463 = vld [vmem:[#allocation7 + $0x260] sm:$0xff]
    %v464 = vld [vmem:[#allocation7 + $0x268] sm:$0xff]
    %v465 = vld [vmem:[#allocation7 + $0x270] sm:$0xff]
    %v466 = vld [vmem:[#allocation7 + $0x278] sm:$0xff]
    %v467 = vld [vmem:[#allocation7 + $0x280] sm:$0xff]
    %v468 = vld [vmem:[#allocation7 + $0x288] sm:$0xff]
    %v469 = vld [vmem:[#allocation7 + $0x290] sm:$0xff]
    %v470 = vld [vmem:[#allocation7 + $0x298] sm:$0xff]
    %v471 = vld [vmem:[#allocation7 + $0x2a0] sm:$0xff]
    %v472 = vld [vmem:[#allocation7 + $0x2a8] sm:$0xff]
    %v473 = vld [vmem:[#allocation7 + $0x2b0] sm:$0xff]
    %v474 = vld [vmem:[#allocation7 + $0x2b8] sm:$0xff]
    %v475 = vld [vmem:[#allocation7 + $0x2c0] sm:$0xff]
    %v476 = vld [vmem:[#allocation7 + $0x2c8] sm:$0xff]
    %v477 = vld [vmem:[#allocation7 + $0x2d0] sm:$0xff]
    %v478 = vld [vmem:[#allocation7 + $0x2d8] sm:$0xff]
    %v479 = vld [vmem:[#allocation7 + $0x2e0] sm:$0xff]
    %v480 = vld [vmem:[#allocation7 + $0x2e8] sm:$0xff]
    %v481 = vld [vmem:[#allocation7 + $0x2f0] sm:$0xff]
    %v482 = vld [vmem:[#allocation7 + $0x2f8] sm:$0xff]
    %v483 = vld [vmem:[#allocation7 + $0x300] sm:$0xff]
    %v484 = vld [vmem:[#allocation7 + $0x308] sm:$0xff]
    %v485 = vld [vmem:[#allocation7 + $0x310] sm:$0xff]
    %v486 = vld [vmem:[#allocation7 + $0x318] sm:$0xff]
    %v487 = vld [vmem:[#allocation7 + $0x320] sm:$0xff]
    %v488 = vld [vmem:[#allocation7 + $0x328] sm:$0xff]
    %v489 = vld [vmem:[#allocation7 + $0x330] sm:$0xff]
    %v490 = vld [vmem:[#allocation7 + $0x338] sm:$0xff]
    %v491 = vld [vmem:[#allocation7 + $0x340] sm:$0xff]
    %v492 = vld [vmem:[#allocation7 + $0x348] sm:$0xff]
    %v493 = vld [vmem:[#allocation7 + $0x350] sm:$0xff]
    %v494 = vld [vmem:[#allocation7 + $0x358] sm:$0xff]
    %v495 = vld [vmem:[#allocation7 + $0x360] sm:$0xff]
    %v496 = vld [vmem:[#allocation7 + $0x368] sm:$0xff]
    %v497 = vld [vmem:[#allocation7 + $0x370] sm:$0xff]
    %v498 = vld [vmem:[#allocation7 + $0x378] sm:$0xff]
    %v499 = vld [vmem:[#allocation7 + $0x380] sm:$0xff]
    %v500 = vld [vmem:[#allocation7 + $0x388] sm:$0xff]
    %v501 = vld [vmem:[#allocation7 + $0x390] sm:$0xff]
    %v502 = vld [vmem:[#allocation7 + $0x398] sm:$0xff]
    %v503 = vld [vmem:[#allocation7 + $0x3a0] sm:$0xff]
    %v504 = vld [vmem:[#allocation7 + $0x3a8] sm:$0xff]
    %v505 = vld [vmem:[#allocation7 + $0x3b0] sm:$0xff]
    %v506 = vld [vmem:[#allocation7 + $0x3b8] sm:$0xff]
    %v507 = vld [vmem:[#allocation7 + $0x3c0] sm:$0xff]
    %v508 = vld [vmem:[#allocation7 + $0x3c8] sm:$0xff]
    %v509 = vld [vmem:[#allocation7 + $0x3d0] sm:$0xff]
    %v510 = vld [vmem:[#allocation7 + $0x3d8] sm:$0xff]
    %v511 = vld [vmem:[#allocation7 + $0x3e0] sm:$0xff]
    %v512 = vld [vmem:[#allocation7 + $0x3e8] sm:$0xff]
    %v513 = vld [vmem:[#allocation7 + $0x3f0] sm:$0xff]
    %v514 = vld [vmem:[#allocation7 + $0x3f8] sm:$0xff]
    %v515 = vld [vmem:[%s4] sm:$0xf]
    %v517 = vlaneseq
    %v518 = vshrl.u32 %v517, 7
    %v519 = vsub.s32 0, %v518
    %v520 = vrot.slane %v515, %v519
    %v521 = vlaneseq
    %v522 = vshrl.u32 %v521, 7
    %v523 = vsub.s32 1, %v522
    %v524 = vrot.slane %v515, %v523
    %v525 = vlaneseq
    %v526 = vshrl.u32 %v525, 7
    %v527 = vsub.s32 2, %v526
    %v528 = vrot.slane %v515, %v527
    %v529 = vlaneseq
    %v530 = vshrl.u32 %v529, 7
    %v531 = vsub.s32 3, %v530
    %v532 = vrot.slane %v515, %v531
    %v665 = vunpack.c.l.b16 %v387
    %v666 = vunpack.c.h.b16 %v387
    %v667 = vunpack.c.l.b16 %v388
    %v668 = vunpack.c.h.b16 %v388
    %v669 = vunpack.c.l.b16 %v389
    %v670 = vunpack.c.h.b16 %v389
    %v671 = vunpack.c.l.b16 %v390
    %v672 = vunpack.c.h.b16 %v390
    %v673 = vunpack.c.l.b16 %v391
    %v674 = vunpack.c.h.b16 %v391
    %v675 = vunpack.c.l.b16 %v392
    %v676 = vunpack.c.h.b16 %v392
    %v677 = vunpack.c.l.b16 %v393
    %v678 = vunpack.c.h.b16 %v393
    %v679 = vunpack.c.l.b16 %v394
    %v680 = vunpack.c.h.b16 %v394
    %v681 = vunpack.c.l.b16 %v395
    %v682 = vunpack.c.h.b16 %v395
    %v683 = vunpack.c.l.b16 %v396
    %v684 = vunpack.c.h.b16 %v396
    %v685 = vunpack.c.l.b16 %v397
    %v686 = vunpack.c.h.b16 %v397
    %v687 = vunpack.c.l.b16 %v398
    %v688 = vunpack.c.h.b16 %v398
    %v689 = vunpack.c.l.b16 %v399
    %v690 = vunpack.c.h.b16 %v399
    %v691 = vunpack.c.l.b16 %v400
    %v692 = vunpack.c.h.b16 %v400
    %v693 = vunpack.c.l.b16 %v401
    %v694 = vunpack.c.h.b16 %v401
    %v695 = vunpack.c.l.b16 %v402
    %v696 = vunpack.c.h.b16 %v402
    %v697 = vunpack.c.l.b16 %v403
    %v698 = vunpack.c.h.b16 %v403
    %v699 = vunpack.c.l.b16 %v404
    %v700 = vunpack.c.h.b16 %v404
    %v701 = vunpack.c.l.b16 %v405
    %v702 = vunpack.c.h.b16 %v405
    %v703 = vunpack.c.l.b16 %v406
    %v704 = vunpack.c.h.b16 %v406
    %v705 = vunpack.c.l.b16 %v407
    %v706 = vunpack.c.h.b16 %v407
    %v707 = vunpack.c.l.b16 %v408
    %v708 = vunpack.c.h.b16 %v408
    %v709 = vunpack.c.l.b16 %v409
    %v710 = vunpack.c.h.b16 %v409
    %v711 = vunpack.c.l.b16 %v410
    %v712 = vunpack.c.h.b16 %v410
    %v713 = vunpack.c.l.b16 %v411
    %v714 = vunpack.c.h.b16 %v411
    %v715 = vunpack.c.l.b16 %v412
    %v716 = vunpack.c.h.b16 %v412
    %v717 = vunpack.c.l.b16 %v413
    %v718 = vunpack.c.h.b16 %v413
    %v719 = vunpack.c.l.b16 %v414
    %v720 = vunpack.c.h.b16 %v414
    %v721 = vunpack.c.l.b16 %v415
    %v722 = vunpack.c.h.b16 %v415
    %v723 = vunpack.c.l.b16 %v416
    %v724 = vunpack.c.h.b16 %v416
    %v725 = vunpack.c.l.b16 %v417
    %v726 = vunpack.c.h.b16 %v417
    %v727 = vunpack.c.l.b16 %v418
    %v728 = vunpack.c.h.b16 %v418
    %v729 = vunpack.c.l.b16 %v419
    %v730 = vunpack.c.h.b16 %v419
    %v731 = vunpack.c.l.b16 %v420
    %v732 = vunpack.c.h.b16 %v420
    %v733 = vunpack.c.l.b16 %v421
    %v734 = vunpack.c.h.b16 %v421
    %v735 = vunpack.c.l.b16 %v422
    %v736 = vunpack.c.h.b16 %v422
    %v737 = vunpack.c.l.b16 %v423
    %v738 = vunpack.c.h.b16 %v423
    %v739 = vunpack.c.l.b16 %v424
    %v740 = vunpack.c.h.b16 %v424
    %v741 = vunpack.c.l.b16 %v425
    %v742 = vunpack.c.h.b16 %v425
    %v743 = vunpack.c.l.b16 %v426
    %v744 = vunpack.c.h.b16 %v426
    %v745 = vunpack.c.l.b16 %v427
    %v746 = vunpack.c.h.b16 %v427
    %v747 = vunpack.c.l.b16 %v428
    %v748 = vunpack.c.h.b16 %v428
    %v749 = vunpack.c.l.b16 %v429
    %v750 = vunpack.c.h.b16 %v429
    %v751 = vunpack.c.l.b16 %v430
    %v752 = vunpack.c.h.b16 %v430
    %v753 = vunpack.c.l.b16 %v431
    %v754 = vunpack.c.h.b16 %v431
    %v755 = vunpack.c.l.b16 %v432
    %v756 = vunpack.c.h.b16 %v432
    %v757 = vunpack.c.l.b16 %v433
    %v758 = vunpack.c.h.b16 %v433
    %v759 = vunpack.c.l.b16 %v434
    %v760 = vunpack.c.h.b16 %v434
    %v761 = vunpack.c.l.b16 %v435
    %v762 = vunpack.c.h.b16 %v435
    %v763 = vunpack.c.l.b16 %v436
    %v764 = vunpack.c.h.b16 %v436
    %v765 = vunpack.c.l.b16 %v437
    %v766 = vunpack.c.h.b16 %v437
    %v767 = vunpack.c.l.b16 %v438
    %v768 = vunpack.c.h.b16 %v438
    %v769 = vunpack.c.l.b16 %v439
    %v770 = vunpack.c.h.b16 %v439
    %v771 = vunpack.c.l.b16 %v440
    %v772 = vunpack.c.h.b16 %v440
    %v773 = vunpack.c.l.b16 %v441
    %v774 = vunpack.c.h.b16 %v441
    %v775 = vunpack.c.l.b16 %v442
    %v776 = vunpack.c.h.b16 %v442
    %v777 = vunpack.c.l.b16 %v443
    %v778 = vunpack.c.h.b16 %v443
    %v779 = vunpack.c.l.b16 %v444
    %v780 = vunpack.c.h.b16 %v444
    %v781 = vunpack.c.l.b16 %v445
    %v782 = vunpack.c.h.b16 %v445
    %v783 = vunpack.c.l.b16 %v446
    %v784 = vunpack.c.h.b16 %v446
    %v785 = vunpack.c.l.b16 %v447
    %v786 = vunpack.c.h.b16 %v447
    %v787 = vunpack.c.l.b16 %v448
    %v788 = vunpack.c.h.b16 %v448
    %v789 = vunpack.c.l.b16 %v449
    %v790 = vunpack.c.h.b16 %v449
    %v791 = vunpack.c.l.b16 %v450
    %v792 = vunpack.c.h.b16 %v450
    %v793 = vunpack.c.l.b16 %v451
    %v794 = vunpack.c.h.b16 %v451
    %v795 = vunpack.c.l.b16 %v452
    %v796 = vunpack.c.h.b16 %v452
    %v797 = vunpack.c.l.b16 %v453
    %v798 = vunpack.c.h.b16 %v453
    %v799 = vunpack.c.l.b16 %v454
    %v800 = vunpack.c.h.b16 %v454
    %v801 = vunpack.c.l.b16 %v455
    %v802 = vunpack.c.h.b16 %v455
    %v803 = vunpack.c.l.b16 %v456
    %v804 = vunpack.c.h.b16 %v456
    %v805 = vunpack.c.l.b16 %v457
    %v806 = vunpack.c.h.b16 %v457
    %v807 = vunpack.c.l.b16 %v458
    %v808 = vunpack.c.h.b16 %v458
    %v809 = vunpack.c.l.b16 %v459
    %v810 = vunpack.c.h.b16 %v459
    %v811 = vunpack.c.l.b16 %v460
    %v812 = vunpack.c.h.b16 %v460
    %v813 = vunpack.c.l.b16 %v461
    %v814 = vunpack.c.h.b16 %v461
    %v815 = vunpack.c.l.b16 %v462
    %v816 = vunpack.c.h.b16 %v462
    %v817 = vunpack.c.l.b16 %v463
    %v818 = vunpack.c.h.b16 %v463
    %v819 = vunpack.c.l.b16 %v464
    %v820 = vunpack.c.h.b16 %v464
    %v821 = vunpack.c.l.b16 %v465
    %v822 = vunpack.c.h.b16 %v465
    %v823 = vunpack.c.l.b16 %v466
    %v824 = vunpack.c.h.b16 %v466
    %v825 = vunpack.c.l.b16 %v467
    %v826 = vunpack.c.h.b16 %v467
    %v827 = vunpack.c.l.b16 %v468
    %v828 = vunpack.c.h.b16 %v468
    %v829 = vunpack.c.l.b16 %v469
    %v830 = vunpack.c.h.b16 %v469
    %v831 = vunpack.c.l.b16 %v470
    %v832 = vunpack.c.h.b16 %v470
    %v833 = vunpack.c.l.b16 %v471
    %v834 = vunpack.c.h.b16 %v471
    %v835 = vunpack.c.l.b16 %v472
    %v836 = vunpack.c.h.b16 %v472
    %v837 = vunpack.c.l.b16 %v473
    %v838 = vunpack.c.h.b16 %v473
    %v839 = vunpack.c.l.b16 %v474
    %v840 = vunpack.c.h.b16 %v474
    %v841 = vunpack.c.l.b16 %v475
    %v842 = vunpack.c.h.b16 %v475
    %v843 = vunpack.c.l.b16 %v476
    %v844 = vunpack.c.h.b16 %v476
    %v845 = vunpack.c.l.b16 %v477
    %v846 = vunpack.c.h.b16 %v477
    %v847 = vunpack.c.l.b16 %v478
    %v848 = vunpack.c.h.b16 %v478
    %v849 = vunpack.c.l.b16 %v479
    %v850 = vunpack.c.h.b16 %v479
    %v851 = vunpack.c.l.b16 %v480
    %v852 = vunpack.c.h.b16 %v480
    %v853 = vunpack.c.l.b16 %v481
    %v854 = vunpack.c.h.b16 %v481
    %v855 = vunpack.c.l.b16 %v482
    %v856 = vunpack.c.h.b16 %v482
    %v857 = vunpack.c.l.b16 %v483
    %v858 = vunpack.c.h.b16 %v483
    %v859 = vunpack.c.l.b16 %v484
    %v860 = vunpack.c.h.b16 %v484
    %v861 = vunpack.c.l.b16 %v485
    %v862 = vunpack.c.h.b16 %v485
    %v863 = vunpack.c.l.b16 %v486
    %v864 = vunpack.c.h.b16 %v486
    %v865 = vunpack.c.l.b16 %v487
    %v866 = vunpack.c.h.b16 %v487
    %v867 = vunpack.c.l.b16 %v488
    %v868 = vunpack.c.h.b16 %v488
    %v869 = vunpack.c.l.b16 %v489
    %v870 = vunpack.c.h.b16 %v489
    %v871 = vunpack.c.l.b16 %v490
    %v872 = vunpack.c.h.b16 %v490
    %v873 = vunpack.c.l.b16 %v491
    %v874 = vunpack.c.h.b16 %v491
    %v875 = vunpack.c.l.b16 %v492
    %v876 = vunpack.c.h.b16 %v492
    %v877 = vunpack.c.l.b16 %v493
    %v878 = vunpack.c.h.b16 %v493
    %v879 = vunpack.c.l.b16 %v494
    %v880 = vunpack.c.h.b16 %v494
    %v881 = vunpack.c.l.b16 %v495
    %v882 = vunpack.c.h.b16 %v495
    %v883 = vunpack.c.l.b16 %v496
    %v884 = vunpack.c.h.b16 %v496
    %v885 = vunpack.c.l.b16 %v497
    %v886 = vunpack.c.h.b16 %v497
    %v887 = vunpack.c.l.b16 %v498
    %v888 = vunpack.c.h.b16 %v498
    %v889 = vunpack.c.l.b16 %v499
    %v890 = vunpack.c.h.b16 %v499
    %v891 = vunpack.c.l.b16 %v500
    %v892 = vunpack.c.h.b16 %v500
    %v893 = vunpack.c.l.b16 %v501
    %v894 = vunpack.c.h.b16 %v501
    %v895 = vunpack.c.l.b16 %v502
    %v896 = vunpack.c.h.b16 %v502
    %v897 = vunpack.c.l.b16 %v503
    %v898 = vunpack.c.h.b16 %v503
    %v899 = vunpack.c.l.b16 %v504
    %v900 = vunpack.c.h.b16 %v504
    %v901 = vunpack.c.l.b16 %v505
    %v902 = vunpack.c.h.b16 %v505
    %v903 = vunpack.c.l.b16 %v506
    %v904 = vunpack.c.h.b16 %v506
    %v905 = vunpack.c.l.b16 %v507
    %v906 = vunpack.c.h.b16 %v507
    %v907 = vunpack.c.l.b16 %v508
    %v908 = vunpack.c.h.b16 %v508
    %v909 = vunpack.c.l.b16 %v509
    %v910 = vunpack.c.h.b16 %v509
    %v911 = vunpack.c.l.b16 %v510
    %v912 = vunpack.c.h.b16 %v510
    %v913 = vunpack.c.l.b16 %v511
    %v914 = vunpack.c.h.b16 %v511
    %v915 = vunpack.c.l.b16 %v512
    %v916 = vunpack.c.h.b16 %v512
    %v917 = vunpack.c.l.b16 %v513
    %v918 = vunpack.c.h.b16 %v513
    %v919 = vunpack.c.l.b16 %v514
    %v920 = vunpack.c.h.b16 %v514
    %v921 = vpack.c.b16 %v669, %v665
    %v922 = vpack.c.b16 %v670, %v666
    %v923 = vpack.c.b16 %v671, %v667
    %v924 = vpack.c.b16 %v672, %v668
    %v925 = vpack.c.b16 %v677, %v673
    %v926 = vpack.c.b16 %v678, %v674
    %v927 = vpack.c.b16 %v679, %v675
    %v928 = vpack.c.b16 %v680, %v676
    %v929 = vpack.c.b16 %v685, %v681
    %v930 = vpack.c.b16 %v686, %v682
    %v931 = vpack.c.b16 %v687, %v683
    %v932 = vpack.c.b16 %v688, %v684
    %v933 = vpack.c.b16 %v693, %v689
    %v934 = vpack.c.b16 %v694, %v690
    %v935 = vpack.c.b16 %v695, %v691
    %v936 = vpack.c.b16 %v696, %v692
    %v937 = vpack.c.b16 %v701, %v697
    %v938 = vpack.c.b16 %v702, %v698
    %v939 = vpack.c.b16 %v703, %v699
    %v940 = vpack.c.b16 %v704, %v700
    %v941 = vpack.c.b16 %v709, %v705
    %v942 = vpack.c.b16 %v710, %v706
    %v943 = vpack.c.b16 %v711, %v707
    %v944 = vpack.c.b16 %v712, %v708
    %v945 = vpack.c.b16 %v717, %v713
    %v946 = vpack.c.b16 %v718, %v714
    %v947 = vpack.c.b16 %v719, %v715
    %v948 = vpack.c.b16 %v720, %v716
    %v949 = vpack.c.b16 %v725, %v721
    %v950 = vpack.c.b16 %v726, %v722
    %v951 = vpack.c.b16 %v727, %v723
    %v952 = vpack.c.b16 %v728, %v724
    %v953 = vpack.c.b16 %v733, %v729
    %v954 = vpack.c.b16 %v734, %v730
    %v955 = vpack.c.b16 %v735, %v731
    %v956 = vpack.c.b16 %v736, %v732
    %v957 = vpack.c.b16 %v741, %v737
    %v958 = vpack.c.b16 %v742, %v738
    %v959 = vpack.c.b16 %v743, %v739
    %v960 = vpack.c.b16 %v744, %v740
    %v961 = vpack.c.b16 %v749, %v745
    %v962 = vpack.c.b16 %v750, %v746
    %v963 = vpack.c.b16 %v751, %v747
    %v964 = vpack.c.b16 %v752, %v748
    %v965 = vpack.c.b16 %v757, %v753
    %v966 = vpack.c.b16 %v758, %v754
    %v967 = vpack.c.b16 %v759, %v755
    %v968 = vpack.c.b16 %v760, %v756
    %v969 = vpack.c.b16 %v765, %v761
    %v970 = vpack.c.b16 %v766, %v762
    %v971 = vpack.c.b16 %v767, %v763
    %v972 = vpack.c.b16 %v768, %v764
    %v973 = vpack.c.b16 %v773, %v769
    %v974 = vpack.c.b16 %v774, %v770
    %v975 = vpack.c.b16 %v775, %v771
    %v976 = vpack.c.b16 %v776, %v772
    %v977 = vpack.c.b16 %v781, %v777
    %v978 = vpack.c.b16 %v782, %v778
    %v979 = vpack.c.b16 %v783, %v779
    %v980 = vpack.c.b16 %v784, %v780
    %v981 = vpack.c.b16 %v789, %v785
    %v982 = vpack.c.b16 %v790, %v786
    %v983 = vpack.c.b16 %v791, %v787
    %v984 = vpack.c.b16 %v792, %v788
    %v985 = vpack.c.b16 %v797, %v793
    %v986 = vpack.c.b16 %v798, %v794
    %v987 = vpack.c.b16 %v799, %v795
    %v988 = vpack.c.b16 %v800, %v796
    %v989 = vpack.c.b16 %v805, %v801
    %v990 = vpack.c.b16 %v806, %v802
    %v991 = vpack.c.b16 %v807, %v803
    %v992 = vpack.c.b16 %v808, %v804
    %v993 = vpack.c.b16 %v813, %v809
    %v994 = vpack.c.b16 %v814, %v810
    %v995 = vpack.c.b16 %v815, %v811
    %v996 = vpack.c.b16 %v816, %v812
    %v997 = vpack.c.b16 %v821, %v817
    %v998 = vpack.c.b16 %v822, %v818
    %v999 = vpack.c.b16 %v823, %v819
    %v1000 = vpack.c.b16 %v824, %v820
    %v1001 = vpack.c.b16 %v829, %v825
    %v1002 = vpack.c.b16 %v830, %v826
    %v1003 = vpack.c.b16 %v831, %v827
    %v1004 = vpack.c.b16 %v832, %v828
    %v1005 = vpack.c.b16 %v837, %v833
    %v1006 = vpack.c.b16 %v838, %v834
    %v1007 = vpack.c.b16 %v839, %v835
    %v1008 = vpack.c.b16 %v840, %v836
    %v1009 = vpack.c.b16 %v845, %v841
    %v1010 = vpack.c.b16 %v846, %v842
    %v1011 = vpack.c.b16 %v847, %v843
    %v1012 = vpack.c.b16 %v848, %v844
    %v1013 = vpack.c.b16 %v853, %v849
    %v1014 = vpack.c.b16 %v854, %v850
    %v1015 = vpack.c.b16 %v855, %v851
    %v1016 = vpack.c.b16 %v856, %v852
    %v1017 = vpack.c.b16 %v861, %v857
    %v1018 = vpack.c.b16 %v862, %v858
    %v1019 = vpack.c.b16 %v863, %v859
    %v1020 = vpack.c.b16 %v864, %v860
    %v1021 = vpack.c.b16 %v869, %v865
    %v1022 = vpack.c.b16 %v870, %v866
    %v1023 = vpack.c.b16 %v871, %v867
    %v1024 = vpack.c.b16 %v872, %v868
    %v1025 = vpack.c.b16 %v877, %v873
    %v1026 = vpack.c.b16 %v878, %v874
    %v1027 = vpack.c.b16 %v879, %v875
    %v1028 = vpack.c.b16 %v880, %v876
    %v1029 = vpack.c.b16 %v885, %v881
    %v1030 = vpack.c.b16 %v886, %v882
    %v1031 = vpack.c.b16 %v887, %v883
    %v1032 = vpack.c.b16 %v888, %v884
    %v1033 = vpack.c.b16 %v893, %v889
    %v1034 = vpack.c.b16 %v894, %v890
    %v1035 = vpack.c.b16 %v895, %v891
    %v1036 = vpack.c.b16 %v896, %v892
    %v1037 = vpack.c.b16 %v901, %v897
    %v1038 = vpack.c.b16 %v902, %v898
    %v1039 = vpack.c.b16 %v903, %v899
    %v1040 = vpack.c.b16 %v904, %v900
    %v1041 = vpack.c.b16 %v909, %v905
    %v1042 = vpack.c.b16 %v910, %v906
    %v1043 = vpack.c.b16 %v911, %v907
    %v1044 = vpack.c.b16 %v912, %v908
    %v1045 = vpack.c.b16 %v917, %v913
    %v1046 = vpack.c.b16 %v918, %v914
    %v1047 = vpack.c.b16 %v919, %v915
    %v1048 = vpack.c.b16 %v920, %v916
    %1177 = vmatprep.subr.bf16.mxu0 %v922
    %1178 = vmatpush1.bf16.msra.mxu0 %v921
    %1179 = vmatprep.subr.bf16.mxu0 %v926
    %1180 = vmatpush1.bf16.msra.mxu0 %v925
    %1181 = vmatprep.subr.bf16.mxu0 %v930
    %1182 = vmatpush1.bf16.msra.mxu0 %v929
    %1183 = vmatprep.subr.bf16.mxu0 %v934
    %1184 = vmatpush1.bf16.msra.mxu0 %v933
    %1185 = vmatprep.subr.bf16.mxu0 %v938
    %1186 = vmatpush1.bf16.msra.mxu0 %v937
    %1187 = vmatprep.subr.bf16.mxu0 %v942
    %1188 = vmatpush1.bf16.msra.mxu0 %v941
    %1189 = vmatprep.subr.bf16.mxu0 %v946
    %1190 = vmatpush1.bf16.msra.mxu0 %v945
    %1191 = vmatprep.subr.bf16.mxu0 %v950
    %1192 = vmatpush1.bf16.msra.mxu0 %v949
    %1193 = vmatprep.subr.bf16.mxu0 %v954
    %1194 = vmatpush1.bf16.msra.mxu0 %v953
    %1195 = vmatprep.subr.bf16.mxu0 %v958
    %1196 = vmatpush1.bf16.msra.mxu0 %v957
    %1197 = vmatprep.subr.bf16.mxu0 %v962
    %1198 = vmatpush1.bf16.msra.mxu0 %v961
    %1199 = vmatprep.subr.bf16.mxu0 %v966
    %1200 = vmatpush1.bf16.msra.mxu0 %v965
    %1201 = vmatprep.subr.bf16.mxu0 %v970
    %1202 = vmatpush1.bf16.msra.mxu0 %v969
    %1203 = vmatprep.subr.bf16.mxu0 %v974
    %1204 = vmatpush1.bf16.msra.mxu0 %v973
    %1205 = vmatprep.subr.bf16.mxu0 %v978
    %1206 = vmatpush1.bf16.msra.mxu0 %v977
    %1207 = vmatprep.subr.bf16.mxu0 %v982
    %1208 = vmatpush1.bf16.msra.mxu0 %v981
    %1209 = vmatprep.mubr.bf16.mxu0 %v380
    %1210 = vmatmul.mubr.bf16.gmra.mrb[0].mxu0 %v379
    %v1211 = vpop.f32.mrb[0].mxu0
    %v1212 = vadd.f32 %v520, %v1211
    %v1213 = vpop.f32.mrb[0].mxu0
    %v1214 = vadd.f32 %v524, %v1213
    %v1215 = vpop.f32.mrb[0].mxu0
    %v1216 = vadd.f32 %v520, %v1215
    %v1217 = vpop.f32.mrb[0].mxu0
    %v1218 = vadd.f32 %v524, %v1217
    %1219 = vmatprep.mubr.bf16.mxu0 %v384
    %1220 = vmatmul.mubr.bf16.gmra.mrb[0].mxu0 %v383
    %v1221 = vpop.f32.mrb[0].mxu0
    %v1222 = vadd.f32 %v520, %v1221
    %v1223 = vpop.f32.mrb[0].mxu0
    %v1224 = vadd.f32 %v524, %v1223
    %v1225 = vpop.f32.mrb[0].mxu0
    %v1226 = vpop.f32.mrb[0].mxu0
    %1227 = vdwg.mxu0
    %1228 = vmatprep.subr.bf16.mxu0 %v986
    %1229 = vmatpush1.bf16.msra.mxu0 %v985
    %1230 = vmatprep.subr.bf16.mxu0 %v990
    %1231 = vmatpush1.bf16.msra.mxu0 %v989
    %1232 = vmatprep.subr.bf16.mxu0 %v994
    %1233 = vmatpush1.bf16.msra.mxu0 %v993
    %1234 = vmatprep.subr.bf16.mxu0 %v998
    %1235 = vmatpush1.bf16.msra.mxu0 %v997
    %1236 = vmatprep.subr.bf16.mxu0 %v1002
    %1237 = vmatpush1.bf16.msra.mxu0 %v1001
    %1238 = vmatprep.subr.bf16.mxu0 %v1006
    %1239 = vmatpush1.bf16.msra.mxu0 %v1005
    %1240 = vmatprep.subr.bf16.mxu0 %v1010
    %1241 = vmatpush1.bf16.msra.mxu0 %v1009
    %1242 = vmatprep.subr.bf16.mxu0 %v1014
    %1243 = vmatpush1.bf16.msra.mxu0 %v1013
    %1244 = vmatprep.subr.bf16.mxu0 %v1018
    %1245 = vmatpush1.bf16.msra.mxu0 %v1017
    %1246 = vmatprep.subr.bf16.mxu0 %v1022
    %1247 = vmatpush1.bf16.msra.mxu0 %v1021
    %1248 = vmatprep.subr.bf16.mxu0 %v1026
    %1249 = vmatpush1.bf16.msra.mxu0 %v1025
    %1250 = vmatprep.subr.bf16.mxu0 %v1030
    %1251 = vmatpush1.bf16.msra.mxu0 %v1029
    %1252 = vmatprep.subr.bf16.mxu0 %v1034
    %1253 = vmatpush1.bf16.msra.mxu0 %v1033
    %1254 = vmatprep.subr.bf16.mxu0 %v1038
    %1255 = vmatpush1.bf16.msra.mxu0 %v1037
    %1256 = vmatprep.subr.bf16.mxu0 %v1042
    %1257 = vmatpush1.bf16.msra.mxu0 %v1041
    %1258 = vmatprep.subr.bf16.mxu0 %v1046
    %1259 = vmatpush1.bf16.msra.mxu0 %v1045
    %1260 = vmatprep.mubr.bf16.mxu0 %v382
    %1261 = vmatmul.mubr.bf16.gmra.mrb[0].mxu0 %v381
    %v1262 = vpop.f32.mrb[0].mxu0
    %v1263 = vadd.f32 %v1212, %v1262
    %v1264 = vpop.f32.mrb[0].mxu0
    %v1265 = vadd.f32 %v1214, %v1264
    %v1266 = vpop.f32.mrb[0].mxu0
    %v1267 = vadd.f32 %v1216, %v1266
    %v1268 = vpop.f32.mrb[0].mxu0
    %v1269 = vadd.f32 %v1218, %v1268
    %1270 = vmatprep.mubr.bf16.mxu0 %v386
    %1271 = vmatmul.mubr.bf16.gmra.mrb[0].mxu0 %v385
    %v1272 = vpop.f32.mrb[0].mxu0
    %v1273 = vadd.f32 %v1222, %v1272
    %v1274 = vpop.f32.mrb[0].mxu0
    %v1275 = vadd.f32 %v1224, %v1274
    %v1276 = vpop.f32.mrb[0].mxu0
    %v1277 = vpop.f32.mrb[0].mxu0
    %1278 = vdwg.mxu0
    %1279 = vmatprep.subr.bf16.mxu0 %v924
    %1280 = vmatpush1.bf16.msra.mxu0 %v923
    %1281 = vmatprep.subr.bf16.mxu0 %v928
    %1282 = vmatpush1.bf16.msra.mxu0 %v927
    %1283 = vmatprep.subr.bf16.mxu0 %v932
    %1284 = vmatpush1.bf16.msra.mxu0 %v931
    %1285 = vmatprep.subr.bf16.mxu0 %v936
    %1286 = vmatpush1.bf16.msra.mxu0 %v935
    %1287 = vmatprep.subr.bf16.mxu0 %v940
    %1288 = vmatpush1.bf16.msra.mxu0 %v939
    %1289 = vmatprep.subr.bf16.mxu0 %v944
    %1290 = vmatpush1.bf16.msra.mxu0 %v943
    %1291 = vmatprep.subr.bf16.mxu0 %v948
    %1292 = vmatpush1.bf16.msra.mxu0 %v947
    %1293 = vmatprep.subr.bf16.mxu0 %v952
    %1294 = vmatpush1.bf16.msra.mxu0 %v951
    %1295 = vmatprep.subr.bf16.mxu0 %v956
    %1296 = vmatpush1.bf16.msra.mxu0 %v955
    %1297 = vmatprep.subr.bf16.mxu0 %v960
    %1298 = vmatpush1.bf16.msra.mxu0 %v959
    %1299 = vmatprep.subr.bf16.mxu0 %v964
    %1300 = vmatpush1.bf16.msra.mxu0 %v963
    %1301 = vmatprep.subr.bf16.mxu0 %v968
    %1302 = vmatpush1.bf16.msra.mxu0 %v967
    %1303 = vmatprep.subr.bf16.mxu0 %v972
    %1304 = vmatpush1.bf16.msra.mxu0 %v971
    %1305 = vmatprep.subr.bf16.mxu0 %v976
    %1306 = vmatpush1.bf16.msra.mxu0 %v975
    %1307 = vmatprep.subr.bf16.mxu0 %v980
    %1308 = vmatpush1.bf16.msra.mxu0 %v979
    %1309 = vmatprep.subr.bf16.mxu0 %v984
    %1310 = vmatpush1.bf16.msra.mxu0 %v983
    %1311 = vmatprep.mubr.bf16.mxu0 %v380
    %1312 = vmatmul.mubr.bf16.gmra.mrb[0].mxu0 %v379
    %v1313 = vpop.f32.mrb[0].mxu0
    %v1314 = vadd.f32 %v528, %v1313
    %v1315 = vpop.f32.mrb[0].mxu0
    %v1316 = vadd.f32 %v532, %v1315
    %v1317 = vpop.f32.mrb[0].mxu0
    %v1318 = vadd.f32 %v528, %v1317
    %v1319 = vpop.f32.mrb[0].mxu0
    %v1320 = vadd.f32 %v532, %v1319
    %1321 = vmatprep.mubr.bf16.mxu0 %v384
    %1322 = vmatmul.mubr.bf16.gmra.mrb[0].mxu0 %v383
    %v1323 = vpop.f32.mrb[0].mxu0
    %v1324 = vadd.f32 %v528, %v1323
    %v1325 = vpop.f32.mrb[0].mxu0
    %v1326 = vadd.f32 %v532, %v1325
    %v1327 = vpop.f32.mrb[0].mxu0
    %v1328 = vpop.f32.mrb[0].mxu0
    %1329 = vdwg.mxu0
    %1330 = vmatprep.subr.bf16.mxu0 %v988
    %1331 = vmatpush1.bf16.msra.mxu0 %v987
    %1332 = vmatprep.subr.bf16.mxu0 %v992
    %1333 = vmatpush1.bf16.msra.mxu0 %v991
    %1334 = vmatprep.subr.bf16.mxu0 %v996
    %1335 = vmatpush1.bf16.msra.mxu0 %v995
    %1336 = vmatprep.subr.bf16.mxu0 %v1000
    %1337 = vmatpush1.bf16.msra.mxu0 %v999
    %1338 = vmatprep.subr.bf16.mxu0 %v1004
    %1339 = vmatpush1.bf16.msra.mxu0 %v1003
    %1340 = vmatprep.subr.bf16.mxu0 %v1008
    %1341 = vmatpush1.bf16.msra.mxu0 %v1007
    %1342 = vmatprep.subr.bf16.mxu0 %v1012
    %1343 = vmatpush1.bf16.msra.mxu0 %v1011
    %1344 = vmatprep.subr.bf16.mxu0 %v1016
    %1345 = vmatpush1.bf16.msra.mxu0 %v1015
    %1346 = vmatprep.subr.bf16.mxu0 %v1020
    %1347 = vmatpush1.bf16.msra.mxu0 %v1019
    %1348 = vmatprep.subr.bf16.mxu0 %v1024
    %1349 = vmatpush1.bf16.msra.mxu0 %v1023
    %1350 = vmatprep.subr.bf16.mxu0 %v1028
    %1351 = vmatpush1.bf16.msra.mxu0 %v1027
    %1352 = vmatprep.subr.bf16.mxu0 %v1032
    %1353 = vmatpush1.bf16.msra.mxu0 %v1031
    %1354 = vmatprep.subr.bf16.mxu0 %v1036
    %1355 = vmatpush1.bf16.msra.mxu0 %v1035
    %1356 = vmatprep.subr.bf16.mxu0 %v1040
    %1357 = vmatpush1.bf16.msra.mxu0 %v1039
    %1358 = vmatprep.subr.bf16.mxu0 %v1044
    %1359 = vmatpush1.bf16.msra.mxu0 %v1043
    %1360 = vmatprep.subr.bf16.mxu0 %v1048
    %1361 = vmatpush1.bf16.msra.mxu0 %v1047
    %1362 = vmatprep.mubr.bf16.mxu0 %v382
    %1363 = vmatmul.mubr.bf16.gmra.mrb[0].mxu0 %v381
    %v1364 = vpop.f32.mrb[0].mxu0
    %v1365 = vadd.f32 %v1314, %v1364
    %v1366 = vpop.f32.mrb[0].mxu0
    %v1367 = vadd.f32 %v1316, %v1366
    %v1368 = vpop.f32.mrb[0].mxu0
    %v1369 = vadd.f32 %v1318, %v1368
    %v1370 = vpop.f32.mrb[0].mxu0
    %v1371 = vadd.f32 %v1320, %v1370
    %1372 = vmatprep.mubr.bf16.mxu0 %v386
    %1373 = vmatmul.mubr.bf16.gmra.mrb[0].mxu0 %v385
    %v1374 = vpop.f32.mrb[0].mxu0
    %v1375 = vadd.f32 %v1324, %v1374
    %v1376 = vpop.f32.mrb[0].mxu0
    %v1377 = vadd.f32 %v1326, %v1376
    %v1378 = vpop.f32.mrb[0].mxu0
    %v1379 = vpop.f32.mrb[0].mxu0
    %1380 = vdwg.mxu0
    %v1381 = vmax.f32 %v1263, 0.0
    %v1382 = vmax.f32 %v1265, 0.0
    %v1383 = vmax.f32 %v1365, 0.0
    %v1384 = vmax.f32 %v1367, 0.0
    %v1385 = vmax.f32 %v1267, 0.0
    %v1386 = vmax.f32 %v1269, 0.0
    %v1387 = vmax.f32 %v1369, 0.0
    %v1388 = vmax.f32 %v1371, 0.0
    %v1389 = vmax.f32 %v1273, 0.0
    %v1390 = vmax.f32 %v1275, 0.0
    %v1391 = vmax.f32 %v1375, 0.0
    %v1392 = vmax.f32 %v1377, 0.0
    %v1393 = vpack.c.bf16 %v1385, %v1381
    %v1394 = vpack.c.bf16 %v1386, %v1382
    %v1395 = vpack.c.bf16 %v1387, %v1383
    %v1396 = vpack.c.bf16 %v1388, %v1384
    %v1397 = vpack.c.bf16 %v1389, %v1389
    %v1398 = vpack.c.bf16 %v1390, %v1390
    %v1399 = vpack.c.bf16 %v1391, %v1391
    %v1400 = vpack.c.bf16 %v1392, %v1392
    %v1401 = vld [vmem:[#allocation9] sm:$0xff]
    %v1402 = vld [vmem:[#allocation9 + $0x8] sm:$0xff]
    %v1403 = vld [vmem:[#allocation9 + $0x10] sm:$0xff]
    %v1404 = vld [vmem:[#allocation9 + $0x18] sm:$0xff]
    %v1405 = vld [vmem:[#allocation9 + $0x20] sm:$0xff]
    %v1406 = vld [vmem:[#allocation9 + $0x28] sm:$0xff]
    %v1407 = vld [vmem:[#allocation9 + $0x30] sm:$0xff]
    %v1408 = vld [vmem:[#allocation9 + $0x38] sm:$0xff]
    %v1409 = vld [vmem:[#allocation9 + $0x40] sm:$0xff]
    %v1410 = vld [vmem:[#allocation9 + $0x48] sm:$0xff]
    %v1411 = vld [vmem:[#allocation9 + $0x50] sm:$0xff]
    %v1412 = vld [vmem:[#allocation9 + $0x58] sm:$0xff]
    %v1413 = vld [vmem:[#allocation9 + $0x60] sm:$0xff]
    %v1414 = vld [vmem:[#allocation9 + $0x68] sm:$0xff]
    %v1415 = vld [vmem:[#allocation9 + $0x70] sm:$0xff]
    %v1416 = vld [vmem:[#allocation9 + $0x78] sm:$0xff]
    %v1417 = vld [vmem:[#allocation9 + $0x80] sm:$0xff]
    %v1418 = vld [vmem:[#allocation9 + $0x88] sm:$0xff]
    %v1419 = vld [vmem:[#allocation9 + $0x90] sm:$0xff]
    %v1420 = vld [vmem:[#allocation9 + $0x98] sm:$0xff]
    %v1421 = vld [vmem:[#allocation9 + $0xa0] sm:$0xff]
    %v1422 = vld [vmem:[#allocation9 + $0xa8] sm:$0xff]
    %v1423 = vld [vmem:[#allocation9 + $0xb0] sm:$0xff]
    %v1424 = vld [vmem:[#allocation9 + $0xb8] sm:$0xff]
    %v1425 = vld [vmem:[#allocation9 + $0xc0] sm:$0xff]
    %v1426 = vld [vmem:[#allocation9 + $0xc8] sm:$0xff]
    %v1427 = vld [vmem:[#allocation9 + $0xd0] sm:$0xff]
    %v1428 = vld [vmem:[#allocation9 + $0xd8] sm:$0xff]
    %v1429 = vld [vmem:[#allocation9 + $0xe0] sm:$0xff]
    %v1430 = vld [vmem:[#allocation9 + $0xe8] sm:$0xff]
    %v1431 = vld [vmem:[#allocation9 + $0xf0] sm:$0xff]
    %v1432 = vld [vmem:[#allocation9 + $0xf8] sm:$0xff]
    %v1433 = vld [vmem:[#allocation9 + $0x100] sm:$0xff]
    %v1434 = vld [vmem:[#allocation9 + $0x108] sm:$0xff]
    %v1435 = vld [vmem:[#allocation9 + $0x110] sm:$0xff]
    %v1436 = vld [vmem:[#allocation9 + $0x118] sm:$0xff]
    %v1437 = vld [vmem:[#allocation9 + $0x120] sm:$0xff]
    %v1438 = vld [vmem:[#allocation9 + $0x128] sm:$0xff]
    %v1439 = vld [vmem:[#allocation9 + $0x130] sm:$0xff]
    %v1440 = vld [vmem:[#allocation9 + $0x138] sm:$0xff]
    %v1441 = vld [vmem:[#allocation9 + $0x140] sm:$0xff]
    %v1442 = vld [vmem:[#allocation9 + $0x148] sm:$0xff]
    %v1443 = vld [vmem:[#allocation9 + $0x150] sm:$0xff]
    %v1444 = vld [vmem:[#allocation9 + $0x158] sm:$0xff]
    %v1445 = vld [vmem:[#allocation9 + $0x160] sm:$0xff]
    %v1446 = vld [vmem:[#allocation9 + $0x168] sm:$0xff]
    %v1447 = vld [vmem:[#allocation9 + $0x170] sm:$0xff]
    %v1448 = vld [vmem:[#allocation9 + $0x178] sm:$0xff]
    %v1449 = vld [vmem:[#allocation9 + $0x180] sm:$0xff]
    %v1450 = vld [vmem:[#allocation9 + $0x188] sm:$0xff]
    %v1451 = vld [vmem:[#allocation9 + $0x190] sm:$0xff]
    %v1452 = vld [vmem:[#allocation9 + $0x198] sm:$0xff]
    %v1453 = vld [vmem:[#allocation9 + $0x1a0] sm:$0xff]
    %v1454 = vld [vmem:[#allocation9 + $0x1a8] sm:$0xff]
    %v1455 = vld [vmem:[#allocation9 + $0x1b0] sm:$0xff]
    %v1456 = vld [vmem:[#allocation9 + $0x1b8] sm:$0xff]
    %v1457 = vld [vmem:[#allocation9 + $0x1c0] sm:$0xff]
    %v1458 = vld [vmem:[#allocation9 + $0x1c8] sm:$0xff]
    %v1459 = vld [vmem:[#allocation9 + $0x1d0] sm:$0xff]
    %v1460 = vld [vmem:[#allocation9 + $0x1d8] sm:$0xff]
    %v1461 = vld [vmem:[#allocation9 + $0x1e0] sm:$0xff]
    %v1462 = vld [vmem:[#allocation9 + $0x1e8] sm:$0xff]
    %v1463 = vld [vmem:[#allocation9 + $0x1f0] sm:$0xff]
    %v1464 = vld [vmem:[#allocation9 + $0x1f8] sm:$0xff]
    %v1465 = vld [vmem:[#allocation9 + $0x200] sm:$0xff]
    %v1466 = vld [vmem:[#allocation9 + $0x208] sm:$0xff]
    %v1467 = vld [vmem:[#allocation9 + $0x210] sm:$0xff]
    %v1468 = vld [vmem:[#allocation9 + $0x218] sm:$0xff]
    %v1469 = vld [vmem:[#allocation9 + $0x220] sm:$0xff]
    %v1470 = vld [vmem:[#allocation9 + $0x228] sm:$0xff]
    %v1471 = vld [vmem:[#allocation9 + $0x230] sm:$0xff]
    %v1472 = vld [vmem:[#allocation9 + $0x238] sm:$0xff]
    %v1473 = vld [vmem:[#allocation9 + $0x240] sm:$0xff]
    %v1474 = vld [vmem:[#allocation9 + $0x248] sm:$0xff]
    %v1475 = vld [vmem:[#allocation9 + $0x250] sm:$0xff]
    %v1476 = vld [vmem:[#allocation9 + $0x258] sm:$0xff]
    %v1477 = vld [vmem:[#allocation9 + $0x260] sm:$0xff]
    %v1478 = vld [vmem:[#allocation9 + $0x268] sm:$0xff]
    %v1479 = vld [vmem:[#allocation9 + $0x270] sm:$0xff]
    %v1480 = vld [vmem:[#allocation9 + $0x278] sm:$0xff]
    %v1481 = vld [vmem:[#allocation9 + $0x280] sm:$0xff]
    %v1482 = vld [vmem:[#allocation9 + $0x288] sm:$0xff]
    %v1483 = vld [vmem:[#allocation9 + $0x290] sm:$0xff]
    %v1484 = vld [vmem:[#allocation9 + $0x298] sm:$0xff]
    %v1485 = vld [vmem:[#allocation9 + $0x2a0] sm:$0xff]
    %v1486 = vld [vmem:[#allocation9 + $0x2a8] sm:$0xff]
    %v1487 = vld [vmem:[#allocation9 + $0x2b0] sm:$0xff]
    %v1488 = vld [vmem:[#allocation9 + $0x2b8] sm:$0xff]
    %v1489 = vld [vmem:[#allocation9 + $0x2c0] sm:$0xff]
    %v1490 = vld [vmem:[#allocation9 + $0x2c8] sm:$0xff]
    %v1491 = vld [vmem:[#allocation9 + $0x2d0] sm:$0xff]
    %v1492 = vld [vmem:[#allocation9 + $0x2d8] sm:$0xff]
    %v1493 = vld [vmem:[#allocation9 + $0x2e0] sm:$0xff]
    %v1494 = vld [vmem:[#allocation9 + $0x2e8] sm:$0xff]
    %v1495 = vld [vmem:[#allocation9 + $0x2f0] sm:$0xff]
    %v1496 = vld [vmem:[#allocation9 + $0x2f8] sm:$0xff]
    %v1497 = vld [vmem:[#allocation9 + $0x300] sm:$0xff]
    %v1498 = vld [vmem:[#allocation9 + $0x308] sm:$0xff]
    %v1499 = vld [vmem:[#allocation9 + $0x310] sm:$0xff]
    %v1500 = vld [vmem:[#allocation9 + $0x318] sm:$0xff]
    %v1501 = vld [vmem:[#allocation9 + $0x320] sm:$0xff]
    %v1502 = vld [vmem:[#allocation9 + $0x328] sm:$0xff]
    %v1503 = vld [vmem:[#allocation9 + $0x330] sm:$0xff]
    %v1504 = vld [vmem:[#allocation9 + $0x338] sm:$0xff]
    %v1505 = vld [vmem:[#allocation9 + $0x340] sm:$0xff]
    %v1506 = vld [vmem:[#allocation9 + $0x348] sm:$0xff]
    %v1507 = vld [vmem:[#allocation9 + $0x350] sm:$0xff]
    %v1508 = vld [vmem:[#allocation9 + $0x358] sm:$0xff]
    %v1509 = vld [vmem:[#allocation9 + $0x360] sm:$0xff]
    %v1510 = vld [vmem:[#allocation9 + $0x368] sm:$0xff]
    %v1511 = vld [vmem:[#allocation9 + $0x370] sm:$0xff]
    %v1512 = vld [vmem:[#allocation9 + $0x378] sm:$0xff]
    %v1513 = vld [vmem:[#allocation9 + $0x380] sm:$0xff]
    %v1514 = vld [vmem:[#allocation9 + $0x388] sm:$0xff]
    %v1515 = vld [vmem:[#allocation9 + $0x390] sm:$0xff]
    %v1516 = vld [vmem:[#allocation9 + $0x398] sm:$0xff]
    %v1517 = vld [vmem:[#allocation9 + $0x3a0] sm:$0xff]
    %v1518 = vld [vmem:[#allocation9 + $0x3a8] sm:$0xff]
    %v1519 = vld [vmem:[#allocation9 + $0x3b0] sm:$0xff]
    %v1520 = vld [vmem:[#allocation9 + $0x3b8] sm:$0xff]
    %v1521 = vld [vmem:[#allocation9 + $0x3c0] sm:$0xff]
    %v1522 = vld [vmem:[#allocation9 + $0x3c8] sm:$0xff]
    %v1523 = vld [vmem:[#allocation9 + $0x3d0] sm:$0xff]
    %v1524 = vld [vmem:[#allocation9 + $0x3d8] sm:$0xff]
    %v1525 = vld [vmem:[#allocation9 + $0x3e0] sm:$0xff]
    %v1526 = vld [vmem:[#allocation9 + $0x3e8] sm:$0xff]
    %v1527 = vld [vmem:[#allocation9 + $0x3f0] sm:$0xff]
    %v1528 = vld [vmem:[#allocation9 + $0x3f8] sm:$0xff]
    %v1529 = vld [vmem:[%s6] sm:$0xf]
    %v1531 = vlaneseq
    %v1532 = vshrl.u32 %v1531, 7
    %v1533 = vsub.s32 0, %v1532
    %v1534 = vrot.slane %v1529, %v1533
    %v1535 = vlaneseq
    %v1536 = vshrl.u32 %v1535, 7
    %v1537 = vsub.s32 1, %v1536
    %v1538 = vrot.slane %v1529, %v1537
    %v1539 = vlaneseq
    %v1540 = vshrl.u32 %v1539, 7
    %v1541 = vsub.s32 2, %v1540
    %v1542 = vrot.slane %v1529, %v1541
    %v1543 = vlaneseq
    %v1544 = vshrl.u32 %v1543, 7
    %v1545 = vsub.s32 3, %v1544
    %v1546 = vrot.slane %v1529, %v1545
    %v1679 = vunpack.c.l.b16 %v1401
    %v1680 = vunpack.c.h.b16 %v1401
    %v1681 = vunpack.c.l.b16 %v1402
    %v1682 = vunpack.c.h.b16 %v1402
    %v1683 = vunpack.c.l.b16 %v1403
    %v1684 = vunpack.c.h.b16 %v1403
    %v1685 = vunpack.c.l.b16 %v1404
    %v1686 = vunpack.c.h.b16 %v1404
    %v1687 = vunpack.c.l.b16 %v1405
    %v1688 = vunpack.c.h.b16 %v1405
    %v1689 = vunpack.c.l.b16 %v1406
    %v1690 = vunpack.c.h.b16 %v1406
    %v1691 = vunpack.c.l.b16 %v1407
    %v1692 = vunpack.c.h.b16 %v1407
    %v1693 = vunpack.c.l.b16 %v1408
    %v1694 = vunpack.c.h.b16 %v1408
    %v1695 = vunpack.c.l.b16 %v1409
    %v1696 = vunpack.c.h.b16 %v1409
    %v1697 = vunpack.c.l.b16 %v1410
    %v1698 = vunpack.c.h.b16 %v1410
    %v1699 = vunpack.c.l.b16 %v1411
    %v1700 = vunpack.c.h.b16 %v1411
    %v1701 = vunpack.c.l.b16 %v1412
    %v1702 = vunpack.c.h.b16 %v1412
    %v1703 = vunpack.c.l.b16 %v1413
    %v1704 = vunpack.c.h.b16 %v1413
    %v1705 = vunpack.c.l.b16 %v1414
    %v1706 = vunpack.c.h.b16 %v1414
    %v1707 = vunpack.c.l.b16 %v1415
    %v1708 = vunpack.c.h.b16 %v1415
    %v1709 = vunpack.c.l.b16 %v1416
    %v1710 = vunpack.c.h.b16 %v1416
    %v1711 = vunpack.c.l.b16 %v1417
    %v1712 = vunpack.c.h.b16 %v1417
    %v1713 = vunpack.c.l.b16 %v1418
    %v1714 = vunpack.c.h.b16 %v1418
    %v1715 = vunpack.c.l.b16 %v1419
    %v1716 = vunpack.c.h.b16 %v1419
    %v1717 = vunpack.c.l.b16 %v1420
    %v1718 = vunpack.c.h.b16 %v1420
    %v1719 = vunpack.c.l.b16 %v1421
    %v1720 = vunpack.c.h.b16 %v1421
    %v1721 = vunpack.c.l.b16 %v1422
    %v1722 = vunpack.c.h.b16 %v1422
    %v1723 = vunpack.c.l.b16 %v1423
    %v1724 = vunpack.c.h.b16 %v1423
    %v1725 = vunpack.c.l.b16 %v1424
    %v1726 = vunpack.c.h.b16 %v1424
    %v1727 = vunpack.c.l.b16 %v1425
    %v1728 = vunpack.c.h.b16 %v1425
    %v1729 = vunpack.c.l.b16 %v1426
    %v1730 = vunpack.c.h.b16 %v1426
    %v1731 = vunpack.c.l.b16 %v1427
    %v1732 = vunpack.c.h.b16 %v1427
    %v1733 = vunpack.c.l.b16 %v1428
    %v1734 = vunpack.c.h.b16 %v1428
    %v1735 = vunpack.c.l.b16 %v1429
    %v1736 = vunpack.c.h.b16 %v1429
    %v1737 = vunpack.c.l.b16 %v1430
    %v1738 = vunpack.c.h.b16 %v1430
    %v1739 = vunpack.c.l.b16 %v1431
    %v1740 = vunpack.c.h.b16 %v1431
    %v1741 = vunpack.c.l.b16 %v1432
    %v1742 = vunpack.c.h.b16 %v1432
    %v1743 = vunpack.c.l.b16 %v1433
    %v1744 = vunpack.c.h.b16 %v1433
    %v1745 = vunpack.c.l.b16 %v1434
    %v1746 = vunpack.c.h.b16 %v1434
    %v1747 = vunpack.c.l.b16 %v1435
    %v1748 = vunpack.c.h.b16 %v1435
    %v1749 = vunpack.c.l.b16 %v1436
    %v1750 = vunpack.c.h.b16 %v1436
    %v1751 = vunpack.c.l.b16 %v1437
    %v1752 = vunpack.c.h.b16 %v1437
    %v1753 = vunpack.c.l.b16 %v1438
    %v1754 = vunpack.c.h.b16 %v1438
    %v1755 = vunpack.c.l.b16 %v1439
    %v1756 = vunpack.c.h.b16 %v1439
    %v1757 = vunpack.c.l.b16 %v1440
    %v1758 = vunpack.c.h.b16 %v1440
    %v1759 = vunpack.c.l.b16 %v1441
    %v1760 = vunpack.c.h.b16 %v1441
    %v1761 = vunpack.c.l.b16 %v1442
    %v1762 = vunpack.c.h.b16 %v1442
    %v1763 = vunpack.c.l.b16 %v1443
    %v1764 = vunpack.c.h.b16 %v1443
    %v1765 = vunpack.c.l.b16 %v1444
    %v1766 = vunpack.c.h.b16 %v1444
    %v1767 = vunpack.c.l.b16 %v1445
    %v1768 = vunpack.c.h.b16 %v1445
    %v1769 = vunpack.c.l.b16 %v1446
    %v1770 = vunpack.c.h.b16 %v1446
    %v1771 = vunpack.c.l.b16 %v1447
    %v1772 = vunpack.c.h.b16 %v1447
    %v1773 = vunpack.c.l.b16 %v1448
    %v1774 = vunpack.c.h.b16 %v1448
    %v1775 = vunpack.c.l.b16 %v1449
    %v1776 = vunpack.c.h.b16 %v1449
    %v1777 = vunpack.c.l.b16 %v1450
    %v1778 = vunpack.c.h.b16 %v1450
    %v1779 = vunpack.c.l.b16 %v1451
    %v1780 = vunpack.c.h.b16 %v1451
    %v1781 = vunpack.c.l.b16 %v1452
    %v1782 = vunpack.c.h.b16 %v1452
    %v1783 = vunpack.c.l.b16 %v1453
    %v1784 = vunpack.c.h.b16 %v1453
    %v1785 = vunpack.c.l.b16 %v1454
    %v1786 = vunpack.c.h.b16 %v1454
    %v1787 = vunpack.c.l.b16 %v1455
    %v1788 = vunpack.c.h.b16 %v1455
    %v1789 = vunpack.c.l.b16 %v1456
    %v1790 = vunpack.c.h.b16 %v1456
    %v1791 = vunpack.c.l.b16 %v1457
    %v1792 = vunpack.c.h.b16 %v1457
    %v1793 = vunpack.c.l.b16 %v1458
    %v1794 = vunpack.c.h.b16 %v1458
    %v1795 = vunpack.c.l.b16 %v1459
    %v1796 = vunpack.c.h.b16 %v1459
    %v1797 = vunpack.c.l.b16 %v1460
    %v1798 = vunpack.c.h.b16 %v1460
    %v1799 = vunpack.c.l.b16 %v1461
    %v1800 = vunpack.c.h.b16 %v1461
    %v1801 = vunpack.c.l.b16 %v1462
    %v1802 = vunpack.c.h.b16 %v1462
    %v1803 = vunpack.c.l.b16 %v1463
    %v1804 = vunpack.c.h.b16 %v1463
    %v1805 = vunpack.c.l.b16 %v1464
    %v1806 = vunpack.c.h.b16 %v1464
    %v1807 = vunpack.c.l.b16 %v1465
    %v1808 = vunpack.c.h.b16 %v1465
    %v1809 = vunpack.c.l.b16 %v1466
    %v1810 = vunpack.c.h.b16 %v1466
    %v1811 = vunpack.c.l.b16 %v1467
    %v1812 = vunpack.c.h.b16 %v1467
    %v1813 = vunpack.c.l.b16 %v1468
    %v1814 = vunpack.c.h.b16 %v1468
    %v1815 = vunpack.c.l.b16 %v1469
    %v1816 = vunpack.c.h.b16 %v1469
    %v1817 = vunpack.c.l.b16 %v1470
    %v1818 = vunpack.c.h.b16 %v1470
    %v1819 = vunpack.c.l.b16 %v1471
    %v1820 = vunpack.c.h.b16 %v1471
    %v1821 = vunpack.c.l.b16 %v1472
    %v1822 = vunpack.c.h.b16 %v1472
    %v1823 = vunpack.c.l.b16 %v1473
    %v1824 = vunpack.c.h.b16 %v1473
    %v1825 = vunpack.c.l.b16 %v1474
    %v1826 = vunpack.c.h.b16 %v1474
    %v1827 = vunpack.c.l.b16 %v1475
    %v1828 = vunpack.c.h.b16 %v1475
    %v1829 = vunpack.c.l.b16 %v1476
    %v1830 = vunpack.c.h.b16 %v1476
    %v1831 = vunpack.c.l.b16 %v1477
    %v1832 = vunpack.c.h.b16 %v1477
    %v1833 = vunpack.c.l.b16 %v1478
    %v1834 = vunpack.c.h.b16 %v1478
    %v1835 = vunpack.c.l.b16 %v1479
    %v1836 = vunpack.c.h.b16 %v1479
    %v1837 = vunpack.c.l.b16 %v1480
    %v1838 = vunpack.c.h.b16 %v1480
    %v1839 = vunpack.c.l.b16 %v1481
    %v1840 = vunpack.c.h.b16 %v1481
    %v1841 = vunpack.c.l.b16 %v1482
    %v1842 = vunpack.c.h.b16 %v1482
    %v1843 = vunpack.c.l.b16 %v1483
    %v1844 = vunpack.c.h.b16 %v1483
    %v1845 = vunpack.c.l.b16 %v1484
    %v1846 = vunpack.c.h.b16 %v1484
    %v1847 = vunpack.c.l.b16 %v1485
    %v1848 = vunpack.c.h.b16 %v1485
    %v1849 = vunpack.c.l.b16 %v1486
    %v1850 = vunpack.c.h.b16 %v1486
    %v1851 = vunpack.c.l.b16 %v1487
    %v1852 = vunpack.c.h.b16 %v1487
    %v1853 = vunpack.c.l.b16 %v1488
    %v1854 = vunpack.c.h.b16 %v1488
    %v1855 = vunpack.c.l.b16 %v1489
    %v1856 = vunpack.c.h.b16 %v1489
    %v1857 = vunpack.c.l.b16 %v1490
    %v1858 = vunpack.c.h.b16 %v1490
    %v1859 = vunpack.c.l.b16 %v1491
    %v1860 = vunpack.c.h.b16 %v1491
    %v1861 = vunpack.c.l.b16 %v1492
    %v1862 = vunpack.c.h.b16 %v1492
    %v1863 = vunpack.c.l.b16 %v1493
    %v1864 = vunpack.c.h.b16 %v1493
    %v1865 = vunpack.c.l.b16 %v1494
    %v1866 = vunpack.c.h.b16 %v1494
    %v1867 = vunpack.c.l.b16 %v1495
    %v1868 = vunpack.c.h.b16 %v1495
    %v1869 = vunpack.c.l.b16 %v1496
    %v1870 = vunpack.c.h.b16 %v1496
    %v1871 = vunpack.c.l.b16 %v1497
    %v1872 = vunpack.c.h.b16 %v1497
    %v1873 = vunpack.c.l.b16 %v1498
    %v1874 = vunpack.c.h.b16 %v1498
    %v1875 = vunpack.c.l.b16 %v1499
    %v1876 = vunpack.c.h.b16 %v1499
    %v1877 = vunpack.c.l.b16 %v1500
    %v1878 = vunpack.c.h.b16 %v1500
    %v1879 = vunpack.c.l.b16 %v1501
    %v1880 = vunpack.c.h.b16 %v1501
    %v1881 = vunpack.c.l.b16 %v1502
    %v1882 = vunpack.c.h.b16 %v1502
    %v1883 = vunpack.c.l.b16 %v1503
    %v1884 = vunpack.c.h.b16 %v1503
    %v1885 = vunpack.c.l.b16 %v1504
    %v1886 = vunpack.c.h.b16 %v1504
    %v1887 = vunpack.c.l.b16 %v1505
    %v1888 = vunpack.c.h.b16 %v1505
    %v1889 = vunpack.c.l.b16 %v1506
    %v1890 = vunpack.c.h.b16 %v1506
    %v1891 = vunpack.c.l.b16 %v1507
    %v1892 = vunpack.c.h.b16 %v1507
    %v1893 = vunpack.c.l.b16 %v1508
    %v1894 = vunpack.c.h.b16 %v1508
    %v1895 = vunpack.c.l.b16 %v1509
    %v1896 = vunpack.c.h.b16 %v1509
    %v1897 = vunpack.c.l.b16 %v1510
    %v1898 = vunpack.c.h.b16 %v1510
    %v1899 = vunpack.c.l.b16 %v1511
    %v1900 = vunpack.c.h.b16 %v1511
    %v1901 = vunpack.c.l.b16 %v1512
    %v1902 = vunpack.c.h.b16 %v1512
    %v1903 = vunpack.c.l.b16 %v1513
    %v1904 = vunpack.c.h.b16 %v1513
    %v1905 = vunpack.c.l.b16 %v1514
    %v1906 = vunpack.c.h.b16 %v1514
    %v1907 = vunpack.c.l.b16 %v1515
    %v1908 = vunpack.c.h.b16 %v1515
    %v1909 = vunpack.c.l.b16 %v1516
    %v1910 = vunpack.c.h.b16 %v1516
    %v1911 = vunpack.c.l.b16 %v1517
    %v1912 = vunpack.c.h.b16 %v1517
    %v1913 = vunpack.c.l.b16 %v1518
    %v1914 = vunpack.c.h.b16 %v1518
    %v1915 = vunpack.c.l.b16 %v1519
    %v1916 = vunpack.c.h.b16 %v1519
    %v1917 = vunpack.c.l.b16 %v1520
    %v1918 = vunpack.c.h.b16 %v1520
    %v1919 = vunpack.c.l.b16 %v1521
    %v1920 = vunpack.c.h.b16 %v1521
    %v1921 = vunpack.c.l.b16 %v1522
    %v1922 = vunpack.c.h.b16 %v1522
    %v1923 = vunpack.c.l.b16 %v1523
    %v1924 = vunpack.c.h.b16 %v1523
    %v1925 = vunpack.c.l.b16 %v1524
    %v1926 = vunpack.c.h.b16 %v1524
    %v1927 = vunpack.c.l.b16 %v1525
    %v1928 = vunpack.c.h.b16 %v1525
    %v1929 = vunpack.c.l.b16 %v1526
    %v1930 = vunpack.c.h.b16 %v1526
    %v1931 = vunpack.c.l.b16 %v1527
    %v1932 = vunpack.c.h.b16 %v1527
    %v1933 = vunpack.c.l.b16 %v1528
    %v1934 = vunpack.c.h.b16 %v1528
    %v1935 = vpack.c.b16 %v1683, %v1679
    %v1936 = vpack.c.b16 %v1684, %v1680
    %v1937 = vpack.c.b16 %v1685, %v1681
    %v1938 = vpack.c.b16 %v1686, %v1682
    %v1939 = vpack.c.b16 %v1691, %v1687
    %v1940 = vpack.c.b16 %v1692, %v1688
    %v1941 = vpack.c.b16 %v1693, %v1689
    %v1942 = vpack.c.b16 %v1694, %v1690
    %v1943 = vpack.c.b16 %v1699, %v1695
    %v1944 = vpack.c.b16 %v1700, %v1696
    %v1945 = vpack.c.b16 %v1701, %v1697
    %v1946 = vpack.c.b16 %v1702, %v1698
    %v1947 = vpack.c.b16 %v1707, %v1703
    %v1948 = vpack.c.b16 %v1708, %v1704
    %v1949 = vpack.c.b16 %v1709, %v1705
    %v1950 = vpack.c.b16 %v1710, %v1706
    %v1951 = vpack.c.b16 %v1715, %v1711
    %v1952 = vpack.c.b16 %v1716, %v1712
    %v1953 = vpack.c.b16 %v1717, %v1713
    %v1954 = vpack.c.b16 %v1718, %v1714
    %v1955 = vpack.c.b16 %v1723, %v1719
    %v1956 = vpack.c.b16 %v1724, %v1720
    %v1957 = vpack.c.b16 %v1725, %v1721
    %v1958 = vpack.c.b16 %v1726, %v1722
    %v1959 = vpack.c.b16 %v1731, %v1727
    %v1960 = vpack.c.b16 %v1732, %v1728
    %v1961 = vpack.c.b16 %v1733, %v1729
    %v1962 = vpack.c.b16 %v1734, %v1730
    %v1963 = vpack.c.b16 %v1739, %v1735
    %v1964 = vpack.c.b16 %v1740, %v1736
    %v1965 = vpack.c.b16 %v1741, %v1737
    %v1966 = vpack.c.b16 %v1742, %v1738
    %v1967 = vpack.c.b16 %v1747, %v1743
    %v1968 = vpack.c.b16 %v1748, %v1744
    %v1969 = vpack.c.b16 %v1749, %v1745
    %v1970 = vpack.c.b16 %v1750, %v1746
    %v1971 = vpack.c.b16 %v1755, %v1751
    %v1972 = vpack.c.b16 %v1756, %v1752
    %v1973 = vpack.c.b16 %v1757, %v1753
    %v1974 = vpack.c.b16 %v1758, %v1754
    %v1975 = vpack.c.b16 %v1763, %v1759
    %v1976 = vpack.c.b16 %v1764, %v1760
    %v1977 = vpack.c.b16 %v1765, %v1761
    %v1978 = vpack.c.b16 %v1766, %v1762
    %v1979 = vpack.c.b16 %v1771, %v1767
    %v1980 = vpack.c.b16 %v1772, %v1768
    %v1981 = vpack.c.b16 %v1773, %v1769
    %v1982 = vpack.c.b16 %v1774, %v1770
    %v1983 = vpack.c.b16 %v1779, %v1775
    %v1984 = vpack.c.b16 %v1780, %v1776
    %v1985 = vpack.c.b16 %v1781, %v1777
    %v1986 = vpack.c.b16 %v1782, %v1778
    %v1987 = vpack.c.b16 %v1787, %v1783
    %v1988 = vpack.c.b16 %v1788, %v1784
    %v1989 = vpack.c.b16 %v1789, %v1785
    %v1990 = vpack.c.b16 %v1790, %v1786
    %v1991 = vpack.c.b16 %v1795, %v1791
    %v1992 = vpack.c.b16 %v1796, %v1792
    %v1993 = vpack.c.b16 %v1797, %v1793
    %v1994 = vpack.c.b16 %v1798, %v1794
    %v1995 = vpack.c.b16 %v1803, %v1799
    %v1996 = vpack.c.b16 %v1804, %v1800
    %v1997 = vpack.c.b16 %v1805, %v1801
    %v1998 = vpack.c.b16 %v1806, %v1802
    %v1999 = vpack.c.b16 %v1811, %v1807
    %v2000 = vpack.c.b16 %v1812, %v1808
    %v2001 = vpack.c.b16 %v1813, %v1809
    %v2002 = vpack.c.b16 %v1814, %v1810
    %v2003 = vpack.c.b16 %v1819, %v1815
    %v2004 = vpack.c.b16 %v1820, %v1816
    %v2005 = vpack.c.b16 %v1821, %v1817
    %v2006 = vpack.c.b16 %v1822, %v1818
    %v2007 = vpack.c.b16 %v1827, %v1823
    %v2008 = vpack.c.b16 %v1828, %v1824
    %v2009 = vpack.c.b16 %v1829, %v1825
    %v2010 = vpack.c.b16 %v1830, %v1826
    %v2011 = vpack.c.b16 %v1835, %v1831
    %v2012 = vpack.c.b16 %v1836, %v1832
    %v2013 = vpack.c.b16 %v1837, %v1833
    %v2014 = vpack.c.b16 %v1838, %v1834
    %v2015 = vpack.c.b16 %v1843, %v1839
    %v2016 = vpack.c.b16 %v1844, %v1840
    %v2017 = vpack.c.b16 %v1845, %v1841
    %v2018 = vpack.c.b16 %v1846, %v1842
    %v2019 = vpack.c.b16 %v1851, %v1847
    %v2020 = vpack.c.b16 %v1852, %v1848
    %v2021 = vpack.c.b16 %v1853, %v1849
    %v2022 = vpack.c.b16 %v1854, %v1850
    %v2023 = vpack.c.b16 %v1859, %v1855
    %v2024 = vpack.c.b16 %v1860, %v1856
    %v2025 = vpack.c.b16 %v1861, %v1857
    %v2026 = vpack.c.b16 %v1862, %v1858
    %v2027 = vpack.c.b16 %v1867, %v1863
    %v2028 = vpack.c.b16 %v1868, %v1864
    %v2029 = vpack.c.b16 %v1869, %v1865
    %v2030 = vpack.c.b16 %v1870, %v1866
    %v2031 = vpack.c.b16 %v1875, %v1871
    %v2032 = vpack.c.b16 %v1876, %v1872
    %v2033 = vpack.c.b16 %v1877, %v1873
    %v2034 = vpack.c.b16 %v1878, %v1874
    %v2035 = vpack.c.b16 %v1883, %v1879
    %v2036 = vpack.c.b16 %v1884, %v1880
    %v2037 = vpack.c.b16 %v1885, %v1881
    %v2038 = vpack.c.b16 %v1886, %v1882
    %v2039 = vpack.c.b16 %v1891, %v1887
    %v2040 = vpack.c.b16 %v1892, %v1888
    %v2041 = vpack.c.b16 %v1893, %v1889
    %v2042 = vpack.c.b16 %v1894, %v1890
    %v2043 = vpack.c.b16 %v1899, %v1895
    %v2044 = vpack.c.b16 %v1900, %v1896
    %v2045 = vpack.c.b16 %v1901, %v1897
    %v2046 = vpack.c.b16 %v1902, %v1898
    %v2047 = vpack.c.b16 %v1907, %v1903
    %v2048 = vpack.c.b16 %v1908, %v1904
    %v2049 = vpack.c.b16 %v1909, %v1905
    %v2050 = vpack.c.b16 %v1910, %v1906
    %v2051 = vpack.c.b16 %v1915, %v1911
    %v2052 = vpack.c.b16 %v1916, %v1912
    %v2053 = vpack.c.b16 %v1917, %v1913
    %v2054 = vpack.c.b16 %v1918, %v1914
    %v2055 = vpack.c.b16 %v1923, %v1919
    %v2056 = vpack.c.b16 %v1924, %v1920
    %v2057 = vpack.c.b16 %v1925, %v1921
    %v2058 = vpack.c.b16 %v1926, %v1922
    %v2059 = vpack.c.b16 %v1931, %v1927
    %v2060 = vpack.c.b16 %v1932, %v1928
    %v2061 = vpack.c.b16 %v1933, %v1929
    %v2062 = vpack.c.b16 %v1934, %v1930
    %2191 = vmatprep.subr.bf16.mxu0 %v1936
    %2192 = vmatpush1.bf16.msra.mxu0 %v1935
    %2193 = vmatprep.subr.bf16.mxu0 %v1940
    %2194 = vmatpush1.bf16.msra.mxu0 %v1939
    %2195 = vmatprep.subr.bf16.mxu0 %v1944
    %2196 = vmatpush1.bf16.msra.mxu0 %v1943
    %2197 = vmatprep.subr.bf16.mxu0 %v1948
    %2198 = vmatpush1.bf16.msra.mxu0 %v1947
    %2199 = vmatprep.subr.bf16.mxu0 %v1952
    %2200 = vmatpush1.bf16.msra.mxu0 %v1951
    %2201 = vmatprep.subr.bf16.mxu0 %v1956
    %2202 = vmatpush1.bf16.msra.mxu0 %v1955
    %2203 = vmatprep.subr.bf16.mxu0 %v1960
    %2204 = vmatpush1.bf16.msra.mxu0 %v1959
    %2205 = vmatprep.subr.bf16.mxu0 %v1964
    %2206 = vmatpush1.bf16.msra.mxu0 %v1963
    %2207 = vmatprep.subr.bf16.mxu0 %v1968
    %2208 = vmatpush1.bf16.msra.mxu0 %v1967
    %2209 = vmatprep.subr.bf16.mxu0 %v1972
    %2210 = vmatpush1.bf16.msra.mxu0 %v1971
    %2211 = vmatprep.subr.bf16.mxu0 %v1976
    %2212 = vmatpush1.bf16.msra.mxu0 %v1975
    %2213 = vmatprep.subr.bf16.mxu0 %v1980
    %2214 = vmatpush1.bf16.msra.mxu0 %v1979
    %2215 = vmatprep.subr.bf16.mxu0 %v1984
    %2216 = vmatpush1.bf16.msra.mxu0 %v1983
    %2217 = vmatprep.subr.bf16.mxu0 %v1988
    %2218 = vmatpush1.bf16.msra.mxu0 %v1987
    %2219 = vmatprep.subr.bf16.mxu0 %v1992
    %2220 = vmatpush1.bf16.msra.mxu0 %v1991
    %2221 = vmatprep.subr.bf16.mxu0 %v1996
    %2222 = vmatpush1.bf16.msra.mxu0 %v1995
    %2223 = vmatprep.mubr.bf16.mxu0 %v1394
    %2224 = vmatmul.mubr.bf16.gmra.mrb[0].mxu0 %v1393
    %v2225 = vpop.f32.mrb[0].mxu0
    %v2226 = vadd.f32 %v1534, %v2225
    %v2227 = vpop.f32.mrb[0].mxu0
    %v2228 = vadd.f32 %v1538, %v2227
    %v2229 = vpop.f32.mrb[0].mxu0
    %v2230 = vadd.f32 %v1534, %v2229
    %v2231 = vpop.f32.mrb[0].mxu0
    %v2232 = vadd.f32 %v1538, %v2231
    %2233 = vmatprep.mubr.bf16.mxu0 %v1398
    %2234 = vmatmul.mubr.bf16.gmra.mrb[0].mxu0 %v1397
    %v2235 = vpop.f32.mrb[0].mxu0
    %v2236 = vadd.f32 %v1534, %v2235
    %v2237 = vpop.f32.mrb[0].mxu0
    %v2238 = vadd.f32 %v1538, %v2237
    %v2239 = vpop.f32.mrb[0].mxu0
    %v2240 = vpop.f32.mrb[0].mxu0
    %2241 = vdwg.mxu0
    %2242 = vmatprep.subr.bf16.mxu0 %v2000
    %2243 = vmatpush1.bf16.msra.mxu0 %v1999
    %2244 = vmatprep.subr.bf16.mxu0 %v2004
    %2245 = vmatpush1.bf16.msra.mxu0 %v2003
    %2246 = vmatprep.subr.bf16.mxu0 %v2008
    %2247 = vmatpush1.bf16.msra.mxu0 %v2007
    %2248 = vmatprep.subr.bf16.mxu0 %v2012
    %2249 = vmatpush1.bf16.msra.mxu0 %v2011
    %2250 = vmatprep.subr.bf16.mxu0 %v2016
    %2251 = vmatpush1.bf16.msra.mxu0 %v2015
    %2252 = vmatprep.subr.bf16.mxu0 %v2020
    %2253 = vmatpush1.bf16.msra.mxu0 %v2019
    %2254 = vmatprep.subr.bf16.mxu0 %v2024
    %2255 = vmatpush1.bf16.msra.mxu0 %v2023
    %2256 = vmatprep.subr.bf16.mxu0 %v2028
    %2257 = vmatpush1.bf16.msra.mxu0 %v2027
    %2258 = vmatprep.subr.bf16.mxu0 %v2032
    %2259 = vmatpush1.bf16.msra.mxu0 %v2031
    %2260 = vmatprep.subr.bf16.mxu0 %v2036
    %2261 = vmatpush1.bf16.msra.mxu0 %v2035
    %2262 = vmatprep.subr.bf16.mxu0 %v2040
    %2263 = vmatpush1.bf16.msra.mxu0 %v2039
    %2264 = vmatprep.subr.bf16.mxu0 %v2044
    %2265 = vmatpush1.bf16.msra.mxu0 %v2043
    %2266 = vmatprep.subr.bf16.mxu0 %v2048
    %2267 = vmatpush1.bf16.msra.mxu0 %v2047
    %2268 = vmatprep.subr.bf16.mxu0 %v2052
    %2269 = vmatpush1.bf16.msra.mxu0 %v2051
    %2270 = vmatprep.subr.bf16.mxu0 %v2056
    %2271 = vmatpush1.bf16.msra.mxu0 %v2055
    %2272 = vmatprep.subr.bf16.mxu0 %v2060
    %2273 = vmatpush1.bf16.msra.mxu0 %v2059
    %2274 = vmatprep.mubr.bf16.mxu0 %v1396
    %2275 = vmatmul.mubr.bf16.gmra.mrb[0].mxu0 %v1395
    %v2276 = vpop.f32.mrb[0].mxu0
    %v2277 = vadd.f32 %v2226, %v2276
    %v2278 = vpop.f32.mrb[0].mxu0
    %v2279 = vadd.f32 %v2228, %v2278
    %v2280 = vpop.f32.mrb[0].mxu0
    %v2281 = vadd.f32 %v2230, %v2280
    %v2282 = vpop.f32.mrb[0].mxu0
    %v2283 = vadd.f32 %v2232, %v2282
    %2284 = vmatprep.mubr.bf16.mxu0 %v1400
    %2285 = vmatmul.mubr.bf16.gmra.mrb[0].mxu0 %v1399
    %v2286 = vpop.f32.mrb[0].mxu0
    %v2287 = vadd.f32 %v2236, %v2286
    %v2288 = vpop.f32.mrb[0].mxu0
    %v2289 = vadd.f32 %v2238, %v2288
    %v2290 = vpop.f32.mrb[0].mxu0
    %v2291 = vpop.f32.mrb[0].mxu0
    %2292 = vdwg.mxu0
    %2293 = vmatprep.subr.bf16.mxu0 %v1938
    %2294 = vmatpush1.bf16.msra.mxu0 %v1937
    %2295 = vmatprep.subr.bf16.mxu0 %v1942
    %2296 = vmatpush1.bf16.msra.mxu0 %v1941
    %2297 = vmatprep.subr.bf16.mxu0 %v1946
    %2298 = vmatpush1.bf16.msra.mxu0 %v1945
    %2299 = vmatprep.subr.bf16.mxu0 %v1950
    %2300 = vmatpush1.bf16.msra.mxu0 %v1949
    %2301 = vmatprep.subr.bf16.mxu0 %v1954
    %2302 = vmatpush1.bf16.msra.mxu0 %v1953
    %2303 = vmatprep.subr.bf16.mxu0 %v1958
    %2304 = vmatpush1.bf16.msra.mxu0 %v1957
    %2305 = vmatprep.subr.bf16.mxu0 %v1962
    %2306 = vmatpush1.bf16.msra.mxu0 %v1961
    %2307 = vmatprep.subr.bf16.mxu0 %v1966
    %2308 = vmatpush1.bf16.msra.mxu0 %v1965
    %2309 = vmatprep.subr.bf16.mxu0 %v1970
    %2310 = vmatpush1.bf16.msra.mxu0 %v1969
    %2311 = vmatprep.subr.bf16.mxu0 %v1974
    %2312 = vmatpush1.bf16.msra.mxu0 %v1973
    %2313 = vmatprep.subr.bf16.mxu0 %v1978
    %2314 = vmatpush1.bf16.msra.mxu0 %v1977
    %2315 = vmatprep.subr.bf16.mxu0 %v1982
    %2316 = vmatpush1.bf16.msra.mxu0 %v1981
    %2317 = vmatprep.subr.bf16.mxu0 %v1986
    %2318 = vmatpush1.bf16.msra.mxu0 %v1985
    %2319 = vmatprep.subr.bf16.mxu0 %v1990
    %2320 = vmatpush1.bf16.msra.mxu0 %v1989
    %2321 = vmatprep.subr.bf16.mxu0 %v1994
    %2322 = vmatpush1.bf16.msra.mxu0 %v1993
    %2323 = vmatprep.subr.bf16.mxu0 %v1998
    %2324 = vmatpush1.bf16.msra.mxu0 %v1997
    %2325 = vmatprep.mubr.bf16.mxu0 %v1394
    %2326 = vmatmul.mubr.bf16.gmra.mrb[0].mxu0 %v1393
    %v2327 = vpop.f32.mrb[0].mxu0
    %v2328 = vadd.f32 %v1542, %v2327
    %v2329 = vpop.f32.mrb[0].mxu0
    %v2330 = vadd.f32 %v1546, %v2329
    %v2331 = vpop.f32.mrb[0].mxu0
    %v2332 = vadd.f32 %v1542, %v2331
    %v2333 = vpop.f32.mrb[0].mxu0
    %v2334 = vadd.f32 %v1546, %v2333
    %2335 = vmatprep.mubr.bf16.mxu0 %v1398
    %2336 = vmatmul.mubr.bf16.gmra.mrb[0].mxu0 %v1397
    %v2337 = vpop.f32.mrb[0].mxu0
    %v2338 = vadd.f32 %v1542, %v2337
    %v2339 = vpop.f32.mrb[0].mxu0
    %v2340 = vadd.f32 %v1546, %v2339
    %v2341 = vpop.f32.mrb[0].mxu0
    %v2342 = vpop.f32.mrb[0].mxu0
    %2343 = vdwg.mxu0
    %2344 = vmatprep.subr.bf16.mxu0 %v2002
    %2345 = vmatpush1.bf16.msra.mxu0 %v2001
    %2346 = vmatprep.subr.bf16.mxu0 %v2006
    %2347 = vmatpush1.bf16.msra.mxu0 %v2005
    %2348 = vmatprep.subr.bf16.mxu0 %v2010
    %2349 = vmatpush1.bf16.msra.mxu0 %v2009
    %2350 = vmatprep.subr.bf16.mxu0 %v2014
    %2351 = vmatpush1.bf16.msra.mxu0 %v2013
    %2352 = vmatprep.subr.bf16.mxu0 %v2018
    %2353 = vmatpush1.bf16.msra.mxu0 %v2017
    %2354 = vmatprep.subr.bf16.mxu0 %v2022
    %2355 = vmatpush1.bf16.msra.mxu0 %v2021
    %2356 = vmatprep.subr.bf16.mxu0 %v2026
    %2357 = vmatpush1.bf16.msra.mxu0 %v2025
    %2358 = vmatprep.subr.bf16.mxu0 %v2030
    %2359 = vmatpush1.bf16.msra.mxu0 %v2029
    %2360 = vmatprep.subr.bf16.mxu0 %v2034
    %2361 = vmatpush1.bf16.msra.mxu0 %v2033
    %2362 = vmatprep.subr.bf16.mxu0 %v2038
    %2363 = vmatpush1.bf16.msra.mxu0 %v2037
    %2364 = vmatprep.subr.bf16.mxu0 %v2042
    %2365 = vmatpush1.bf16.msra.mxu0 %v2041
    %2366 = vmatprep.subr.bf16.mxu0 %v2046
    %2367 = vmatpush1.bf16.msra.mxu0 %v2045
    %2368 = vmatprep.subr.bf16.mxu0 %v2050
    %2369 = vmatpush1.bf16.msra.mxu0 %v2049
    %2370 = vmatprep.subr.bf16.mxu0 %v2054
    %2371 = vmatpush1.bf16.msra.mxu0 %v2053
    %2372 = vmatprep.subr.bf16.mxu0 %v2058
    %2373 = vmatpush1.bf16.msra.mxu0 %v2057
    %2374 = vmatprep.subr.bf16.mxu0 %v2062
    %2375 = vmatpush1.bf16.msra.mxu0 %v2061
    %2376 = vmatprep.mubr.bf16.mxu0 %v1396
    %2377 = vmatmul.mubr.bf16.gmra.mrb[0].mxu0 %v1395
    %v2378 = vpop.f32.mrb[0].mxu0
    %v2379 = vadd.f32 %v2328, %v2378
    %v2380 = vpop.f32.mrb[0].mxu0
    %v2381 = vadd.f32 %v2330, %v2380
    %v2382 = vpop.f32.mrb[0].mxu0
    %v2383 = vadd.f32 %v2332, %v2382
    %v2384 = vpop.f32.mrb[0].mxu0
    %v2385 = vadd.f32 %v2334, %v2384
    %2386 = vmatprep.mubr.bf16.mxu0 %v1400
    %2387 = vmatmul.mubr.bf16.gmra.mrb[0].mxu0 %v1399
    %v2388 = vpop.f32.mrb[0].mxu0
    %v2389 = vadd.f32 %v2338, %v2388
    %v2390 = vpop.f32.mrb[0].mxu0
    %v2391 = vadd.f32 %v2340, %v2390
    %v2392 = vpop.f32.mrb[0].mxu0
    %v2393 = vpop.f32.mrb[0].mxu0
    %2394 = vdwg.mxu0
    %v2395 = vmax.f32 %v2277, 0.0
    %v2396 = vmax.f32 %v2279, 0.0
    %v2397 = vmax.f32 %v2379, 0.0
    %v2398 = vmax.f32 %v2381, 0.0
    %v2399 = vmax.f32 %v2281, 0.0
    %v2400 = vmax.f32 %v2283, 0.0
    %v2401 = vmax.f32 %v2383, 0.0
    %v2402 = vmax.f32 %v2385, 0.0
    %v2403 = vmax.f32 %v2287, 0.0
    %v2404 = vmax.f32 %v2289, 0.0
    %v2405 = vmax.f32 %v2389, 0.0
    %v2406 = vmax.f32 %v2391, 0.0
    %v2407 = vpack.c.bf16 %v2399, %v2395
    %v2408 = vpack.c.bf16 %v2400, %v2396
    %v2409 = vpack.c.bf16 %v2401, %v2397
    %v2410 = vpack.c.bf16 %v2402, %v2398
    %v2411 = vpack.c.bf16 %v2403, %v2403
    %v2412 = vpack.c.bf16 %v2404, %v2404
    %v2413 = vpack.c.bf16 %v2405, %v2405
    %v2414 = vpack.c.bf16 %v2406, %v2406
    %v2415 = vld [vmem:[#allocation10] sm:$0xff]
    %v2416 = vld [vmem:[#allocation10 + $0x8] sm:$0xff]
    %v2417 = vld [vmem:[#allocation10 + $0x10] sm:$0xff]
    %v2418 = vld [vmem:[#allocation10 + $0x18] sm:$0xff]
    %v2419 = vld [vmem:[#allocation10 + $0x20] sm:$0xff]
    %v2420 = vld [vmem:[#allocation10 + $0x28] sm:$0xff]
    %v2421 = vld [vmem:[#allocation10 + $0x30] sm:$0xff]
    %v2422 = vld [vmem:[#allocation10 + $0x38] sm:$0xff]
    %v2423 = vld [vmem:[#allocation10 + $0x40] sm:$0xff]
    %v2424 = vld [vmem:[#allocation10 + $0x48] sm:$0xff]
    %v2425 = vld [vmem:[#allocation10 + $0x50] sm:$0xff]
    %v2426 = vld [vmem:[#allocation10 + $0x58] sm:$0xff]
    %v2427 = vld [vmem:[#allocation10 + $0x60] sm:$0xff]
    %v2428 = vld [vmem:[#allocation10 + $0x68] sm:$0xff]
    %v2429 = vld [vmem:[#allocation10 + $0x70] sm:$0xff]
    %v2430 = vld [vmem:[#allocation10 + $0x78] sm:$0xff]
    %v2431 = vld [vmem:[#allocation10 + $0x80] sm:$0xff]
    %v2432 = vld [vmem:[#allocation10 + $0x88] sm:$0xff]
    %v2433 = vld [vmem:[#allocation10 + $0x90] sm:$0xff]
    %v2434 = vld [vmem:[#allocation10 + $0x98] sm:$0xff]
    %v2435 = vld [vmem:[#allocation10 + $0xa0] sm:$0xff]
    %v2436 = vld [vmem:[#allocation10 + $0xa8] sm:$0xff]
    %v2437 = vld [vmem:[#allocation10 + $0xb0] sm:$0xff]
    %v2438 = vld [vmem:[#allocation10 + $0xb8] sm:$0xff]
    %v2439 = vld [vmem:[#allocation10 + $0xc0] sm:$0xff]
    %v2440 = vld [vmem:[#allocation10 + $0xc8] sm:$0xff]
    %v2441 = vld [vmem:[#allocation10 + $0xd0] sm:$0xff]
    %v2442 = vld [vmem:[#allocation10 + $0xd8] sm:$0xff]
    %v2443 = vld [vmem:[#allocation10 + $0xe0] sm:$0xff]
    %v2444 = vld [vmem:[#allocation10 + $0xe8] sm:$0xff]
    %v2445 = vld [vmem:[#allocation10 + $0xf0] sm:$0xff]
    %v2446 = vld [vmem:[#allocation10 + $0xf8] sm:$0xff]
    %v2447 = vld [vmem:[#allocation10 + $0x100] sm:$0xff]
    %v2448 = vld [vmem:[#allocation10 + $0x108] sm:$0xff]
    %v2449 = vld [vmem:[#allocation10 + $0x110] sm:$0xff]
    %v2450 = vld [vmem:[#allocation10 + $0x118] sm:$0xff]
    %v2451 = vld [vmem:[#allocation10 + $0x120] sm:$0xff]
    %v2452 = vld [vmem:[#allocation10 + $0x128] sm:$0xff]
    %v2453 = vld [vmem:[#allocation10 + $0x130] sm:$0xff]
    %v2454 = vld [vmem:[#allocation10 + $0x138] sm:$0xff]
    %v2455 = vld [vmem:[#allocation10 + $0x140] sm:$0xff]
    %v2456 = vld [vmem:[#allocation10 + $0x148] sm:$0xff]
    %v2457 = vld [vmem:[#allocation10 + $0x150] sm:$0xff]
    %v2458 = vld [vmem:[#allocation10 + $0x158] sm:$0xff]
    %v2459 = vld [vmem:[#allocation10 + $0x160] sm:$0xff]
    %v2460 = vld [vmem:[#allocation10 + $0x168] sm:$0xff]
    %v2461 = vld [vmem:[#allocation10 + $0x170] sm:$0xff]
    %v2462 = vld [vmem:[#allocation10 + $0x178] sm:$0xff]
    %v2463 = vld [vmem:[#allocation10 + $0x180] sm:$0xff]
    %v2464 = vld [vmem:[#allocation10 + $0x188] sm:$0xff]
    %v2465 = vld [vmem:[#allocation10 + $0x190] sm:$0xff]
    %v2466 = vld [vmem:[#allocation10 + $0x198] sm:$0xff]
    %v2467 = vld [vmem:[#allocation10 + $0x1a0] sm:$0xff]
    %v2468 = vld [vmem:[#allocation10 + $0x1a8] sm:$0xff]
    %v2469 = vld [vmem:[#allocation10 + $0x1b0] sm:$0xff]
    %v2470 = vld [vmem:[#allocation10 + $0x1b8] sm:$0xff]
    %v2471 = vld [vmem:[#allocation10 + $0x1c0] sm:$0xff]
    %v2472 = vld [vmem:[#allocation10 + $0x1c8] sm:$0xff]
    %v2473 = vld [vmem:[#allocation10 + $0x1d0] sm:$0xff]
    %v2474 = vld [vmem:[#allocation10 + $0x1d8] sm:$0xff]
    %v2475 = vld [vmem:[#allocation10 + $0x1e0] sm:$0xff]
    %v2476 = vld [vmem:[#allocation10 + $0x1e8] sm:$0xff]
    %v2477 = vld [vmem:[#allocation10 + $0x1f0] sm:$0xff]
    %v2478 = vld [vmem:[#allocation10 + $0x1f8] sm:$0xff]
    %v2479 = vld [vmem:[#allocation10 + $0x200] sm:$0xff]
    %v2480 = vld [vmem:[#allocation10 + $0x208] sm:$0xff]
    %v2481 = vld [vmem:[#allocation10 + $0x210] sm:$0xff]
    %v2482 = vld [vmem:[#allocation10 + $0x218] sm:$0xff]
    %v2483 = vld [vmem:[#allocation10 + $0x220] sm:$0xff]
    %v2484 = vld [vmem:[#allocation10 + $0x228] sm:$0xff]
    %v2485 = vld [vmem:[#allocation10 + $0x230] sm:$0xff]
    %v2486 = vld [vmem:[#allocation10 + $0x238] sm:$0xff]
    %v2487 = vld [vmem:[#allocation10 + $0x240] sm:$0xff]
    %v2488 = vld [vmem:[#allocation10 + $0x248] sm:$0xff]
    %v2489 = vld [vmem:[#allocation10 + $0x250] sm:$0xff]
    %v2490 = vld [vmem:[#allocation10 + $0x258] sm:$0xff]
    %v2491 = vld [vmem:[#allocation10 + $0x260] sm:$0xff]
    %v2492 = vld [vmem:[#allocation10 + $0x268] sm:$0xff]
    %v2493 = vld [vmem:[#allocation10 + $0x270] sm:$0xff]
    %v2494 = vld [vmem:[#allocation10 + $0x278] sm:$0xff]
    %v2495 = vld [vmem:[#allocation10 + $0x280] sm:$0xff]
    %v2496 = vld [vmem:[#allocation10 + $0x288] sm:$0xff]
    %v2497 = vld [vmem:[#allocation10 + $0x290] sm:$0xff]
    %v2498 = vld [vmem:[#allocation10 + $0x298] sm:$0xff]
    %v2499 = vld [vmem:[#allocation10 + $0x2a0] sm:$0xff]
    %v2500 = vld [vmem:[#allocation10 + $0x2a8] sm:$0xff]
    %v2501 = vld [vmem:[#allocation10 + $0x2b0] sm:$0xff]
    %v2502 = vld [vmem:[#allocation10 + $0x2b8] sm:$0xff]
    %v2503 = vld [vmem:[#allocation10 + $0x2c0] sm:$0xff]
    %v2504 = vld [vmem:[#allocation10 + $0x2c8] sm:$0xff]
    %v2505 = vld [vmem:[#allocation10 + $0x2d0] sm:$0xff]
    %v2506 = vld [vmem:[#allocation10 + $0x2d8] sm:$0xff]
    %v2507 = vld [vmem:[#allocation10 + $0x2e0] sm:$0xff]
    %v2508 = vld [vmem:[#allocation10 + $0x2e8] sm:$0xff]
    %v2509 = vld [vmem:[#allocation10 + $0x2f0] sm:$0xff]
    %v2510 = vld [vmem:[#allocation10 + $0x2f8] sm:$0xff]
    %v2511 = vld [vmem:[#allocation10 + $0x300] sm:$0xff]
    %v2512 = vld [vmem:[#allocation10 + $0x308] sm:$0xff]
    %v2513 = vld [vmem:[#allocation10 + $0x310] sm:$0xff]
    %v2514 = vld [vmem:[#allocation10 + $0x318] sm:$0xff]
    %v2515 = vld [vmem:[#allocation10 + $0x320] sm:$0xff]
    %v2516 = vld [vmem:[#allocation10 + $0x328] sm:$0xff]
    %v2517 = vld [vmem:[#allocation10 + $0x330] sm:$0xff]
    %v2518 = vld [vmem:[#allocation10 + $0x338] sm:$0xff]
    %v2519 = vld [vmem:[#allocation10 + $0x340] sm:$0xff]
    %v2520 = vld [vmem:[#allocation10 + $0x348] sm:$0xff]
    %v2521 = vld [vmem:[#allocation10 + $0x350] sm:$0xff]
    %v2522 = vld [vmem:[#allocation10 + $0x358] sm:$0xff]
    %v2523 = vld [vmem:[#allocation10 + $0x360] sm:$0xff]
    %v2524 = vld [vmem:[#allocation10 + $0x368] sm:$0xff]
    %v2525 = vld [vmem:[#allocation10 + $0x370] sm:$0xff]
    %v2526 = vld [vmem:[#allocation10 + $0x378] sm:$0xff]
    %v2527 = vld [vmem:[#allocation10 + $0x380] sm:$0xff]
    %v2528 = vld [vmem:[#allocation10 + $0x388] sm:$0xff]
    %v2529 = vld [vmem:[#allocation10 + $0x390] sm:$0xff]
    %v2530 = vld [vmem:[#allocation10 + $0x398] sm:$0xff]
    %v2531 = vld [vmem:[#allocation10 + $0x3a0] sm:$0xff]
    %v2532 = vld [vmem:[#allocation10 + $0x3a8] sm:$0xff]
    %v2533 = vld [vmem:[#allocation10 + $0x3b0] sm:$0xff]
    %v2534 = vld [vmem:[#allocation10 + $0x3b8] sm:$0xff]
    %v2535 = vld [vmem:[#allocation10 + $0x3c0] sm:$0xff]
    %v2536 = vld [vmem:[#allocation10 + $0x3c8] sm:$0xff]
    %v2537 = vld [vmem:[#allocation10 + $0x3d0] sm:$0xff]
    %v2538 = vld [vmem:[#allocation10 + $0x3d8] sm:$0xff]
    %v2539 = vld [vmem:[#allocation10 + $0x3e0] sm:$0xff]
    %v2540 = vld [vmem:[#allocation10 + $0x3e8] sm:$0xff]
    %v2541 = vld [vmem:[#allocation10 + $0x3f0] sm:$0xff]
    %v2542 = vld [vmem:[#allocation10 + $0x3f8] sm:$0xff]
    %v2543 = vld [vmem:[%s8] sm:$0xf]
    %v2545 = vlaneseq
    %v2546 = vshrl.u32 %v2545, 7
    %v2547 = vsub.s32 0, %v2546
    %v2548 = vrot.slane %v2543, %v2547
    %v2549 = vlaneseq
    %v2550 = vshrl.u32 %v2549, 7
    %v2551 = vsub.s32 1, %v2550
    %v2552 = vrot.slane %v2543, %v2551
    %v2553 = vlaneseq
    %v2554 = vshrl.u32 %v2553, 7
    %v2555 = vsub.s32 2, %v2554
    %v2556 = vrot.slane %v2543, %v2555
    %v2557 = vlaneseq
    %v2558 = vshrl.u32 %v2557, 7
    %v2559 = vsub.s32 3, %v2558
    %v2560 = vrot.slane %v2543, %v2559
    %v2693 = vunpack.c.l.b16 %v2415
    %v2694 = vunpack.c.h.b16 %v2415
    %v2695 = vunpack.c.l.b16 %v2416
    %v2696 = vunpack.c.h.b16 %v2416
    %v2697 = vunpack.c.l.b16 %v2417
    %v2698 = vunpack.c.h.b16 %v2417
    %v2699 = vunpack.c.l.b16 %v2418
    %v2700 = vunpack.c.h.b16 %v2418
    %v2701 = vunpack.c.l.b16 %v2419
    %v2702 = vunpack.c.h.b16 %v2419
    %v2703 = vunpack.c.l.b16 %v2420
    %v2704 = vunpack.c.h.b16 %v2420
    %v2705 = vunpack.c.l.b16 %v2421
    %v2706 = vunpack.c.h.b16 %v2421
    %v2707 = vunpack.c.l.b16 %v2422
    %v2708 = vunpack.c.h.b16 %v2422
    %v2709 = vunpack.c.l.b16 %v2423
    %v2710 = vunpack.c.h.b16 %v2423
    %v2711 = vunpack.c.l.b16 %v2424
    %v2712 = vunpack.c.h.b16 %v2424
    %v2713 = vunpack.c.l.b16 %v2425
    %v2714 = vunpack.c.h.b16 %v2425
    %v2715 = vunpack.c.l.b16 %v2426
    %v2716 = vunpack.c.h.b16 %v2426
    %v2717 = vunpack.c.l.b16 %v2427
    %v2718 = vunpack.c.h.b16 %v2427
    %v2719 = vunpack.c.l.b16 %v2428
    %v2720 = vunpack.c.h.b16 %v2428
    %v2721 = vunpack.c.l.b16 %v2429
    %v2722 = vunpack.c.h.b16 %v2429
    %v2723 = vunpack.c.l.b16 %v2430
    %v2724 = vunpack.c.h.b16 %v2430
    %v2725 = vunpack.c.l.b16 %v2431
    %v2726 = vunpack.c.h.b16 %v2431
    %v2727 = vunpack.c.l.b16 %v2432
    %v2728 = vunpack.c.h.b16 %v2432
    %v2729 = vunpack.c.l.b16 %v2433
    %v2730 = vunpack.c.h.b16 %v2433
    %v2731 = vunpack.c.l.b16 %v2434
    %v2732 = vunpack.c.h.b16 %v2434
    %v2733 = vunpack.c.l.b16 %v2435
    %v2734 = vunpack.c.h.b16 %v2435
    %v2735 = vunpack.c.l.b16 %v2436
    %v2736 = vunpack.c.h.b16 %v2436
    %v2737 = vunpack.c.l.b16 %v2437
    %v2738 = vunpack.c.h.b16 %v2437
    %v2739 = vunpack.c.l.b16 %v2438
    %v2740 = vunpack.c.h.b16 %v2438
    %v2741 = vunpack.c.l.b16 %v2439
    %v2742 = vunpack.c.h.b16 %v2439
    %v2743 = vunpack.c.l.b16 %v2440
    %v2744 = vunpack.c.h.b16 %v2440
    %v2745 = vunpack.c.l.b16 %v2441
    %v2746 = vunpack.c.h.b16 %v2441
    %v2747 = vunpack.c.l.b16 %v2442
    %v2748 = vunpack.c.h.b16 %v2442
    %v2749 = vunpack.c.l.b16 %v2443
    %v2750 = vunpack.c.h.b16 %v2443
    %v2751 = vunpack.c.l.b16 %v2444
    %v2752 = vunpack.c.h.b16 %v2444
    %v2753 = vunpack.c.l.b16 %v2445
    %v2754 = vunpack.c.h.b16 %v2445
    %v2755 = vunpack.c.l.b16 %v2446
    %v2756 = vunpack.c.h.b16 %v2446
    %v2757 = vunpack.c.l.b16 %v2447
    %v2758 = vunpack.c.h.b16 %v2447
    %v2759 = vunpack.c.l.b16 %v2448
    %v2760 = vunpack.c.h.b16 %v2448
    %v2761 = vunpack.c.l.b16 %v2449
    %v2762 = vunpack.c.h.b16 %v2449
    %v2763 = vunpack.c.l.b16 %v2450
    %v2764 = vunpack.c.h.b16 %v2450
    %v2765 = vunpack.c.l.b16 %v2451
    %v2766 = vunpack.c.h.b16 %v2451
    %v2767 = vunpack.c.l.b16 %v2452
    %v2768 = vunpack.c.h.b16 %v2452
    %v2769 = vunpack.c.l.b16 %v2453
    %v2770 = vunpack.c.h.b16 %v2453
    %v2771 = vunpack.c.l.b16 %v2454
    %v2772 = vunpack.c.h.b16 %v2454
    %v2773 = vunpack.c.l.b16 %v2455
    %v2774 = vunpack.c.h.b16 %v2455
    %v2775 = vunpack.c.l.b16 %v2456
    %v2776 = vunpack.c.h.b16 %v2456
    %v2777 = vunpack.c.l.b16 %v2457
    %v2778 = vunpack.c.h.b16 %v2457
    %v2779 = vunpack.c.l.b16 %v2458
    %v2780 = vunpack.c.h.b16 %v2458
    %v2781 = vunpack.c.l.b16 %v2459
    %v2782 = vunpack.c.h.b16 %v2459
    %v2783 = vunpack.c.l.b16 %v2460
    %v2784 = vunpack.c.h.b16 %v2460
    %v2785 = vunpack.c.l.b16 %v2461
    %v2786 = vunpack.c.h.b16 %v2461
    %v2787 = vunpack.c.l.b16 %v2462
    %v2788 = vunpack.c.h.b16 %v2462
    %v2789 = vunpack.c.l.b16 %v2463
    %v2790 = vunpack.c.h.b16 %v2463
    %v2791 = vunpack.c.l.b16 %v2464
    %v2792 = vunpack.c.h.b16 %v2464
    %v2793 = vunpack.c.l.b16 %v2465
    %v2794 = vunpack.c.h.b16 %v2465
    %v2795 = vunpack.c.l.b16 %v2466
    %v2796 = vunpack.c.h.b16 %v2466
    %v2797 = vunpack.c.l.b16 %v2467
    %v2798 = vunpack.c.h.b16 %v2467
    %v2799 = vunpack.c.l.b16 %v2468
    %v2800 = vunpack.c.h.b16 %v2468
    %v2801 = vunpack.c.l.b16 %v2469
    %v2802 = vunpack.c.h.b16 %v2469
    %v2803 = vunpack.c.l.b16 %v2470
    %v2804 = vunpack.c.h.b16 %v2470
    %v2805 = vunpack.c.l.b16 %v2471
    %v2806 = vunpack.c.h.b16 %v2471
    %v2807 = vunpack.c.l.b16 %v2472
    %v2808 = vunpack.c.h.b16 %v2472
    %v2809 = vunpack.c.l.b16 %v2473
    %v2810 = vunpack.c.h.b16 %v2473
    %v2811 = vunpack.c.l.b16 %v2474
    %v2812 = vunpack.c.h.b16 %v2474
    %v2813 = vunpack.c.l.b16 %v2475
    %v2814 = vunpack.c.h.b16 %v2475
    %v2815 = vunpack.c.l.b16 %v2476
    %v2816 = vunpack.c.h.b16 %v2476
    %v2817 = vunpack.c.l.b16 %v2477
    %v2818 = vunpack.c.h.b16 %v2477
    %v2819 = vunpack.c.l.b16 %v2478
    %v2820 = vunpack.c.h.b16 %v2478
    %v2821 = vunpack.c.l.b16 %v2479
    %v2822 = vunpack.c.h.b16 %v2479
    %v2823 = vunpack.c.l.b16 %v2480
    %v2824 = vunpack.c.h.b16 %v2480
    %v2825 = vunpack.c.l.b16 %v2481
    %v2826 = vunpack.c.h.b16 %v2481
    %v2827 = vunpack.c.l.b16 %v2482
    %v2828 = vunpack.c.h.b16 %v2482
    %v2829 = vunpack.c.l.b16 %v2483
    %v2830 = vunpack.c.h.b16 %v2483
    %v2831 = vunpack.c.l.b16 %v2484
    %v2832 = vunpack.c.h.b16 %v2484
    %v2833 = vunpack.c.l.b16 %v2485
    %v2834 = vunpack.c.h.b16 %v2485
    %v2835 = vunpack.c.l.b16 %v2486
    %v2836 = vunpack.c.h.b16 %v2486
    %v2837 = vunpack.c.l.b16 %v2487
    %v2838 = vunpack.c.h.b16 %v2487
    %v2839 = vunpack.c.l.b16 %v2488
    %v2840 = vunpack.c.h.b16 %v2488
    %v2841 = vunpack.c.l.b16 %v2489
    %v2842 = vunpack.c.h.b16 %v2489
    %v2843 = vunpack.c.l.b16 %v2490
    %v2844 = vunpack.c.h.b16 %v2490
    %v2845 = vunpack.c.l.b16 %v2491
    %v2846 = vunpack.c.h.b16 %v2491
    %v2847 = vunpack.c.l.b16 %v2492
    %v2848 = vunpack.c.h.b16 %v2492
    %v2849 = vunpack.c.l.b16 %v2493
    %v2850 = vunpack.c.h.b16 %v2493
    %v2851 = vunpack.c.l.b16 %v2494
    %v2852 = vunpack.c.h.b16 %v2494
    %v2853 = vunpack.c.l.b16 %v2495
    %v2854 = vunpack.c.h.b16 %v2495
    %v2855 = vunpack.c.l.b16 %v2496
    %v2856 = vunpack.c.h.b16 %v2496
    %v2857 = vunpack.c.l.b16 %v2497
    %v2858 = vunpack.c.h.b16 %v2497
    %v2859 = vunpack.c.l.b16 %v2498
    %v2860 = vunpack.c.h.b16 %v2498
    %v2861 = vunpack.c.l.b16 %v2499
    %v2862 = vunpack.c.h.b16 %v2499
    %v2863 = vunpack.c.l.b16 %v2500
    %v2864 = vunpack.c.h.b16 %v2500
    %v2865 = vunpack.c.l.b16 %v2501
    %v2866 = vunpack.c.h.b16 %v2501
    %v2867 = vunpack.c.l.b16 %v2502
    %v2868 = vunpack.c.h.b16 %v2502
    %v2869 = vunpack.c.l.b16 %v2503
    %v2870 = vunpack.c.h.b16 %v2503
    %v2871 = vunpack.c.l.b16 %v2504
    %v2872 = vunpack.c.h.b16 %v2504
    %v2873 = vunpack.c.l.b16 %v2505
    %v2874 = vunpack.c.h.b16 %v2505
    %v2875 = vunpack.c.l.b16 %v2506
    %v2876 = vunpack.c.h.b16 %v2506
    %v2877 = vunpack.c.l.b16 %v2507
    %v2878 = vunpack.c.h.b16 %v2507
    %v2879 = vunpack.c.l.b16 %v2508
    %v2880 = vunpack.c.h.b16 %v2508
    %v2881 = vunpack.c.l.b16 %v2509
    %v2882 = vunpack.c.h.b16 %v2509
    %v2883 = vunpack.c.l.b16 %v2510
    %v2884 = vunpack.c.h.b16 %v2510
    %v2885 = vunpack.c.l.b16 %v2511
    %v2886 = vunpack.c.h.b16 %v2511
    %v2887 = vunpack.c.l.b16 %v2512
    %v2888 = vunpack.c.h.b16 %v2512
    %v2889 = vunpack.c.l.b16 %v2513
    %v2890 = vunpack.c.h.b16 %v2513
    %v2891 = vunpack.c.l.b16 %v2514
    %v2892 = vunpack.c.h.b16 %v2514
    %v2893 = vunpack.c.l.b16 %v2515
    %v2894 = vunpack.c.h.b16 %v2515
    %v2895 = vunpack.c.l.b16 %v2516
    %v2896 = vunpack.c.h.b16 %v2516
    %v2897 = vunpack.c.l.b16 %v2517
    %v2898 = vunpack.c.h.b16 %v2517
    %v2899 = vunpack.c.l.b16 %v2518
    %v2900 = vunpack.c.h.b16 %v2518
    %v2901 = vunpack.c.l.b16 %v2519
    %v2902 = vunpack.c.h.b16 %v2519
    %v2903 = vunpack.c.l.b16 %v2520
    %v2904 = vunpack.c.h.b16 %v2520
    %v2905 = vunpack.c.l.b16 %v2521
    %v2906 = vunpack.c.h.b16 %v2521
    %v2907 = vunpack.c.l.b16 %v2522
    %v2908 = vunpack.c.h.b16 %v2522
    %v2909 = vunpack.c.l.b16 %v2523
    %v2910 = vunpack.c.h.b16 %v2523
    %v2911 = vunpack.c.l.b16 %v2524
    %v2912 = vunpack.c.h.b16 %v2524
    %v2913 = vunpack.c.l.b16 %v2525
    %v2914 = vunpack.c.h.b16 %v2525
    %v2915 = vunpack.c.l.b16 %v2526
    %v2916 = vunpack.c.h.b16 %v2526
    %v2917 = vunpack.c.l.b16 %v2527
    %v2918 = vunpack.c.h.b16 %v2527
    %v2919 = vunpack.c.l.b16 %v2528
    %v2920 = vunpack.c.h.b16 %v2528
    %v2921 = vunpack.c.l.b16 %v2529
    %v2922 = vunpack.c.h.b16 %v2529
    %v2923 = vunpack.c.l.b16 %v2530
    %v2924 = vunpack.c.h.b16 %v2530
    %v2925 = vunpack.c.l.b16 %v2531
    %v2926 = vunpack.c.h.b16 %v2531
    %v2927 = vunpack.c.l.b16 %v2532
    %v2928 = vunpack.c.h.b16 %v2532
    %v2929 = vunpack.c.l.b16 %v2533
    %v2930 = vunpack.c.h.b16 %v2533
    %v2931 = vunpack.c.l.b16 %v2534
    %v2932 = vunpack.c.h.b16 %v2534
    %v2933 = vunpack.c.l.b16 %v2535
    %v2934 = vunpack.c.h.b16 %v2535
    %v2935 = vunpack.c.l.b16 %v2536
    %v2936 = vunpack.c.h.b16 %v2536
    %v2937 = vunpack.c.l.b16 %v2537
    %v2938 = vunpack.c.h.b16 %v2537
    %v2939 = vunpack.c.l.b16 %v2538
    %v2940 = vunpack.c.h.b16 %v2538
    %v2941 = vunpack.c.l.b16 %v2539
    %v2942 = vunpack.c.h.b16 %v2539
    %v2943 = vunpack.c.l.b16 %v2540
    %v2944 = vunpack.c.h.b16 %v2540
    %v2945 = vunpack.c.l.b16 %v2541
    %v2946 = vunpack.c.h.b16 %v2541
    %v2947 = vunpack.c.l.b16 %v2542
    %v2948 = vunpack.c.h.b16 %v2542
    %v2949 = vpack.c.b16 %v2697, %v2693
    %v2950 = vpack.c.b16 %v2698, %v2694
    %v2951 = vpack.c.b16 %v2699, %v2695
    %v2952 = vpack.c.b16 %v2700, %v2696
    %v2953 = vpack.c.b16 %v2705, %v2701
    %v2954 = vpack.c.b16 %v2706, %v2702
    %v2955 = vpack.c.b16 %v2707, %v2703
    %v2956 = vpack.c.b16 %v2708, %v2704
    %v2957 = vpack.c.b16 %v2713, %v2709
    %v2958 = vpack.c.b16 %v2714, %v2710
    %v2959 = vpack.c.b16 %v2715, %v2711
    %v2960 = vpack.c.b16 %v2716, %v2712
    %v2961 = vpack.c.b16 %v2721, %v2717
    %v2962 = vpack.c.b16 %v2722, %v2718
    %v2963 = vpack.c.b16 %v2723, %v2719
    %v2964 = vpack.c.b16 %v2724, %v2720
    %v2965 = vpack.c.b16 %v2729, %v2725
    %v2966 = vpack.c.b16 %v2730, %v2726
    %v2967 = vpack.c.b16 %v2731, %v2727
    %v2968 = vpack.c.b16 %v2732, %v2728
    %v2969 = vpack.c.b16 %v2737, %v2733
    %v2970 = vpack.c.b16 %v2738, %v2734
    %v2971 = vpack.c.b16 %v2739, %v2735
    %v2972 = vpack.c.b16 %v2740, %v2736
    %v2973 = vpack.c.b16 %v2745, %v2741
    %v2974 = vpack.c.b16 %v2746, %v2742
    %v2975 = vpack.c.b16 %v2747, %v2743
    %v2976 = vpack.c.b16 %v2748, %v2744
    %v2977 = vpack.c.b16 %v2753, %v2749
    %v2978 = vpack.c.b16 %v2754, %v2750
    %v2979 = vpack.c.b16 %v2755, %v2751
    %v2980 = vpack.c.b16 %v2756, %v2752
    %v2981 = vpack.c.b16 %v2761, %v2757
    %v2982 = vpack.c.b16 %v2762, %v2758
    %v2983 = vpack.c.b16 %v2763, %v2759
    %v2984 = vpack.c.b16 %v2764, %v2760
    %v2985 = vpack.c.b16 %v2769, %v2765
    %v2986 = vpack.c.b16 %v2770, %v2766
    %v2987 = vpack.c.b16 %v2771, %v2767
    %v2988 = vpack.c.b16 %v2772, %v2768
    %v2989 = vpack.c.b16 %v2777, %v2773
    %v2990 = vpack.c.b16 %v2778, %v2774
    %v2991 = vpack.c.b16 %v2779, %v2775
    %v2992 = vpack.c.b16 %v2780, %v2776
    %v2993 = vpack.c.b16 %v2785, %v2781
    %v2994 = vpack.c.b16 %v2786, %v2782
    %v2995 = vpack.c.b16 %v2787, %v2783
    %v2996 = vpack.c.b16 %v2788, %v2784
    %v2997 = vpack.c.b16 %v2793, %v2789
    %v2998 = vpack.c.b16 %v2794, %v2790
    %v2999 = vpack.c.b16 %v2795, %v2791
    %v3000 = vpack.c.b16 %v2796, %v2792
    %v3001 = vpack.c.b16 %v2801, %v2797
    %v3002 = vpack.c.b16 %v2802, %v2798
    %v3003 = vpack.c.b16 %v2803, %v2799
    %v3004 = vpack.c.b16 %v2804, %v2800
    %v3005 = vpack.c.b16 %v2809, %v2805
    %v3006 = vpack.c.b16 %v2810, %v2806
    %v3007 = vpack.c.b16 %v2811, %v2807
    %v3008 = vpack.c.b16 %v2812, %v2808
    %v3009 = vpack.c.b16 %v2817, %v2813
    %v3010 = vpack.c.b16 %v2818, %v2814
    %v3011 = vpack.c.b16 %v2819, %v2815
    %v3012 = vpack.c.b16 %v2820, %v2816
    %v3013 = vpack.c.b16 %v2825, %v2821
    %v3014 = vpack.c.b16 %v2826, %v2822
    %v3015 = vpack.c.b16 %v2827, %v2823
    %v3016 = vpack.c.b16 %v2828, %v2824
    %v3017 = vpack.c.b16 %v2833, %v2829
    %v3018 = vpack.c.b16 %v2834, %v2830
    %v3019 = vpack.c.b16 %v2835, %v2831
    %v3020 = vpack.c.b16 %v2836, %v2832
    %v3021 = vpack.c.b16 %v2841, %v2837
    %v3022 = vpack.c.b16 %v2842, %v2838
    %v3023 = vpack.c.b16 %v2843, %v2839
    %v3024 = vpack.c.b16 %v2844, %v2840
    %v3025 = vpack.c.b16 %v2849, %v2845
    %v3026 = vpack.c.b16 %v2850, %v2846
    %v3027 = vpack.c.b16 %v2851, %v2847
    %v3028 = vpack.c.b16 %v2852, %v2848
    %v3029 = vpack.c.b16 %v2857, %v2853
    %v3030 = vpack.c.b16 %v2858, %v2854
    %v3031 = vpack.c.b16 %v2859, %v2855
    %v3032 = vpack.c.b16 %v2860, %v2856
    %v3033 = vpack.c.b16 %v2865, %v2861
    %v3034 = vpack.c.b16 %v2866, %v2862
    %v3035 = vpack.c.b16 %v2867, %v2863
    %v3036 = vpack.c.b16 %v2868, %v2864
    %v3037 = vpack.c.b16 %v2873, %v2869
    %v3038 = vpack.c.b16 %v2874, %v2870
    %v3039 = vpack.c.b16 %v2875, %v2871
    %v3040 = vpack.c.b16 %v2876, %v2872
    %v3041 = vpack.c.b16 %v2881, %v2877
    %v3042 = vpack.c.b16 %v2882, %v2878
    %v3043 = vpack.c.b16 %v2883, %v2879
    %v3044 = vpack.c.b16 %v2884, %v2880
    %v3045 = vpack.c.b16 %v2889, %v2885
    %v3046 = vpack.c.b16 %v2890, %v2886
    %v3047 = vpack.c.b16 %v2891, %v2887
    %v3048 = vpack.c.b16 %v2892, %v2888
    %v3049 = vpack.c.b16 %v2897, %v2893
    %v3050 = vpack.c.b16 %v2898, %v2894
    %v3051 = vpack.c.b16 %v2899, %v2895
    %v3052 = vpack.c.b16 %v2900, %v2896
    %v3053 = vpack.c.b16 %v2905, %v2901
    %v3054 = vpack.c.b16 %v2906, %v2902
    %v3055 = vpack.c.b16 %v2907, %v2903
    %v3056 = vpack.c.b16 %v2908, %v2904
    %v3057 = vpack.c.b16 %v2913, %v2909
    %v3058 = vpack.c.b16 %v2914, %v2910
    %v3059 = vpack.c.b16 %v2915, %v2911
    %v3060 = vpack.c.b16 %v2916, %v2912
    %v3061 = vpack.c.b16 %v2921, %v2917
    %v3062 = vpack.c.b16 %v2922, %v2918
    %v3063 = vpack.c.b16 %v2923, %v2919
    %v3064 = vpack.c.b16 %v2924, %v2920
    %v3065 = vpack.c.b16 %v2929, %v2925
    %v3066 = vpack.c.b16 %v2930, %v2926
    %v3067 = vpack.c.b16 %v2931, %v2927
    %v3068 = vpack.c.b16 %v2932, %v2928
    %v3069 = vpack.c.b16 %v2937, %v2933
    %v3070 = vpack.c.b16 %v2938, %v2934
    %v3071 = vpack.c.b16 %v2939, %v2935
    %v3072 = vpack.c.b16 %v2940, %v2936
    %v3073 = vpack.c.b16 %v2945, %v2941
    %v3074 = vpack.c.b16 %v2946, %v2942
    %v3075 = vpack.c.b16 %v2947, %v2943
    %v3076 = vpack.c.b16 %v2948, %v2944
    %3205 = vmatprep.subr.bf16.mxu0 %v2950
    %3206 = vmatpush1.bf16.msra.mxu0 %v2949
    %3207 = vmatprep.subr.bf16.mxu0 %v2954
    %3208 = vmatpush1.bf16.msra.mxu0 %v2953
    %3209 = vmatprep.subr.bf16.mxu0 %v2958
    %3210 = vmatpush1.bf16.msra.mxu0 %v2957
    %3211 = vmatprep.subr.bf16.mxu0 %v2962
    %3212 = vmatpush1.bf16.msra.mxu0 %v2961
    %3213 = vmatprep.subr.bf16.mxu0 %v2966
    %3214 = vmatpush1.bf16.msra.mxu0 %v2965
    %3215 = vmatprep.subr.bf16.mxu0 %v2970
    %3216 = vmatpush1.bf16.msra.mxu0 %v2969
    %3217 = vmatprep.subr.bf16.mxu0 %v2974
    %3218 = vmatpush1.bf16.msra.mxu0 %v2973
    %3219 = vmatprep.subr.bf16.mxu0 %v2978
    %3220 = vmatpush1.bf16.msra.mxu0 %v2977
    %3221 = vmatprep.subr.bf16.mxu0 %v2982
    %3222 = vmatpush1.bf16.msra.mxu0 %v2981
    %3223 = vmatprep.subr.bf16.mxu0 %v2986
    %3224 = vmatpush1.bf16.msra.mxu0 %v2985
    %3225 = vmatprep.subr.bf16.mxu0 %v2990
    %3226 = vmatpush1.bf16.msra.mxu0 %v2989
    %3227 = vmatprep.subr.bf16.mxu0 %v2994
    %3228 = vmatpush1.bf16.msra.mxu0 %v2993
    %3229 = vmatprep.subr.bf16.mxu0 %v2998
    %3230 = vmatpush1.bf16.msra.mxu0 %v2997
    %3231 = vmatprep.subr.bf16.mxu0 %v3002
    %3232 = vmatpush1.bf16.msra.mxu0 %v3001
    %3233 = vmatprep.subr.bf16.mxu0 %v3006
    %3234 = vmatpush1.bf16.msra.mxu0 %v3005
    %3235 = vmatprep.subr.bf16.mxu0 %v3010
    %3236 = vmatpush1.bf16.msra.mxu0 %v3009
    %3237 = vmatprep.mubr.bf16.mxu0 %v2408
    %3238 = vmatmul.mubr.bf16.gmra.mrb[0].mxu0 %v2407
    %v3239 = vpop.f32.mrb[0].mxu0
    %v3240 = vadd.f32 %v2548, %v3239
    %v3241 = vpop.f32.mrb[0].mxu0
    %v3242 = vadd.f32 %v2552, %v3241
    %v3243 = vpop.f32.mrb[0].mxu0
    %v3244 = vadd.f32 %v2548, %v3243
    %v3245 = vpop.f32.mrb[0].mxu0
    %v3246 = vadd.f32 %v2552, %v3245
    %3247 = vmatprep.mubr.bf16.mxu0 %v2412
    %3248 = vmatmul.mubr.bf16.gmra.mrb[0].mxu0 %v2411
    %v3249 = vpop.f32.mrb[0].mxu0
    %v3250 = vadd.f32 %v2548, %v3249
    %v3251 = vpop.f32.mrb[0].mxu0
    %v3252 = vadd.f32 %v2552, %v3251
    %v3253 = vpop.f32.mrb[0].mxu0
    %v3254 = vpop.f32.mrb[0].mxu0
    %3255 = vdwg.mxu0
    %3256 = vmatprep.subr.bf16.mxu0 %v3014
    %3257 = vmatpush1.bf16.msra.mxu0 %v3013
    %3258 = vmatprep.subr.bf16.mxu0 %v3018
    %3259 = vmatpush1.bf16.msra.mxu0 %v3017
    %3260 = vmatprep.subr.bf16.mxu0 %v3022
    %3261 = vmatpush1.bf16.msra.mxu0 %v3021
    %3262 = vmatprep.subr.bf16.mxu0 %v3026
    %3263 = vmatpush1.bf16.msra.mxu0 %v3025
    %3264 = vmatprep.subr.bf16.mxu0 %v3030
    %3265 = vmatpush1.bf16.msra.mxu0 %v3029
    %3266 = vmatprep.subr.bf16.mxu0 %v3034
    %3267 = vmatpush1.bf16.msra.mxu0 %v3033
    %3268 = vmatprep.subr.bf16.mxu0 %v3038
    %3269 = vmatpush1.bf16.msra.mxu0 %v3037
    %3270 = vmatprep.subr.bf16.mxu0 %v3042
    %3271 = vmatpush1.bf16.msra.mxu0 %v3041
    %3272 = vmatprep.subr.bf16.mxu0 %v3046
    %3273 = vmatpush1.bf16.msra.mxu0 %v3045
    %3274 = vmatprep.subr.bf16.mxu0 %v3050
    %3275 = vmatpush1.bf16.msra.mxu0 %v3049
    %3276 = vmatprep.subr.bf16.mxu0 %v3054
    %3277 = vmatpush1.bf16.msra.mxu0 %v3053
    %3278 = vmatprep.subr.bf16.mxu0 %v3058
    %3279 = vmatpush1.bf16.msra.mxu0 %v3057
    %3280 = vmatprep.subr.bf16.mxu0 %v3062
    %3281 = vmatpush1.bf16.msra.mxu0 %v3061
    %3282 = vmatprep.subr.bf16.mxu0 %v3066
    %3283 = vmatpush1.bf16.msra.mxu0 %v3065
    %3284 = vmatprep.subr.bf16.mxu0 %v3070
    %3285 = vmatpush1.bf16.msra.mxu0 %v3069
    %3286 = vmatprep.subr.bf16.mxu0 %v3074
    %3287 = vmatpush1.bf16.msra.mxu0 %v3073
    %3288 = vmatprep.mubr.bf16.mxu0 %v2410
    %3289 = vmatmul.mubr.bf16.gmra.mrb[0].mxu0 %v2409
    %v3290 = vpop.f32.mrb[0].mxu0
    %v3291 = vadd.f32 %v3240, %v3290
    %v3292 = vpop.f32.mrb[0].mxu0
    %v3293 = vadd.f32 %v3242, %v3292
    %v3294 = vpop.f32.mrb[0].mxu0
    %v3295 = vadd.f32 %v3244, %v3294
    %v3296 = vpop.f32.mrb[0].mxu0
    %v3297 = vadd.f32 %v3246, %v3296
    %3298 = vmatprep.mubr.bf16.mxu0 %v2414
    %3299 = vmatmul.mubr.bf16.gmra.mrb[0].mxu0 %v2413
    %v3300 = vpop.f32.mrb[0].mxu0
    %v3301 = vadd.f32 %v3250, %v3300
    %v3302 = vpop.f32.mrb[0].mxu0
    %v3303 = vadd.f32 %v3252, %v3302
    %v3304 = vpop.f32.mrb[0].mxu0
    %v3305 = vpop.f32.mrb[0].mxu0
    %3306 = vdwg.mxu0
    %3307 = vmatprep.subr.bf16.mxu0 %v2952
    %3308 = vmatpush1.bf16.msra.mxu0 %v2951
    %3309 = vmatprep.subr.bf16.mxu0 %v2956
    %3310 = vmatpush1.bf16.msra.mxu0 %v2955
    %3311 = vmatprep.subr.bf16.mxu0 %v2960
    %3312 = vmatpush1.bf16.msra.mxu0 %v2959
    %3313 = vmatprep.subr.bf16.mxu0 %v2964
    %3314 = vmatpush1.bf16.msra.mxu0 %v2963
    %3315 = vmatprep.subr.bf16.mxu0 %v2968
    %3316 = vmatpush1.bf16.msra.mxu0 %v2967
    %3317 = vmatprep.subr.bf16.mxu0 %v2972
    %3318 = vmatpush1.bf16.msra.mxu0 %v2971
    %3319 = vmatprep.subr.bf16.mxu0 %v2976
    %3320 = vmatpush1.bf16.msra.mxu0 %v2975
    %3321 = vmatprep.subr.bf16.mxu0 %v2980
    %3322 = vmatpush1.bf16.msra.mxu0 %v2979
    %3323 = vmatprep.subr.bf16.mxu0 %v2984
    %3324 = vmatpush1.bf16.msra.mxu0 %v2983
    %3325 = vmatprep.subr.bf16.mxu0 %v2988
    %3326 = vmatpush1.bf16.msra.mxu0 %v2987
    %3327 = vmatprep.subr.bf16.mxu0 %v2992
    %3328 = vmatpush1.bf16.msra.mxu0 %v2991
    %3329 = vmatprep.subr.bf16.mxu0 %v2996
    %3330 = vmatpush1.bf16.msra.mxu0 %v2995
    %3331 = vmatprep.subr.bf16.mxu0 %v3000
    %3332 = vmatpush1.bf16.msra.mxu0 %v2999
    %3333 = vmatprep.subr.bf16.mxu0 %v3004
    %3334 = vmatpush1.bf16.msra.mxu0 %v3003
    %3335 = vmatprep.subr.bf16.mxu0 %v3008
    %3336 = vmatpush1.bf16.msra.mxu0 %v3007
    %3337 = vmatprep.subr.bf16.mxu0 %v3012
    %3338 = vmatpush1.bf16.msra.mxu0 %v3011
    %3339 = vmatprep.mubr.bf16.mxu0 %v2408
    %3340 = vmatmul.mubr.bf16.gmra.mrb[0].mxu0 %v2407
    %v3341 = vpop.f32.mrb[0].mxu0
    %v3342 = vadd.f32 %v2556, %v3341
    %v3343 = vpop.f32.mrb[0].mxu0
    %v3344 = vadd.f32 %v2560, %v3343
    %v3345 = vpop.f32.mrb[0].mxu0
    %v3346 = vadd.f32 %v2556, %v3345
    %v3347 = vpop.f32.mrb[0].mxu0
    %v3348 = vadd.f32 %v2560, %v3347
    %3349 = vmatprep.mubr.bf16.mxu0 %v2412
    %3350 = vmatmul.mubr.bf16.gmra.mrb[0].mxu0 %v2411
    %v3351 = vpop.f32.mrb[0].mxu0
    %v3352 = vadd.f32 %v2556, %v3351
    %v3353 = vpop.f32.mrb[0].mxu0
    %v3354 = vadd.f32 %v2560, %v3353
    %v3355 = vpop.f32.mrb[0].mxu0
    %v3356 = vpop.f32.mrb[0].mxu0
    %3357 = vdwg.mxu0
    %3358 = vmatprep.subr.bf16.mxu0 %v3016
    %3359 = vmatpush1.bf16.msra.mxu0 %v3015
    %3360 = vmatprep.subr.bf16.mxu0 %v3020
    %3361 = vmatpush1.bf16.msra.mxu0 %v3019
    %3362 = vmatprep.subr.bf16.mxu0 %v3024
    %3363 = vmatpush1.bf16.msra.mxu0 %v3023
    %3364 = vmatprep.subr.bf16.mxu0 %v3028
    %3365 = vmatpush1.bf16.msra.mxu0 %v3027
    %3366 = vmatprep.subr.bf16.mxu0 %v3032
    %3367 = vmatpush1.bf16.msra.mxu0 %v3031
    %3368 = vmatprep.subr.bf16.mxu0 %v3036
    %3369 = vmatpush1.bf16.msra.mxu0 %v3035
    %3370 = vmatprep.subr.bf16.mxu0 %v3040
    %3371 = vmatpush1.bf16.msra.mxu0 %v3039
    %3372 = vmatprep.subr.bf16.mxu0 %v3044
    %3373 = vmatpush1.bf16.msra.mxu0 %v3043
    %3374 = vmatprep.subr.bf16.mxu0 %v3048
    %3375 = vmatpush1.bf16.msra.mxu0 %v3047
    %3376 = vmatprep.subr.bf16.mxu0 %v3052
    %3377 = vmatpush1.bf16.msra.mxu0 %v3051
    %3378 = vmatprep.subr.bf16.mxu0 %v3056
    %3379 = vmatpush1.bf16.msra.mxu0 %v3055
    %3380 = vmatprep.subr.bf16.mxu0 %v3060
    %3381 = vmatpush1.bf16.msra.mxu0 %v3059
    %3382 = vmatprep.subr.bf16.mxu0 %v3064
    %3383 = vmatpush1.bf16.msra.mxu0 %v3063
    %3384 = vmatprep.subr.bf16.mxu0 %v3068
    %3385 = vmatpush1.bf16.msra.mxu0 %v3067
    %3386 = vmatprep.subr.bf16.mxu0 %v3072
    %3387 = vmatpush1.bf16.msra.mxu0 %v3071
    %3388 = vmatprep.subr.bf16.mxu0 %v3076
    %3389 = vmatpush1.bf16.msra.mxu0 %v3075
    %3390 = vmatprep.mubr.bf16.mxu0 %v2410
    %3391 = vmatmul.mubr.bf16.gmra.mrb[0].mxu0 %v2409
    %v3392 = vpop.f32.mrb[0].mxu0
    %v3393 = vadd.f32 %v3342, %v3392
    %v3394 = vpop.f32.mrb[0].mxu0
    %v3395 = vadd.f32 %v3344, %v3394
    %v3396 = vpop.f32.mrb[0].mxu0
    %v3397 = vadd.f32 %v3346, %v3396
    %v3398 = vpop.f32.mrb[0].mxu0
    %v3399 = vadd.f32 %v3348, %v3398
    %3400 = vmatprep.mubr.bf16.mxu0 %v2414
    %3401 = vmatmul.mubr.bf16.gmra.mrb[0].mxu0 %v2413
    %v3402 = vpop.f32.mrb[0].mxu0
    %v3403 = vadd.f32 %v3352, %v3402
    %v3404 = vpop.f32.mrb[0].mxu0
    %v3405 = vadd.f32 %v3354, %v3404
    %v3406 = vpop.f32.mrb[0].mxu0
    %v3407 = vpop.f32.mrb[0].mxu0
    %3408 = vdwg.mxu0
    %v3409 = vmax.f32 %v3291, 0.0
    %v3410 = vmax.f32 %v3293, 0.0
    %v3411 = vmax.f32 %v3393, 0.0
    %v3412 = vmax.f32 %v3395, 0.0
    %v3413 = vmax.f32 %v3295, 0.0
    %v3414 = vmax.f32 %v3297, 0.0
    %v3415 = vmax.f32 %v3397, 0.0
    %v3416 = vmax.f32 %v3399, 0.0
    %v3417 = vmax.f32 %v3301, 0.0
    %v3418 = vmax.f32 %v3303, 0.0
    %v3419 = vmax.f32 %v3403, 0.0
    %v3420 = vmax.f32 %v3405, 0.0
    %v3421 = vpack.c.bf16 %v3413, %v3409
    %v3422 = vpack.c.bf16 %v3414, %v3410
    %v3423 = vpack.c.bf16 %v3415, %v3411
    %v3424 = vpack.c.bf16 %v3416, %v3412
    %v3425 = vpack.c.bf16 %v3417, %v3417
    %v3426 = vpack.c.bf16 %v3418, %v3418
    %v3427 = vpack.c.bf16 %v3419, %v3419
    %v3428 = vpack.c.bf16 %v3420, %v3420
    %v3429 = vld [vmem:[#allocation12] sm:$0xf]
    %v3430 = vld [vmem:[#allocation12 + $0x4] sm:$0xf]
    %v3431 = vld [vmem:[#allocation12 + $0x8] sm:$0xf]
    %v3432 = vld [vmem:[#allocation12 + $0xc] sm:$0xf]
    %v3433 = vld [vmem:[#allocation12 + $0x10] sm:$0xf]
    %v3434 = vld [vmem:[#allocation12 + $0x14] sm:$0xf]
    %v3435 = vld [vmem:[#allocation12 + $0x18] sm:$0xf]
    %v3436 = vld [vmem:[#allocation12 + $0x1c] sm:$0xf]
    %v3437 = vld [vmem:[#allocation12 + $0x20] sm:$0xf]
    %v3438 = vld [vmem:[#allocation12 + $0x24] sm:$0xf]
    %v3439 = vld [vmem:[#allocation12 + $0x28] sm:$0xf]
    %v3440 = vld [vmem:[#allocation12 + $0x2c] sm:$0xf]
    %v3441 = vld [vmem:[#allocation12 + $0x30] sm:$0xf]
    %v3442 = vld [vmem:[#allocation12 + $0x34] sm:$0xf]
    %v3443 = vld [vmem:[#allocation12 + $0x38] sm:$0xf]
    %v3444 = vld [vmem:[#allocation12 + $0x3c] sm:$0xf]
    %v3445 = vld [vmem:[#allocation12 + $0x40] sm:$0xf]
    %v3446 = vld [vmem:[#allocation12 + $0x44] sm:$0xf]
    %v3447 = vld [vmem:[#allocation12 + $0x48] sm:$0xf]
    %v3448 = vld [vmem:[#allocation12 + $0x4c] sm:$0xf]
    %v3449 = vld [vmem:[#allocation12 + $0x50] sm:$0xf]
    %v3450 = vld [vmem:[#allocation12 + $0x54] sm:$0xf]
    %v3451 = vld [vmem:[#allocation12 + $0x58] sm:$0xf]
    %v3452 = vld [vmem:[#allocation12 + $0x5c] sm:$0xf]
    %v3453 = vld [vmem:[#allocation12 + $0x60] sm:$0xf]
    %v3454 = vld [vmem:[#allocation12 + $0x64] sm:$0xf]
    %v3455 = vld [vmem:[#allocation12 + $0x68] sm:$0xf]
    %v3456 = vld [vmem:[#allocation12 + $0x6c] sm:$0xf]
    %v3457 = vld [vmem:[#allocation12 + $0x70] sm:$0xf]
    %v3458 = vld [vmem:[#allocation12 + $0x74] sm:$0xf]
    %v3459 = vld [vmem:[#allocation12 + $0x78] sm:$0xf]
    %v3460 = vld [vmem:[#allocation12 + $0x7c] sm:$0xf]
    %v3461 = vld [vmem:[#allocation12 + $0x80] sm:$0xf]
    %v3462 = vld [vmem:[#allocation12 + $0x84] sm:$0xf]
    %v3463 = vld [vmem:[#allocation12 + $0x88] sm:$0xf]
    %v3464 = vld [vmem:[#allocation12 + $0x8c] sm:$0xf]
    %v3465 = vld [vmem:[#allocation12 + $0x90] sm:$0xf]
    %v3466 = vld [vmem:[#allocation12 + $0x94] sm:$0xf]
    %v3467 = vld [vmem:[#allocation12 + $0x98] sm:$0xf]
    %v3468 = vld [vmem:[#allocation12 + $0x9c] sm:$0xf]
    %v3469 = vld [vmem:[#allocation12 + $0xa0] sm:$0xf]
    %v3470 = vld [vmem:[#allocation12 + $0xa4] sm:$0xf]
    %v3471 = vld [vmem:[#allocation12 + $0xa8] sm:$0xf]
    %v3472 = vld [vmem:[#allocation12 + $0xac] sm:$0xf]
    %v3473 = vld [vmem:[#allocation12 + $0xb0] sm:$0xf]
    %v3474 = vld [vmem:[#allocation12 + $0xb4] sm:$0xf]
    %v3475 = vld [vmem:[#allocation12 + $0xb8] sm:$0xf]
    %v3476 = vld [vmem:[#allocation12 + $0xbc] sm:$0xf]
    %v3477 = vld [vmem:[#allocation12 + $0xc0] sm:$0xf]
    %v3478 = vld [vmem:[#allocation12 + $0xc4] sm:$0xf]
    %v3479 = vld [vmem:[#allocation12 + $0xc8] sm:$0xf]
    %v3480 = vld [vmem:[#allocation12 + $0xcc] sm:$0xf]
    %v3481 = vld [vmem:[#allocation12 + $0xd0] sm:$0xf]
    %v3482 = vld [vmem:[#allocation12 + $0xd4] sm:$0xf]
    %v3483 = vld [vmem:[#allocation12 + $0xd8] sm:$0xf]
    %v3484 = vld [vmem:[#allocation12 + $0xdc] sm:$0xf]
    %v3485 = vld [vmem:[#allocation12 + $0xe0] sm:$0xf]
    %v3486 = vld [vmem:[#allocation12 + $0xe4] sm:$0xf]
    %v3487 = vld [vmem:[#allocation12 + $0xe8] sm:$0xf]
    %v3488 = vld [vmem:[#allocation12 + $0xec] sm:$0xf]
    %v3489 = vld [vmem:[#allocation12 + $0xf0] sm:$0xf]
    %v3490 = vld [vmem:[#allocation12 + $0xf4] sm:$0xf]
    %v3491 = vld [vmem:[#allocation12 + $0xf8] sm:$0xf]
    %v3492 = vld [vmem:[#allocation12 + $0xfc] sm:$0xf]
    %v3493 = vld [vmem:[%s10] sm:$0x1]
    %v3495 = vlaneseq
    %v3496 = vshrl.u32 %v3495, 7
    %v3497 = vsub.s32 0, %v3496
    %v3498 = vrot.slane %v3493, %v3497
    %v3564 = vunpack.c.l.b16 %v3429
    %v3565 = vunpack.c.l.b16 %v3430
    %v3566 = vunpack.c.l.b16 %v3431
    %v3567 = vunpack.c.l.b16 %v3432
    %v3568 = vunpack.c.l.b16 %v3433
    %v3569 = vunpack.c.l.b16 %v3434
    %v3570 = vunpack.c.l.b16 %v3435
    %v3571 = vunpack.c.l.b16 %v3436
    %v3572 = vunpack.c.l.b16 %v3437
    %v3573 = vunpack.c.l.b16 %v3438
    %v3574 = vunpack.c.l.b16 %v3439
    %v3575 = vunpack.c.l.b16 %v3440
    %v3576 = vunpack.c.l.b16 %v3441
    %v3577 = vunpack.c.l.b16 %v3442
    %v3578 = vunpack.c.l.b16 %v3443
    %v3579 = vunpack.c.l.b16 %v3444
    %v3580 = vunpack.c.l.b16 %v3445
    %v3581 = vunpack.c.l.b16 %v3446
    %v3582 = vunpack.c.l.b16 %v3447
    %v3583 = vunpack.c.l.b16 %v3448
    %v3584 = vunpack.c.l.b16 %v3449
    %v3585 = vunpack.c.l.b16 %v3450
    %v3586 = vunpack.c.l.b16 %v3451
    %v3587 = vunpack.c.l.b16 %v3452
    %v3588 = vunpack.c.l.b16 %v3453
    %v3589 = vunpack.c.l.b16 %v3454
    %v3590 = vunpack.c.l.b16 %v3455
    %v3591 = vunpack.c.l.b16 %v3456
    %v3592 = vunpack.c.l.b16 %v3457
    %v3593 = vunpack.c.l.b16 %v3458
    %v3594 = vunpack.c.l.b16 %v3459
    %v3595 = vunpack.c.l.b16 %v3460
    %v3596 = vunpack.c.l.b16 %v3461
    %v3597 = vunpack.c.l.b16 %v3462
    %v3598 = vunpack.c.l.b16 %v3463
    %v3599 = vunpack.c.l.b16 %v3464
    %v3600 = vunpack.c.l.b16 %v3465
    %v3601 = vunpack.c.l.b16 %v3466
    %v3602 = vunpack.c.l.b16 %v3467
    %v3603 = vunpack.c.l.b16 %v3468
    %v3604 = vunpack.c.l.b16 %v3469
    %v3605 = vunpack.c.l.b16 %v3470
    %v3606 = vunpack.c.l.b16 %v3471
    %v3607 = vunpack.c.l.b16 %v3472
    %v3608 = vunpack.c.l.b16 %v3473
    %v3609 = vunpack.c.l.b16 %v3474
    %v3610 = vunpack.c.l.b16 %v3475
    %v3611 = vunpack.c.l.b16 %v3476
    %v3612 = vunpack.c.l.b16 %v3477
    %v3613 = vunpack.c.l.b16 %v3478
    %v3614 = vunpack.c.l.b16 %v3479
    %v3615 = vunpack.c.l.b16 %v3480
    %v3616 = vunpack.c.l.b16 %v3481
    %v3617 = vunpack.c.l.b16 %v3482
    %v3618 = vunpack.c.l.b16 %v3483
    %v3619 = vunpack.c.l.b16 %v3484
    %v3620 = vunpack.c.l.b16 %v3485
    %v3621 = vunpack.c.l.b16 %v3486
    %v3622 = vunpack.c.l.b16 %v3487
    %v3623 = vunpack.c.l.b16 %v3488
    %v3624 = vunpack.c.l.b16 %v3489
    %v3625 = vunpack.c.l.b16 %v3490
    %v3626 = vunpack.c.l.b16 %v3491
    %v3627 = vunpack.c.l.b16 %v3492
    %v3628 = vpack.c.b16 %v3565, %v3564
    %v3629 = vpack.c.b16 %v3567, %v3566
    %v3630 = vpack.c.b16 %v3569, %v3568
    %v3631 = vpack.c.b16 %v3571, %v3570
    %v3632 = vpack.c.b16 %v3573, %v3572
    %v3633 = vpack.c.b16 %v3575, %v3574
    %v3634 = vpack.c.b16 %v3577, %v3576
    %v3635 = vpack.c.b16 %v3579, %v3578
    %v3636 = vpack.c.b16 %v3581, %v3580
    %v3637 = vpack.c.b16 %v3583, %v3582
    %v3638 = vpack.c.b16 %v3585, %v3584
    %v3639 = vpack.c.b16 %v3587, %v3586
    %v3640 = vpack.c.b16 %v3589, %v3588
    %v3641 = vpack.c.b16 %v3591, %v3590
    %v3642 = vpack.c.b16 %v3593, %v3592
    %v3643 = vpack.c.b16 %v3595, %v3594
    %v3644 = vpack.c.b16 %v3597, %v3596
    %v3645 = vpack.c.b16 %v3599, %v3598
    %v3646 = vpack.c.b16 %v3601, %v3600
    %v3647 = vpack.c.b16 %v3603, %v3602
    %v3648 = vpack.c.b16 %v3605, %v3604
    %v3649 = vpack.c.b16 %v3607, %v3606
    %v3650 = vpack.c.b16 %v3609, %v3608
    %v3651 = vpack.c.b16 %v3611, %v3610
    %v3652 = vpack.c.b16 %v3613, %v3612
    %v3653 = vpack.c.b16 %v3615, %v3614
    %v3654 = vpack.c.b16 %v3617, %v3616
    %v3655 = vpack.c.b16 %v3619, %v3618
    %v3656 = vpack.c.b16 %v3621, %v3620
    %v3657 = vpack.c.b16 %v3623, %v3622
    %v3658 = vpack.c.b16 %v3625, %v3624
    %v3659 = vpack.c.b16 %v3627, %v3626
    %3692 = vmatprep.subr.bf16.mxu0 0
    %3693 = vmatpush1.bf16.msra.mxu0 %v3628
    %3694 = vmatprep.subr.bf16.mxu0 0
    %3695 = vmatpush1.bf16.msra.mxu0 %v3629
    %3696 = vmatprep.subr.bf16.mxu0 0
    %3697 = vmatpush1.bf16.msra.mxu0 %v3630
    %3698 = vmatprep.subr.bf16.mxu0 0
    %3699 = vmatpush1.bf16.msra.mxu0 %v3631
    %3700 = vmatprep.subr.bf16.mxu0 0
    %3701 = vmatpush1.bf16.msra.mxu0 %v3632
    %3702 = vmatprep.subr.bf16.mxu0 0
    %3703 = vmatpush1.bf16.msra.mxu0 %v3633
    %3704 = vmatprep.subr.bf16.mxu0 0
    %3705 = vmatpush1.bf16.msra.mxu0 %v3634
    %3706 = vmatprep.subr.bf16.mxu0 0
    %3707 = vmatpush1.bf16.msra.mxu0 %v3635
    %3708 = vmatprep.subr.bf16.mxu0 0
    %3709 = vmatpush1.bf16.msra.mxu0 %v3636
    %3710 = vmatprep.subr.bf16.mxu0 0
    %3711 = vmatpush1.bf16.msra.mxu0 %v3637
    %3712 = vmatprep.subr.bf16.mxu0 0
    %3713 = vmatpush1.bf16.msra.mxu0 %v3638
    %3714 = vmatprep.subr.bf16.mxu0 0
    %3715 = vmatpush1.bf16.msra.mxu0 %v3639
    %3716 = vmatprep.subr.bf16.mxu0 0
    %3717 = vmatpush1.bf16.msra.mxu0 %v3640
    %3718 = vmatprep.subr.bf16.mxu0 0
    %3719 = vmatpush1.bf16.msra.mxu0 %v3641
    %3720 = vmatprep.subr.bf16.mxu0 0
    %3721 = vmatpush1.bf16.msra.mxu0 %v3642
    %3722 = vmatprep.subr.bf16.mxu0 0
    %3723 = vmatpush1.bf16.msra.mxu0 %v3643
    %3724 = vmatprep.mubr.bf16.mxu0 %v3422
    %3725 = vmatmul.mubr.bf16.gmra.mrb[0].mxu0 %v3421
    %v3726 = vpop.f32.mrb[0].mxu0
    %v3727 = vadd.f32 %v3498, %v3726
    %v3728 = vpop.f32.mrb[0].mxu0
    %v3729 = vpop.f32.mrb[0].mxu0
    %v3730 = vadd.f32 %v3498, %v3729
    %v3731 = vpop.f32.mrb[0].mxu0
    %3732 = vmatprep.mubr.bf16.mxu0 %v3426
    %3733 = vmatmul.mubr.bf16.gmra.mrb[0].mxu0 %v3425
    %v3734 = vpop.f32.mrb[0].mxu0
    %v3735 = vadd.f32 %v3498, %v3734
    %v3736 = vpop.f32.mrb[0].mxu0
    %v3737 = vpop.f32.mrb[0].mxu0
    %v3738 = vpop.f32.mrb[0].mxu0
    %3739 = vdwg.mxu0
    %3740 = vmatprep.subr.bf16.mxu0 0
    %3741 = vmatpush1.bf16.msra.mxu0 %v3644
    %3742 = vmatprep.subr.bf16.mxu0 0
    %3743 = vmatpush1.bf16.msra.mxu0 %v3645
    %3744 = vmatprep.subr.bf16.mxu0 0
    %3745 = vmatpush1.bf16.msra.mxu0 %v3646
    %3746 = vmatprep.subr.bf16.mxu0 0
    %3747 = vmatpush1.bf16.msra.mxu0 %v3647
    %3748 = vmatprep.subr.bf16.mxu0 0
    %3749 = vmatpush1.bf16.msra.mxu0 %v3648
    %3750 = vmatprep.subr.bf16.mxu0 0
    %3751 = vmatpush1.bf16.msra.mxu0 %v3649
    %3752 = vmatprep.subr.bf16.mxu0 0
    %3753 = vmatpush1.bf16.msra.mxu0 %v3650
    %3754 = vmatprep.subr.bf16.mxu0 0
    %3755 = vmatpush1.bf16.msra.mxu0 %v3651
    %3756 = vmatprep.subr.bf16.mxu0 0
    %3757 = vmatpush1.bf16.msra.mxu0 %v3652
    %3758 = vmatprep.subr.bf16.mxu0 0
    %3759 = vmatpush1.bf16.msra.mxu0 %v3653
    %3760 = vmatprep.subr.bf16.mxu0 0
    %3761 = vmatpush1.bf16.msra.mxu0 %v3654
    %3762 = vmatprep.subr.bf16.mxu0 0
    %3763 = vmatpush1.bf16.msra.mxu0 %v3655
    %3764 = vmatprep.subr.bf16.mxu0 0
    %3765 = vmatpush1.bf16.msra.mxu0 %v3656
    %3766 = vmatprep.subr.bf16.mxu0 0
    %3767 = vmatpush1.bf16.msra.mxu0 %v3657
    %3768 = vmatprep.subr.bf16.mxu0 0
    %3769 = vmatpush1.bf16.msra.mxu0 %v3658
    %3770 = vmatprep.subr.bf16.mxu0 0
    %3771 = vmatpush1.bf16.msra.mxu0 %v3659
    %3772 = vmatprep.mubr.bf16.mxu0 %v3424
    %3773 = vmatmul.mubr.bf16.gmra.mrb[0].mxu0 %v3423
    %v3774 = vpop.f32.mrb[0].mxu0
    %v3775 = vadd.f32 %v3727, %v3774
    %v3776 = vpop.f32.mrb[0].mxu0
    %v3777 = vpop.f32.mrb[0].mxu0
    %v3778 = vadd.f32 %v3730, %v3777
    %v3779 = vpop.f32.mrb[0].mxu0
    %3780 = vmatprep.mubr.bf16.mxu0 %v3428
    %3781 = vmatmul.mubr.bf16.gmra.mrb[0].mxu0 %v3427
    %v3782 = vpop.f32.mrb[0].mxu0
    %v3783 = vadd.f32 %v3735, %v3782
    %v3784 = vpop.f32.mrb[0].mxu0
    %v3785 = vpop.f32.mrb[0].mxu0
    %v3786 = vpop.f32.mrb[0].mxu0
    %3787 = vdwg.mxu0
    %3788 = vst [vmem:[%s11] sm:$0xff] %v3775
    %3789 = vst [vmem:[%s11 + $0x8] sm:$0xff] %v3778
    %3790 = vst [vmem:[%s11 + $0x10] sm:$0x7] %v3783
    // Predicated region
    $region74: #{mlp_forward.1} parent=1 // pred_check
      _
    $region75: #{mlp_forward.1} parent=1 // pred_check_branch
      %3792 = sbr.rel (0) target = $region77
    $region76: #{mlp_forward.1} parent=1 // pred_region
      _
    $region77: #{mlp_forward.1} parent=1 // pred_fallthru
      _
    // Predicated region
    $region78: #{mlp_forward.1} parent=1 // pred_check
      _
    $region79: #{mlp_forward.1} parent=1 // pred_check_branch
      %3794 = sbr.rel (0) target = $region81
    $region80: #{mlp_forward.1} parent=1 // pred_region
      _
    $region81: #{mlp_forward.1} parent=1 // pred_fallthru
      _
    %3795 = vsyncpa [#allocation3], 1
    %3796 = vsyncpa [#allocation5], 1
    %3797 = vsyncpa [#allocation8], 1
    %3798 = vsyncpa [#allocation11], 1

</llo_original>
